<compile_context>
chip_gen: v7x
topology: tpu7x:2x2x1
jax: 0.10.0
libtpu: 0.0.40
codegen_flags: <defaults>
</compile_context>

<pallas_src>
import functools

import jax
import jax.numpy as jnp
import numpy as np
from jax import lax
from jax.experimental import pallas as pl
from jax.experimental.pallas import tpu as pltpu


# ----------------------------------------------------------------------------
# Kernel 1: fused 1x1 conv (as matmul over channels) + folded BatchNorm + ReLU
#   Input kept NCHW-native: X block is (tile_b, C, N); W is (D, C) with the BN
#   scale pre-folded; only a per-channel shift + ReLU remain in the kernel.
# ----------------------------------------------------------------------------
def conv_bn_relu_kernel(x_ref, w_ref, shift_ref, o_ref, *, tile_b):
    w = w_ref[...]            # (D, C) bf16 (BN scale folded in)
    shift = shift_ref[...]    # (D, 1) f32
    for b in range(tile_b):   # small static unroll over batch elements in tile
        y = jnp.dot(w, x_ref[b], preferred_element_type=jnp.float32)  # (D, N)
        o_ref[b] = jnp.maximum(y + shift, 0.0)


def conv_bn_relu(x_bcn, w_scaled, shift_col, *, tile_b):
    B, Cin, N = x_bcn.shape
    D = w_scaled.shape[0]
    assert B % tile_b == 0
    return pl.pallas_call(
        functools.partial(conv_bn_relu_kernel, tile_b=tile_b),
        out_shape=jax.ShapeDtypeStruct((B, D, N), jnp.float32),
        grid=(B // tile_b,),
        in_specs=[
            pl.BlockSpec((tile_b, Cin, N), lambda i: (i, 0, 0)),
            pl.BlockSpec((D, Cin), lambda i: (0, 0)),
            pl.BlockSpec((D, 1), lambda i: (0, 0)),
        ],
        out_specs=pl.BlockSpec((tile_b, D, N), lambda i: (i, 0, 0)),
        compiler_params=pltpu.CompilerParams(dimension_semantics=("parallel",)),
    )(x_bcn, w_scaled, shift_col)


# ----------------------------------------------------------------------------
# Kernel 2: Encoding layer (scaled-L2 -> softmax over codewords -> aggregate)
#   Works directly on the (D, N) conv output layout via dot_general (no
#   transposes).  ||c||^2 and the scale column are precomputed on the host.
#     A[k,n] = softmax_k( s[k] * (||x_n||^2 + ||c_k||^2 - 2 c_k.x_n) )
#     E[k,d] = sum_n A[k,n] * x[d,n]  -  (sum_n A[k,n]) * c[k,d]
# ----------------------------------------------------------------------------
def encoding_kernel(x_ref, c_ref, s_ref, csq_ref, o_ref):
    x = x_ref[0]              # (D, N) f32
    c = c_ref[...]            # (K, D) f32

    xsq = jnp.sum(x * x, axis=0, keepdims=True)                     # (1, N)
    xc = lax.dot_general(c, x, (((1,), (0,)), ((), ())),
                         preferred_element_type=jnp.float32)        # (K, N)
    sl = s_ref[...] * (xsq + csq_ref[...] - 2.0 * xc)               # (K, N)

    m = jnp.max(sl, axis=0, keepdims=True)                          # (1, N)
    e = jnp.exp(sl - m)
    denom = jnp.sum(e, axis=0, keepdims=True)                       # (1, N)
    a = e * pl.reciprocal(denom, approx=True)                       # (K, N)

    a_rowsum = jnp.sum(a, axis=1, keepdims=True)                    # (K, 1)
    e_kd = lax.dot_general(a, x, (((1,), (1,)), ((), ())),
                           preferred_element_type=jnp.float32)      # (K, D)
    o_ref[0] = e_kd - a_rowsum * c


def encoding(x_bdn, codewords, s_col, csq_col):
    B, D, N = x_bdn.shape
    K = codewords.shape[0]
    return pl.pallas_call(
        encoding_kernel,
        out_shape=jax.ShapeDtypeStruct((B, K, D), jnp.float32),
        grid=(B,),
        in_specs=[
            pl.BlockSpec((1, D, N), lambda b: (b, 0, 0)),
            pl.BlockSpec((K, D), lambda b: (0, 0)),
            pl.BlockSpec((K, 1), lambda b: (0, 0)),
            pl.BlockSpec((K, 1), lambda b: (0, 0)),
        ],
        out_specs=pl.BlockSpec((1, K, D), lambda b: (b, 0, 0)),
        compiler_params=pltpu.CompilerParams(dimension_semantics=("parallel",)),
    )(x_bdn, codewords, s_col, csq_col)


# ----------------------------------------------------------------------------
# Kernel 3: L2 Normalize (F.normalize semantics, via rsqrt) + Linear classifier
# ----------------------------------------------------------------------------
def norm_fc_kernel(e_ref, w_ref, b_ref, o_ref):
    e = e_ref[...]                                                   # (B, F)
    ss = jnp.sum(e * e, axis=-1, keepdims=True)
    inv = lax.rsqrt(jnp.maximum(ss, 1e-24))   # == 1/max(||e||, 1e-12)
    e = e * inv
    o_ref[...] = (
        jnp.dot(e, w_ref[...], preferred_element_type=jnp.float32) + b_ref[...]
    )


def normalize_linear(e_flat, w_t, b):
    Bsz, F = e_flat.shape
    ncls = w_t.shape[1]
    return pl.pallas_call(
        norm_fc_kernel,
        out_shape=jax.ShapeDtypeStruct((Bsz, ncls), jnp.float32),
        grid=(1,),
        in_specs=[
            pl.BlockSpec((Bsz, F), lambda i: (0, 0)),
            pl.BlockSpec((F, ncls), lambda i: (0, 0)),
            pl.BlockSpec((1, ncls), lambda i: (0, 0)),
        ],
        out_specs=pl.BlockSpec((Bsz, ncls), lambda i: (0, 0)),
    )(e_flat, w_t, b)


# ----------------------------------------------------------------------------
# Full DeepTen head
# ----------------------------------------------------------------------------
def _pick_tile_b(B, target=4):
    """Largest divisor of B that is <= target, while keeping >=2 grid steps
    (so both v7x TensorCores get work when B >= 2)."""
    cap = min(target, B)
    if B >= 2:
        cap = min(cap, B // 2)
    cap = max(cap, 1)
    for t in range(cap, 0, -1):
        if B % t == 0:
            return t
    return 1


@jax.jit
def deepten_head(x_feat, params):
    B, C, H, W = x_feat.shape
    N = H * W
    D = params["conv_w"].shape[0]        # 128
    K = params["codewords"].shape[0]     # 32
    eps = 1e-5

    # NCHW kept native: (B, C, H, W) -> (B, C, N) is a free contiguous reshape
    # (no transpose, no extra HBM round trip of the 2048-channel map).
    x_bcn = x_feat.astype(jnp.bfloat16).reshape(B, C, N)

    # Fold conv bias + BN (inference, running stats) into weight/shift:
    #   y = (w * bn_scale) @ x + shift
    bn_scale = params["bn_gamma"] / jnp.sqrt(params["bn_var"] + eps)
    w_fold = (params["conv_w"] * bn_scale[:, None]).astype(jnp.bfloat16)
    shift = bn_scale * (params["conv_b"] - params["bn_mean"]) + params["bn_beta"]
    shift_col = shift.astype(jnp.float32).reshape(D, 1)

    tile_b = _pick_tile_b(B)
    y = conv_bn_relu(x_bcn, w_fold, shift_col, tile_b=tile_b)        # (B, D, N)

    # Encoding constants precomputed once (codewords are parameters).
    cw = params["codewords"].astype(jnp.float32)                     # (K, D)
    csq = jnp.sum(cw * cw, axis=-1, keepdims=True)                   # (K, 1)
    s_col = params["enc_scale"].astype(jnp.float32).reshape(K, 1)    # (K, 1)

    e = encoding(y, cw, s_col, csq)                                  # (B, K, D)

    flat = e.reshape(B, K * D)                                       # View(-1, 128*32)
    out = normalize_linear(
        flat,
        params["fc_w"].T.astype(jnp.float32),
        params["fc_b"].reshape(1, -1).astype(jnp.float32),
    )
    return out


# ----------------------------------------------------------------------------
# Pure-JAX reference (mirrors the kernel's intentional bf16 conv-weight
# quantization; all other math in f32).
# ----------------------------------------------------------------------------
def deepten_head_ref(x_feat, params):
    B, C, H, W = x_feat.shape
    D = params["conv_w"].shape[0]
    K = params["codewords"].shape[0]
    eps = 1e-5

    x = x_feat.astype(jnp.float32)
    bn_scale = params["bn_gamma"] / jnp.sqrt(params["bn_var"] + eps)
    w_fold = (params["conv_w"] * bn_scale[:, None]).astype(jnp.bfloat16)
    w_fold = w_fold.astype(jnp.float32)
    shift = bn_scale * (params["conv_b"] - params["bn_mean"]) + params["bn_beta"]

    x2d = jnp.transpose(x, (0, 2, 3, 1)).reshape(B * H * W, C)
    y = x2d @ w_fold.T + shift
    y = jnp.maximum(y, 0.0)

    X = y.reshape(B, H * W, D)                         # (B, N, D)
    Cw = params["codewords"]                           # (K, D)
    S = params["enc_scale"]                            # (K,)
    diff = X[:, :, None, :] - Cw[None, None, :, :]     # (B, N, K, D)
    sl = S[None, None, :] * jnp.sum(diff * diff, axis=-1)
    A = jax.nn.softmax(sl, axis=2)                     # (B, N, K)
    E = jnp.einsum("bnk,bnkd->bkd", A, diff)           # (B, K, D)

    flat = E.reshape(B, K * D)
    nrm = jnp.sqrt(jnp.sum(flat * flat, axis=-1, keepdims=True))
    flat = flat / jnp.maximum(nrm, 1e-12)
    return flat @ params["fc_w"].T + params["fc_b"]


if __name__ == "__main__":
    B, Cin, Hf, Wf = 2, 2048, 4, 4   # backbone feature map (stride-32 output)
    D, K, nclass = 128, 32, 10

    key = jax.random.PRNGKey(0)
    keys = jax.random.split(key, 10)

    std_cw = 1.0 / np.sqrt(K * D)
    params = {
        "conv_w": jax.random.normal(keys[0], (D, Cin), jnp.float32) * 0.02,
        "conv_b": jax.random.normal(keys[1], (D,), jnp.float32) * 0.01,
        "bn_gamma": jax.random.uniform(keys[2], (D,), jnp.float32, 0.5, 1.5),
        "bn_beta": jax.random.normal(keys[3], (D,), jnp.float32) * 0.05,
        "bn_mean": jax.random.normal(keys[4], (D,), jnp.float32) * 0.1,
        "bn_var": jax.random.uniform(keys[5], (D,), jnp.float32, 0.5, 1.5),
        "codewords": jax.random.uniform(
            keys[6], (K, D), jnp.float32, -std_cw, std_cw
        ),
        "enc_scale": jax.random.uniform(keys[7], (K,), jnp.float32, -1.0, 0.0),
        "fc_w": jax.random.normal(keys[8], (nclass, K * D), jnp.float32) * 0.02,
        "fc_b": jnp.zeros((nclass,), jnp.float32),
    }

    # Backbone output feature map, produced in bf16 as a TPU backbone would.
    x_feat = (
        jax.random.normal(keys[9], (B, Cin, Hf, Wf), jnp.float32) * 0.5
    ).astype(jnp.bfloat16)

    out = jax.block_until_ready(deepten_head(x_feat, params))

    ref = deepten_head_ref(x_feat, params)
    np.testing.assert_allclose(np.asarray(out), np.asarray(ref), rtol=1e-2, atol=1e-2)

    assert out.shape == (B, nclass)
    print("KERNEL_OK")
</pallas_src>

<mosaic_0001>
module attributes {stable_mosaic.version = 11 : i64} {
  func.func @conv_bn_relu_kernel(%arg0: i32, %arg1: memref<1x2048x16xbf16, #tpu.memory_space<vmem>>, %arg2: memref<128x2048xbf16, #tpu.memory_space<vmem>>, %arg3: memref<128x1xf32, #tpu.memory_space<vmem>>, %arg4: memref<1x128x16xf32, #tpu.memory_space<vmem>>) attributes {dimension_semantics = [#tpu.dimension_semantics<parallel>], iteration_bounds = array<i64: 2>, scalar_prefetch = 0 : i64, scratch_operands = 0 : i64, tpu.core_type = #tpu.core_type<tc>, window_params = [{transform_indices = @transform_0, window_bounds = array<i64: 1, 2048, 16>}, {pipeline_mode = #tpu.pipeline_mode<synchronous>, transform_indices = @transform_1, window_bounds = array<i64: 128, 2048>}, {pipeline_mode = #tpu.pipeline_mode<synchronous>, transform_indices = @transform_2, window_bounds = array<i64: 128, 1>}, {transform_indices = @transform_3, window_bounds = array<i64: 1, 128, 16>}]} {
    %c0 = arith.constant 0 : index
    %c0_0 = arith.constant 0 : index
    %0 = vector.load %arg2[%c0, %c0_0] : memref<128x2048xbf16, #tpu.memory_space<vmem>>, vector<128x2048xbf16>
    %c0_1 = arith.constant 0 : index
    %c0_2 = arith.constant 0 : index
    %1 = vector.load %arg3[%c0_1, %c0_2] : memref<128x1xf32, #tpu.memory_space<vmem>>, vector<128x1xf32>
    %c0_3 = arith.constant 0 : index
    %c0_4 = arith.constant 0 : index
    %c0_5 = arith.constant 0 : index
    %2 = vector.load %arg1[%c0_3, %c0_4, %c0_5] : memref<1x2048x16xbf16, #tpu.memory_space<vmem>>, vector<1x2048x16xbf16>
    %3 = vector.shape_cast %2 : vector<1x2048x16xbf16> to vector<2048x16xbf16>
    %cst = arith.constant dense<0.000000e+00> : vector<128x16xf32>
    %4 = tpu.matmul %0, %3, %cst {dimension_numbers = #tpu.dot_dimension_numbers<[1], [0], [0], [1], [0, 0, 1, 1], [], []>} : vector<128x2048xbf16>, vector<2048x16xbf16>, vector<128x16xf32> -> vector<128x16xf32>
    %5 = vector.broadcast %1 : vector<128x1xf32> to vector<128x16xf32>
    %6 = arith.addf %4, %5 : vector<128x16xf32>
    %cst_6 = arith.constant 0.000000e+00 : f32
    %7 = vector.broadcast %cst_6 : f32 to vector<128x16xf32>
    %8 = arith.maximumf %6, %7 : vector<128x16xf32>
    %c0_7 = arith.constant 0 : index
    %c0_8 = arith.constant 0 : index
    %c0_9 = arith.constant 0 : index
    %9 = vector.load %arg4[%c0_7, %c0_8, %c0_9] : memref<1x128x16xf32, #tpu.memory_space<vmem>>, vector<1x128x16xf32>
    %10 = vector.shape_cast %9 : vector<1x128x16xf32> to vector<128x16xf32>
    %11 = vector.shape_cast %8 : vector<128x16xf32> to vector<1x128x16xf32>
    tpu.vector_store %arg4[%c0_7, %c0_8, %c0_9], %11 {strides = array<i32>} : memref<1x128x16xf32, #tpu.memory_space<vmem>>, vector<1x128x16xf32>,
    return
  }
  func.func @transform_0(%arg0: i32) -> (i32, i32, i32) {
    %c0_i32 = arith.constant 0 : i32
    %c0_i32_0 = arith.constant 0 : i32
    %c0_i32_1 = arith.constant 0 : i32
    return %arg0, %c0_i32, %c0_i32_0 : i32, i32, i32
  }
  func.func @transform_1(%arg0: i32) -> (i32, i32) {
    %c0_i32 = arith.constant 0 : i32
    %c0_i32_0 = arith.constant 0 : i32
    %c0_i32_1 = arith.constant 0 : i32
    return %c0_i32, %c0_i32_0 : i32, i32
  }
  func.func @transform_2(%arg0: i32) -> (i32, i32) {
    %c0_i32 = arith.constant 0 : i32
    %c0_i32_0 = arith.constant 0 : i32
    %c0_i32_1 = arith.constant 0 : i32
    return %c0_i32, %c0_i32_0 : i32, i32
  }
  func.func @transform_3(%arg0: i32) -> (i32, i32, i32) {
    %c0_i32 = arith.constant 0 : i32
    %c0_i32_0 = arith.constant 0 : i32
    %c0_i32_1 = arith.constant 0 : i32
    return %arg0, %c0_i32, %c0_i32_0 : i32, i32, i32
  }
}

module attributes {stable_mosaic.version = 11 : i64} {
  func.func @encoding_kernel(%arg0: i32, %arg1: memref<1x128x16xf32, #tpu.memory_space<vmem>>, %arg2: memref<32x128xf32, #tpu.memory_space<vmem>>, %arg3: memref<32x1xf32, #tpu.memory_space<vmem>>, %arg4: memref<32x1xf32, #tpu.memory_space<vmem>>, %arg5: memref<1x32x128xf32, #tpu.memory_space<vmem>>) attributes {dimension_semantics = [#tpu.dimension_semantics<parallel>], iteration_bounds = array<i64: 2>, scalar_prefetch = 0 : i64, scratch_operands = 0 : i64, tpu.core_type = #tpu.core_type<tc>, window_params = [{transform_indices = @transform_0, window_bounds = array<i64: 1, 128, 16>}, {pipeline_mode = #tpu.pipeline_mode<synchronous>, transform_indices = @transform_1, window_bounds = array<i64: 32, 128>}, {pipeline_mode = #tpu.pipeline_mode<synchronous>, transform_indices = @transform_2, window_bounds = array<i64: 32, 1>}, {pipeline_mode = #tpu.pipeline_mode<synchronous>, transform_indices = @transform_3, window_bounds = array<i64: 32, 1>}, {transform_indices = @transform_4, window_bounds = array<i64: 1, 32, 128>}]} {
    %c0 = arith.constant 0 : index
    %c0_0 = arith.constant 0 : index
    %c0_1 = arith.constant 0 : index
    %0 = vector.load %arg1[%c0, %c0_0, %c0_1] : memref<1x128x16xf32, #tpu.memory_space<vmem>>, vector<1x128x16xf32>
    %1 = vector.shape_cast %0 : vector<1x128x16xf32> to vector<128x16xf32>
    %c0_2 = arith.constant 0 : index
    %c0_3 = arith.constant 0 : index
    %2 = vector.load %arg2[%c0_2, %c0_3] : memref<32x128xf32, #tpu.memory_space<vmem>>, vector<32x128xf32>
    %3 = arith.mulf %1, %1 : vector<128x16xf32>
    %cst = arith.constant dense<0.000000e+00> : vector<16xf32>
    %4 = vector.multi_reduction <add>, %3, %cst [0] : vector<128x16xf32> to vector<16xf32>
    %5 = vector.shape_cast %4 : vector<16xf32> to vector<1x16xf32>
    %cst_4 = arith.constant dense<0.000000e+00> : vector<32x16xf32>
    %6 = tpu.matmul %2, %1, %cst_4 {dimension_numbers = #tpu.dot_dimension_numbers<[1], [0], [0], [1], [0, 0, 1, 1], [], []>} : vector<32x128xf32>, vector<128x16xf32>, vector<32x16xf32> -> vector<32x16xf32>
    %c0_5 = arith.constant 0 : index
    %c0_6 = arith.constant 0 : index
    %7 = vector.load %arg3[%c0_5, %c0_6] : memref<32x1xf32, #tpu.memory_space<vmem>>, vector<32x1xf32>
    %c0_7 = arith.constant 0 : index
    %c0_8 = arith.constant 0 : index
    %8 = vector.load %arg4[%c0_7, %c0_8] : memref<32x1xf32, #tpu.memory_space<vmem>>, vector<32x1xf32>
    %9 = vector.broadcast %5 : vector<1x16xf32> to vector<32x16xf32>
    %10 = vector.broadcast %8 : vector<32x1xf32> to vector<32x16xf32>
    %11 = arith.addf %9, %10 : vector<32x16xf32>
    %cst_9 = arith.constant 2.000000e+00 : f32
    %12 = vector.broadcast %cst_9 : f32 to vector<32x16xf32>
    %13 = arith.mulf %12, %6 : vector<32x16xf32>
    %14 = arith.subf %11, %13 : vector<32x16xf32>
    %15 = vector.broadcast %7 : vector<32x1xf32> to vector<32x16xf32>
    %16 = arith.mulf %15, %14 : vector<32x16xf32>
    %cst_10 = arith.constant dense<0xFF800000> : vector<16xf32>
    %17 = vector.multi_reduction <maximumf>, %16, %cst_10 [0] : vector<32x16xf32> to vector<16xf32>
    %18 = vector.shape_cast %17 : vector<16xf32> to vector<1x16xf32>
    %19 = vector.broadcast %18 : vector<1x16xf32> to vector<32x16xf32>
    %20 = arith.subf %16, %19 : vector<32x16xf32>
    %21 = math.exp %20 : vector<32x16xf32>
    %cst_11 = arith.constant dense<0.000000e+00> : vector<16xf32>
    %22 = vector.multi_reduction <add>, %21, %cst_11 [0] : vector<32x16xf32> to vector<16xf32>
    %23 = vector.shape_cast %22 : vector<16xf32> to vector<1x16xf32>
    %24 = tpu.reciprocal %23 {approx = true} : vector<1x16xf32> -> vector<1x16xf32>
    %25 = vector.broadcast %24 : vector<1x16xf32> to vector<32x16xf32>
    %26 = arith.mulf %21, %25 : vector<32x16xf32>
    %cst_12 = arith.constant dense<0.000000e+00> : vector<32xf32>
    %27 = vector.multi_reduction <add>, %26, %cst_12 [1] : vector<32x16xf32> to vector<32xf32>
    %28 = vector.shape_cast %27 : vector<32xf32> to vector<32x1xf32>
    %cst_13 = arith.constant dense<0.000000e+00> : vector<32x128xf32>
    %29 = tpu.matmul %26, %1, %cst_13 {dimension_numbers = #tpu.dot_dimension_numbers<[1], [1], [0], [0], [0, 0, 1, 0], [], []>} : vector<32x16xf32>, vector<128x16xf32>, vector<32x128xf32> -> vector<32x128xf32>
    %30 = vector.broadcast %28 : vector<32x1xf32> to vector<32x128xf32>
    %31 = arith.mulf %30, %2 : vector<32x128xf32>
    %32 = arith.subf %29, %31 : vector<32x128xf32>
    %c0_14 = arith.constant 0 : index
    %c0_15 = arith.constant 0 : index
    %c0_16 = arith.constant 0 : index
    %33 = vector.load %arg5[%c0_14, %c0_15, %c0_16] : memref<1x32x128xf32, #tpu.memory_space<vmem>>, vector<1x32x128xf32>
    %34 = vector.shape_cast %33 : vector<1x32x128xf32> to vector<32x128xf32>
    %35 = vector.shape_cast %32 : vector<32x128xf32> to vector<1x32x128xf32>
    tpu.vector_store %arg5[%c0_14, %c0_15, %c0_16], %35 {strides = array<i32>} : memref<1x32x128xf32, #tpu.memory_space<vmem>>, vector<1x32x128xf32>,
    return
  }
  func.func @transform_0(%arg0: i32) -> (i32, i32, i32) {
    %c0_i32 = arith.constant 0 : i32
    %c0_i32_0 = arith.constant 0 : i32
    %c0_i32_1 = arith.constant 0 : i32
    return %arg0, %c0_i32, %c0_i32_0 : i32, i32, i32
  }
  func.func @transform_1(%arg0: i32) -> (i32, i32) {
    %c0_i32 = arith.constant 0 : i32
    %c0_i32_0 = arith.constant 0 : i32
    %c0_i32_1 = arith.constant 0 : i32
    return %c0_i32, %c0_i32_0 : i32, i32
  }
  func.func @transform_2(%arg0: i32) -> (i32, i32) {
    %c0_i32 = arith.constant 0 : i32
    %c0_i32_0 = arith.constant 0 : i32
    %c0_i32_1 = arith.constant 0 : i32
    return %c0_i32, %c0_i32_0 : i32, i32
  }
  func.func @transform_3(%arg0: i32) -> (i32, i32) {
    %c0_i32 = arith.constant 0 : i32
    %c0_i32_0 = arith.constant 0 : i32
    %c0_i32_1 = arith.constant 0 : i32
    return %c0_i32, %c0_i32_0 : i32, i32
  }
  func.func @transform_4(%arg0: i32) -> (i32, i32, i32) {
    %c0_i32 = arith.constant 0 : i32
    %c0_i32_0 = arith.constant 0 : i32
    %c0_i32_1 = arith.constant 0 : i32
    return %arg0, %c0_i32, %c0_i32_0 : i32, i32, i32
  }
}

module attributes {stable_mosaic.version = 11 : i64} {
  func.func @norm_fc_kernel(%arg0: i32, %arg1: memref<2x4096xf32, #tpu.memory_space<vmem>>, %arg2: memref<4096x10xf32, #tpu.memory_space<vmem>>, %arg3: memref<1x10xf32, #tpu.memory_space<vmem>>, %arg4: memref<2x10xf32, #tpu.memory_space<vmem>>) attributes {dimension_semantics = [#tpu.dimension_semantics<arbitrary>], iteration_bounds = array<i64: 1>, scalar_prefetch = 0 : i64, scratch_operands = 0 : i64, tpu.core_type = #tpu.core_type<tc>, window_params = [{pipeline_mode = #tpu.pipeline_mode<synchronous>, transform_indices = @transform_0, window_bounds = array<i64: 2, 4096>}, {pipeline_mode = #tpu.pipeline_mode<synchronous>, transform_indices = @transform_1, window_bounds = array<i64: 4096, 10>}, {pipeline_mode = #tpu.pipeline_mode<synchronous>, transform_indices = @transform_2, window_bounds = array<i64: 1, 10>}, {pipeline_mode = #tpu.pipeline_mode<synchronous>, transform_indices = @transform_3, window_bounds = array<i64: 2, 10>}]} {
    %c0 = arith.constant 0 : index
    %c0_0 = arith.constant 0 : index
    %0 = vector.load %arg1[%c0, %c0_0] : memref<2x4096xf32, #tpu.memory_space<vmem>>, vector<2x4096xf32>
    %1 = arith.mulf %0, %0 : vector<2x4096xf32>
    %cst = arith.constant dense<0.000000e+00> : vector<2xf32>
    %2 = vector.multi_reduction <add>, %1, %cst [1] : vector<2x4096xf32> to vector<2xf32>
    %3 = vector.shape_cast %2 : vector<2xf32> to vector<2x1xf32>
    %cst_1 = arith.constant 1.000000e-24 : f32
    %4 = vector.broadcast %cst_1 : f32 to vector<2x1xf32>
    %5 = arith.maximumf %3, %4 : vector<2x1xf32>
    %6 = math.rsqrt %5 : vector<2x1xf32>
    %7 = vector.broadcast %6 : vector<2x1xf32> to vector<2x4096xf32>
    %8 = arith.mulf %0, %7 : vector<2x4096xf32>
    %c0_2 = arith.constant 0 : index
    %c0_3 = arith.constant 0 : index
    %9 = vector.load %arg2[%c0_2, %c0_3] : memref<4096x10xf32, #tpu.memory_space<vmem>>, vector<4096x10xf32>
    %cst_4 = arith.constant dense<0.000000e+00> : vector<2x10xf32>
    %10 = tpu.matmul %8, %9, %cst_4 {dimension_numbers = #tpu.dot_dimension_numbers<[1], [0], [0], [1], [0, 0, 1, 1], [], []>} : vector<2x4096xf32>, vector<4096x10xf32>, vector<2x10xf32> -> vector<2x10xf32>
    %c0_5 = arith.constant 0 : index
    %c0_6 = arith.constant 0 : index
    %11 = vector.load %arg3[%c0_5, %c0_6] : memref<1x10xf32, #tpu.memory_space<vmem>>, vector<1x10xf32>
    %12 = vector.broadcast %11 : vector<1x10xf32> to vector<2x10xf32>
    %13 = arith.addf %10, %12 : vector<2x10xf32>
    %c0_7 = arith.constant 0 : index
    %c0_8 = arith.constant 0 : index
    %14 = vector.load %arg4[%c0_7, %c0_8] : memref<2x10xf32, #tpu.memory_space<vmem>>, vector<2x10xf32>
    tpu.vector_store %arg4[%c0_7, %c0_8], %13 {strides = array<i32>} : memref<2x10xf32, #tpu.memory_space<vmem>>, vector<2x10xf32>,
    return
  }
  func.func @transform_0(%arg0: i32) -> (i32, i32) {
    %c0_i32 = arith.constant 0 : i32
    %c0_i32_0 = arith.constant 0 : i32
    %c0_i32_1 = arith.constant 0 : i32
    return %c0_i32, %c0_i32_0 : i32, i32
  }
  func.func @transform_1(%arg0: i32) -> (i32, i32) {
    %c0_i32 = arith.constant 0 : i32
    %c0_i32_0 = arith.constant 0 : i32
    %c0_i32_1 = arith.constant 0 : i32
    return %c0_i32, %c0_i32_0 : i32, i32
  }
  func.func @transform_2(%arg0: i32) -> (i32, i32) {
    %c0_i32 = arith.constant 0 : i32
    %c0_i32_0 = arith.constant 0 : i32
    %c0_i32_1 = arith.constant 0 : i32
    return %c0_i32, %c0_i32_0 : i32, i32
  }
  func.func @transform_3(%arg0: i32) -> (i32, i32) {
    %c0_i32 = arith.constant 0 : i32
    %c0_i32_0 = arith.constant 0 : i32
    %c0_i32_1 = arith.constant 0 : i32
    return %c0_i32, %c0_i32_0 : i32, i32
  }
}

</mosaic_0001>

<llo_original>
// kernel: deepten_head.4
$region0: #{deepten_head.4}
  #allocation0 [shape = 'u32[]', space=smem, size = 0x4, offset = 0x4, fixed_abs, tag = 'smem constant byte address 0x4 - core index']
  #allocation1 [shape = 'u32[144,128]{1,0:T(1,128)}', space=vmem, size = 0x12000, scoped, tag = 'internal scratch']
  %s0 = inlined_call_operand.vmem [shape: f32[2,128,16], index: 0, kind: input, shape index: {}]
  %s1 = inlined_call_operand.vmem [shape: f32[32,128], index: 1, kind: input, shape index: {}]
  %s2 = inlined_call_operand.vmem [shape: f32[32,1], index: 2, kind: input, shape index: {}]
  %s3 = inlined_call_operand.vmem [shape: f32[32,1], index: 3, kind: input, shape index: {}]
  %s4 = inlined_call_operand.vmem [shape: f32[2,32,128], index: 4, kind: output, shape index: {}]
  %s5 = sld [smem:[#allocation0]]
  $region49: #{deepten_head.4} parent=0
    _
  %s7 = ssub.s32 1, %s5
  %s8 = scalar_select 0, %s7, %s5
  loop: start=0, step=1, limit=4
  $region2: #{deepten_head.4} parent=0 // loop_pre_header
    _
  $region3: #{deepten_head.4} parent=0 // loop_header
    %s10 = sphi 0, %s14
    %p11 = scmp.ge.s32.totalorder %s10, 4
    %s20 = sphi 0, %s22
    %s23 = sphi 0, %s20
    %s24 = sphi 0, %s23
    %s40 = sphi 0, %s24
    %s44 = sphi 0, %s44
    %s46 = sphi 0, %s44
    %s47 = sphi 0, %s46
    %s61 = sphi 0, %s47
    %s65 = sphi 0, %s65
    %s67 = sphi 0, %s65
    %s68 = sphi 0, %s67
    %s82 = sphi 0, %s68
    %s86 = sphi 0, %s86
    %s88 = sphi 0, %s86
    %s89 = sphi 0, %s88
    %s103 = sphi 0, %s89
    %s109 = sphi 0, %s111
    %s112 = sphi 0, %s109
    %s113 = sphi 0, %s112
    %s129 = sphi 0, %s113
  $region4: #{deepten_head.4} parent=0 // loop_header_branch
    %13 = sbr.rel (%p11) target = $region8
  $region5: #{deepten_head.4} parent=0 // loop_body
    %s15 = ssub.s32 %s10, 1
    %s16 = ssub.s32 %s10, 2
    %s17 = sadd.s32 %s10, 1
    %s18 = ssub.s32 %s10, %s17
    %p19 = scmp.eq.s32.totalorder %s18, 0
    %s21 = sadd.s32 %s20, 1
    %s22 = scalar_select %p19, %s20, %s21
    %p25 = pneg %p19
    %p26 = scmp.eq.s32.totalorder %s10, 1
    %p27 = por %p25, %p26
    %p28 = scmp.ne.s32.totalorder %s20, %s23
    %p29 = scmp.eq.s32.totalorder %s10, 0
    %p30 = por %p28, %p29
    %p31 = scmp.ne.s32.totalorder %s20, %s23
    %p32 = scmp.eq.s32.totalorder %s15, 1
    %p33 = por %p31, %p32
    %p34 = scmp.ne.s32.totalorder %s23, %s24
    %p35 = scmp.eq.s32.totalorder %s15, 0
    %p36 = por %p34, %p35
    %p37 = scmp.ne.s32.totalorder %s23, %s24
    %p38 = scmp.eq.s32.totalorder %s16, 1
    %p39 = por %p37, %p38
    %p41 = scmp.ne.s32.totalorder %s24, %s40
    %p42 = scmp.eq.s32.totalorder %s16, 0
    %p43 = por %p41, %p42
    %s45 = sadd.s32 %s44, 1
    %p48 = scmp.eq.s32.totalorder %s10, 1
    %p49 = scmp.ne.s32.totalorder %s44, %s46
    %p50 = scmp.eq.s32.totalorder %s10, 0
    %p51 = por %p49, %p50
    %p52 = scmp.ne.s32.totalorder %s44, %s46
    %p53 = scmp.eq.s32.totalorder %s15, 1
    %p54 = por %p52, %p53
    %p55 = scmp.ne.s32.totalorder %s46, %s47
    %p56 = scmp.eq.s32.totalorder %s15, 0
    %p57 = por %p55, %p56
    %p58 = scmp.ne.s32.totalorder %s46, %s47
    %p59 = scmp.eq.s32.totalorder %s16, 1
    %p60 = por %p58, %p59
    %p62 = scmp.ne.s32.totalorder %s47, %s61
    %p63 = scmp.eq.s32.totalorder %s16, 0
    %p64 = por %p62, %p63
    %s66 = sadd.s32 %s65, 1
    %p69 = scmp.eq.s32.totalorder %s10, 1
    %p70 = scmp.ne.s32.totalorder %s65, %s67
    %p71 = scmp.eq.s32.totalorder %s10, 0
    %p72 = por %p70, %p71
    %p73 = scmp.ne.s32.totalorder %s65, %s67
    %p74 = scmp.eq.s32.totalorder %s15, 1
    %p75 = por %p73, %p74
    %p76 = scmp.ne.s32.totalorder %s67, %s68
    %p77 = scmp.eq.s32.totalorder %s15, 0
    %p78 = por %p76, %p77
    %p79 = scmp.ne.s32.totalorder %s67, %s68
    %p80 = scmp.eq.s32.totalorder %s16, 1
    %p81 = por %p79, %p80
    %p83 = scmp.ne.s32.totalorder %s68, %s82
    %p84 = scmp.eq.s32.totalorder %s16, 0
    %p85 = por %p83, %p84
    %s87 = sadd.s32 %s86, 1
    %p90 = scmp.eq.s32.totalorder %s10, 1
    %p91 = scmp.ne.s32.totalorder %s86, %s88
    %p92 = scmp.eq.s32.totalorder %s10, 0
    %p93 = por %p91, %p92
    %p94 = scmp.ne.s32.totalorder %s86, %s88
    %p95 = scmp.eq.s32.totalorder %s15, 1
    %p96 = por %p94, %p95
    %p97 = scmp.ne.s32.totalorder %s88, %s89
    %p98 = scmp.eq.s32.totalorder %s15, 0
    %p99 = por %p97, %p98
    %p100 = scmp.ne.s32.totalorder %s88, %s89
    %p101 = scmp.eq.s32.totalorder %s16, 1
    %p102 = por %p100, %p101
    %p104 = scmp.ne.s32.totalorder %s89, %s103
    %p105 = scmp.eq.s32.totalorder %s16, 0
    %p106 = por %p104, %p105
    %s107 = ssub.s32 %s10, %s17
    %p108 = scmp.eq.s32.totalorder %s107, 0
    %s110 = sadd.s32 %s109, 1
    %s111 = scalar_select %p108, %s109, %s110
    %p114 = pneg %p108
    %p115 = scmp.eq.s32.totalorder %s10, 1
    %p116 = por %p114, %p115
    %p117 = scmp.ne.s32.totalorder %s109, %s112
    %p118 = scmp.eq.s32.totalorder %s10, 0
    %p119 = por %p117, %p118
    %p120 = scmp.ne.s32.totalorder %s109, %s112
    %p121 = scmp.eq.s32.totalorder %s15, 1
    %p122 = por %p120, %p121
    %p123 = scmp.ne.s32.totalorder %s112, %s113
    %p124 = scmp.eq.s32.totalorder %s15, 0
    %p125 = por %p123, %p124
    %p126 = scmp.ne.s32.totalorder %s112, %s113
    %p127 = scmp.eq.s32.totalorder %s16, 1
    %p128 = por %p126, %p127
    %p130 = scmp.ne.s32.totalorder %s113, %s129
    %p131 = scmp.eq.s32.totalorder %s16, 0
    %p132 = por %p130, %p131
    %p133 = scmp.le.s32.totalorder 1, %s10
    %p134 = scmp.lt.s32.totalorder %s10, 3
    %p135 = pnand %p133, %p134
    %p136 = pneg %p135
    // Predicated region
    $region9: #{deepten_head.4} parent=5 // pred_check
      _
    $region10: #{deepten_head.4} parent=5 // pred_check_branch
      %138 = sbr.rel (%p135) target = $region12
    $region11: #{deepten_head.4} parent=5 // pred_region
      %s139 = ssub.s32 %s10, 1
      // Predicated region
      $region13: #{deepten_head.4} parent=11 // pred_check
        %p140 = pneg %p57
      $region14: #{deepten_head.4} parent=11 // pred_check_branch
        %142 = sbr.rel (%p140) target = $region16
      $region15: #{deepten_head.4} parent=11 // pred_region
        _
      $region16: #{deepten_head.4} parent=11 // pred_fallthru
        _
      // Predicated region
      $region17: #{deepten_head.4} parent=11 // pred_check
        %p143 = pneg %p78
      $region18: #{deepten_head.4} parent=11 // pred_check_branch
        %145 = sbr.rel (%p143) target = $region20
      $region19: #{deepten_head.4} parent=11 // pred_region
        _
      $region20: #{deepten_head.4} parent=11 // pred_fallthru
        _
      // Predicated region
      $region21: #{deepten_head.4} parent=11 // pred_check
        %p146 = pneg %p99
      $region22: #{deepten_head.4} parent=11 // pred_check_branch
        %148 = sbr.rel (%p146) target = $region24
      $region23: #{deepten_head.4} parent=11 // pred_region
        _
      $region24: #{deepten_head.4} parent=11 // pred_fallthru
        _
    $region12: #{deepten_head.4} parent=5 // pred_fallthru
      _
    %p149 = scmp.lt.s32.totalorder %s10, 2
    // Predicated region
    $region25: #{deepten_head.4} parent=5 // pred_check
      %p150 = pneg %p149
    $region26: #{deepten_head.4} parent=5 // pred_check_branch
      %152 = sbr.rel (%p150) target = $region28
    $region27: #{deepten_head.4} parent=5 // pred_region
      // Predicated region
      $region29: #{deepten_head.4} parent=27 // pred_check
        %p153 = pneg %p30
      $region30: #{deepten_head.4} parent=27 // pred_check_branch
        %155 = sbr.rel (%p153) target = $region32
      $region31: #{deepten_head.4} parent=27 // pred_region
        %p156 = scmp.lt.s32.totalorder %s10, 1
        %s157 = scalar_select %p156, %s10, 1
        %s158 = smul.addr %s157, 16
        %s159 = smul.addr %s158, 8
        %s160 = scalar_lea.vmem %s0, %s159
      $region32: #{deepten_head.4} parent=27 // pred_fallthru
        _
    $region28: #{deepten_head.4} parent=5 // pred_fallthru
      _
    %p161 = scmp.le.s32.totalorder 1, %s10
    %p162 = scmp.lt.s32.totalorder %s10, 3
    %p163 = pnand %p161, %p162
    %p164 = pneg %p163
    // Predicated region
    $region33: #{deepten_head.4} parent=5 // pred_check
      _
    $region34: #{deepten_head.4} parent=5 // pred_check_branch
      %166 = sbr.rel (%p163) target = $region36
    $region35: #{deepten_head.4} parent=5 // pred_region
      %s167 = ssub.s32 %s10, 1
      %p168 = scmp.lt.s32.totalorder %s15, 1
      %s169 = scalar_select %p168, %s15, 1
      %s170 = smul.addr %s169, 16
      %s171 = smul.addr %s170, 8
      %s172 = scalar_lea.vmem %s0, %s171
      %p173 = pneg %p36
      %p174 = pneg %p33
      %p175 = pneg %p57
      %p176 = pneg %p54
      %p177 = pneg %p78
      %p178 = pneg %p75
      %p179 = pneg %p99
      %p180 = pneg %p96
      %p181 = pneg %p125
      %p182 = pneg %p122
      %p183 = scmp.lt.s32.totalorder %s15, 1
      %s184 = scalar_select %p183, %s15, 1
      %s185 = smul.addr %s184, 4
      %s186 = smul.addr %s185, 8
      %s187 = scalar_lea.vmem %s4, %s186
      %p188 = scmp.lt.s32.totalorder %s15, 1
      %s189 = scalar_select %p188, %s15, 1
      %s190 = smul.addr %s189, 16
      %s191 = smul.addr %s190, 8
      %s192 = scalar_lea.vmem %s0, %s191
      %p193 = scmp.lt.s32.totalorder %s15, 1
      %s194 = scalar_select %p193, %s15, 1
      %s195 = smul.addr %s194, 4
      %s196 = smul.addr %s195, 8
      %s197 = scalar_lea.vmem %s4, %s196
      %v198 = vld [vmem:[%s192] sm:$0xff]
      %v199 = vld [vmem:[%s192 + $0x8] sm:$0xff]
      %v200 = vld [vmem:[%s192 + $0x10] sm:$0xff]
      %v201 = vld [vmem:[%s192 + $0x18] sm:$0xff]
      %v202 = vld [vmem:[%s192 + $0x20] sm:$0xff]
      %v203 = vld [vmem:[%s192 + $0x28] sm:$0xff]
      %v204 = vld [vmem:[%s192 + $0x30] sm:$0xff]
      %v205 = vld [vmem:[%s192 + $0x38] sm:$0xff]
      %v206 = vld [vmem:[%s192 + $0x40] sm:$0xff]
      %v207 = vld [vmem:[%s192 + $0x48] sm:$0xff]
      %v208 = vld [vmem:[%s192 + $0x50] sm:$0xff]
      %v209 = vld [vmem:[%s192 + $0x58] sm:$0xff]
      %v210 = vld [vmem:[%s192 + $0x60] sm:$0xff]
      %v211 = vld [vmem:[%s192 + $0x68] sm:$0xff]
      %v212 = vld [vmem:[%s192 + $0x70] sm:$0xff]
      %v213 = vld [vmem:[%s192 + $0x78] sm:$0xff]
      %v214 = vld [vmem:[%s1] sm:$0xff]
      %v215 = vld [vmem:[%s1 + $0x8] sm:$0xff]
      %v216 = vld [vmem:[%s1 + $0x10] sm:$0xff]
      %v217 = vld [vmem:[%s1 + $0x18] sm:$0xff]
      %v218 = vmul.f32 %v198, %v198
      %v219 = vmul.f32 %v199, %v199
      %v220 = vmul.f32 %v200, %v200
      %v221 = vmul.f32 %v201, %v201
      %v222 = vmul.f32 %v202, %v202
      %v223 = vmul.f32 %v203, %v203
      %v224 = vmul.f32 %v204, %v204
      %v225 = vmul.f32 %v205, %v205
      %v226 = vmul.f32 %v206, %v206
      %v227 = vmul.f32 %v207, %v207
      %v228 = vmul.f32 %v208, %v208
      %v229 = vmul.f32 %v209, %v209
      %v230 = vmul.f32 %v210, %v210
      %v231 = vmul.f32 %v211, %v211
      %v232 = vmul.f32 %v212, %v212
      %v233 = vmul.f32 %v213, %v213
      %vm234 = vcmask 130048
      %v235 = vsel %vm234, %v218, 0.0
      %v236 = vsel %vm234, %v219, 0.0
      %v237 = vadd.f32 %v235, %v236
      %v238 = vsel %vm234, %v220, 0.0
      %v239 = vadd.f32 %v237, %v238
      %v240 = vsel %vm234, %v221, 0.0
      %v241 = vadd.f32 %v239, %v240
      %v242 = vsel %vm234, %v222, 0.0
      %v243 = vadd.f32 %v241, %v242
      %v244 = vsel %vm234, %v223, 0.0
      %v245 = vadd.f32 %v243, %v244
      %v246 = vsel %vm234, %v224, 0.0
      %v247 = vadd.f32 %v245, %v246
      %v248 = vsel %vm234, %v225, 0.0
      %v249 = vadd.f32 %v247, %v248
      %v250 = vsel %vm234, %v226, 0.0
      %v251 = vadd.f32 %v249, %v250
      %v252 = vsel %vm234, %v227, 0.0
      %v253 = vadd.f32 %v251, %v252
      %v254 = vsel %vm234, %v228, 0.0
      %v255 = vadd.f32 %v253, %v254
      %v256 = vsel %vm234, %v229, 0.0
      %v257 = vadd.f32 %v255, %v256
      %v258 = vsel %vm234, %v230, 0.0
      %v259 = vadd.f32 %v257, %v258
      %v260 = vsel %vm234, %v231, 0.0
      %v261 = vadd.f32 %v259, %v260
      %v262 = vsel %vm234, %v232, 0.0
      %v263 = vadd.f32 %v261, %v262
      %v264 = vsel %vm234, %v233, 0.0
      %v265 = vadd.f32 %v263, %v264
      %v266 = vrot.slane %v265, 4
      %v267 = vadd.f32 %v265, %v266
      %v268 = vrot.slane %v267, 2
      %v269 = vadd.f32 %v267, %v268
      %v270 = vrot.slane %v269, 1
      %v271 = vadd.f32 %v269, %v270
      %272 = vmatprep.subr.mxu0 0.0
      %273 = vmatpush1.msra.mxu0 %v198
      %274 = vmatprep.subr.mxu0 0.0
      %275 = vmatpush1.msra.mxu0 %v199
      %276 = vmatprep.subr.mxu0 0.0
      %277 = vmatpush1.msra.mxu0 %v200
      %278 = vmatprep.subr.mxu0 0.0
      %279 = vmatpush1.msra.mxu0 %v201
      %280 = vmatprep.subr.mxu0 0.0
      %281 = vmatpush1.msra.mxu0 %v202
      %282 = vmatprep.subr.mxu0 0.0
      %283 = vmatpush1.msra.mxu0 %v203
      %284 = vmatprep.subr.mxu0 0.0
      %285 = vmatpush1.msra.mxu0 %v204
      %286 = vmatprep.subr.mxu0 0.0
      %287 = vmatpush1.msra.mxu0 %v205
      %288 = vmatprep.subr.mxu0 0.0
      %289 = vmatpush1.msra.mxu0 %v206
      %290 = vmatprep.subr.mxu0 0.0
      %291 = vmatpush1.msra.mxu0 %v207
      %292 = vmatprep.subr.mxu0 0.0
      %293 = vmatpush1.msra.mxu0 %v208
      %294 = vmatprep.subr.mxu0 0.0
      %295 = vmatpush1.msra.mxu0 %v209
      %296 = vmatprep.subr.mxu0 0.0
      %297 = vmatpush1.msra.mxu0 %v210
      %298 = vmatprep.subr.mxu0 0.0
      %299 = vmatpush1.msra.mxu0 %v211
      %300 = vmatprep.subr.mxu0 0.0
      %301 = vmatpush1.msra.mxu0 %v212
      %302 = vmatprep.subr.mxu0 0.0
      %303 = vmatpush1.msra.mxu0 %v213
      %304 = vmatprep.subr.mxu0 0.0
      %305 = vmatpush1.msra.mxu0 0.0
      %306 = vmatprep.subr.mxu0 0.0
      %307 = vmatpush1.msra.mxu0 0.0
      %308 = vmatprep.subr.mxu0 0.0
      %309 = vmatpush1.msra.mxu0 0.0
      %310 = vmatprep.subr.mxu0 0.0
      %311 = vmatpush1.msra.mxu0 0.0
      %312 = vmatprep.subr.mxu0 0.0
      %313 = vmatpush1.msra.mxu0 0.0
      %314 = vmatprep.subr.mxu0 0.0
      %315 = vmatpush1.msra.mxu0 0.0
      %316 = vmatprep.subr.mxu0 0.0
      %317 = vmatpush1.msra.mxu0 0.0
      %318 = vmatprep.subr.mxu0 0.0
      %319 = vmatpush1.msra.mxu0 0.0
      %320 = vmatprep.subr.mxu0 0.0
      %321 = vmatpush1.msra.mxu0 0.0
      %322 = vmatprep.subr.mxu0 0.0
      %323 = vmatpush1.msra.mxu0 0.0
      %324 = vmatprep.subr.mxu0 0.0
      %325 = vmatpush1.msra.mxu0 0.0
      %326 = vmatprep.subr.mxu0 0.0
      %327 = vmatpush1.msra.mxu0 0.0
      %328 = vmatprep.subr.mxu0 0.0
      %329 = vmatpush1.msra.mxu0 0.0
      %330 = vmatprep.subr.mxu0 0.0
      %331 = vmatpush1.msra.mxu0 0.0
      %332 = vmatprep.subr.mxu0 0.0
      %333 = vmatpush1.msra.mxu0 0.0
      %334 = vmatprep.subr.mxu0 0.0
      %335 = vmatpush1.msra.mxu0 0.0
      %336 = vmatprep.mubr.f32.mxu0 0.0
      %337 = vmatmul.mubr.f32.gmra.mrb[0].mxu0 %v214
      %v338 = vpop.f32.mrb[0].mxu0
      %v339 = vadd.f32 0.0, %v338
      %v340 = vpop.f32.mrb[0].mxu0
      %341 = vmatprep.mubr.f32.mxu0 0.0
      %342 = vmatmul.mubr.f32.gmra.mrb[0].mxu0 %v215
      %v343 = vpop.f32.mrb[0].mxu0
      %v344 = vadd.f32 0.0, %v343
      %v345 = vpop.f32.mrb[0].mxu0
      %346 = vmatprep.mubr.f32.mxu0 0.0
      %347 = vmatmul.mubr.f32.gmra.mrb[0].mxu0 %v216
      %v348 = vpop.f32.mrb[0].mxu0
      %v349 = vadd.f32 0.0, %v348
      %v350 = vpop.f32.mrb[0].mxu0
      %351 = vmatprep.mubr.f32.mxu0 0.0
      %352 = vmatmul.mubr.f32.gmra.mrb[0].mxu0 %v217
      %v353 = vpop.f32.mrb[0].mxu0
      %v354 = vadd.f32 0.0, %v353
      %v355 = vpop.f32.mrb[0].mxu0
      %356 = vdwg.mxu0
      %v357 = vld [vmem:[%s2] sm:$0xff]
      %v358 = vld [vmem:[%s2 + $0x8] sm:$0xff]
      %v359 = vld [vmem:[%s2 + $0x10] sm:$0xff]
      %v360 = vld [vmem:[%s2 + $0x18] sm:$0xff]
      %v361 = vld [vmem:[%s3] sm:$0xff]
      %v362 = vld [vmem:[%s3 + $0x8] sm:$0xff]
      %v363 = vld [vmem:[%s3 + $0x10] sm:$0xff]
      %v364 = vld [vmem:[%s3 + $0x18] sm:$0xff]
      %366 = vset.pattern.permute.xlu0 0
      %367 = vperm.xlu0 %366, %v361
      %v368 = vpop.permute.xlu0 %367
      %371 = vset.pattern.permute.xlu0 0
      %372 = vperm.xlu0 %371, %v362
      %v373 = vpop.permute.xlu0 %372
      %376 = vset.pattern.permute.xlu0 0
      %377 = vperm.xlu0 %376, %v363
      %v378 = vpop.permute.xlu0 %377
      %381 = vset.pattern.permute.xlu0 0
      %382 = vperm.xlu0 %381, %v364
      %v383 = vpop.permute.xlu0 %382
      %v385 = vadd.f32 %v271, %v368
      %v386 = vadd.f32 %v271, %v373
      %v387 = vadd.f32 %v271, %v378
      %v388 = vadd.f32 %v271, %v383
      %v389 = vmul.f32 %v339, 2.0
      %v390 = vmul.f32 %v344, 2.0
      %v391 = vmul.f32 %v349, 2.0
      %v392 = vmul.f32 %v354, 2.0
      %v393 = vsub.f32 %v385, %v389
      %v394 = vsub.f32 %v386, %v390
      %v395 = vsub.f32 %v387, %v391
      %v396 = vsub.f32 %v388, %v392
      %398 = vset.pattern.permute.xlu0 0
      %399 = vperm.xlu0 %398, %v357
      %v400 = vpop.permute.xlu0 %399
      %403 = vset.pattern.permute.xlu0 0
      %404 = vperm.xlu0 %403, %v358
      %v405 = vpop.permute.xlu0 %404
      %408 = vset.pattern.permute.xlu0 0
      %409 = vperm.xlu0 %408, %v359
      %v410 = vpop.permute.xlu0 %409
      %413 = vset.pattern.permute.xlu0 0
      %414 = vperm.xlu0 %413, %v360
      %v415 = vpop.permute.xlu0 %414
      %v417 = vmul.f32 %v400, %v393
      %v418 = vmul.f32 %v405, %v394
      %v419 = vmul.f32 %v410, %v395
      %v420 = vmul.f32 %v415, %v396
      %v421 = vsel %vm234, %v417, -inf
      %v422 = vsel %vm234, %v418, -inf
      %v423 = vsel %vm234, %v419, -inf
      %v424 = vsel %vm234, %v420, -inf
      %v425 = vmax.f32 %v421, %v422
      %v426 = vmax.f32 %v423, %v424
      %v427 = vmax.f32 %v425, %v426
      %v428 = vrot.slane %v427, 4
      %v429 = vmax.f32 %v427, %v428
      %v430 = vrot.slane %v429, 2
      %v431 = vmax.f32 %v429, %v430
      %v432 = vrot.slane %v431, 1
      %v433 = vmax.f32 %v431, %v432
      %v434 = vsub.f32 %v417, %v433
      %v435 = vsub.f32 %v418, %v433
      %v436 = vsub.f32 %v419, %v433
      %v437 = vsub.f32 %v420, %v433
      %v438 = vmul.f32 %v434, 1.442695
      %v439 = vpow.pop %v438
      %v440 = vmul.f32 %v435, 1.442695
      %v441 = vpow.pop %v440
      %v442 = vmul.f32 %v436, 1.442695
      %v443 = vpow.pop %v442
      %v444 = vmul.f32 %v437, 1.442695
      %v445 = vpow.pop %v444
      %v446 = vsel %vm234, %v439, 0.0
      %v447 = vsel %vm234, %v441, 0.0
      %v448 = vadd.f32 %v446, %v447
      %v449 = vsel %vm234, %v443, 0.0
      %v450 = vadd.f32 %v448, %v449
      %v451 = vsel %vm234, %v445, 0.0
      %v452 = vadd.f32 %v450, %v451
      %v453 = vrot.slane %v452, 4
      %v454 = vadd.f32 %v452, %v453
      %v455 = vrot.slane %v454, 2
      %v456 = vadd.f32 %v454, %v455
      %v457 = vrot.slane %v456, 1
      %v458 = vadd.f32 %v456, %v457
      %v459 = vrcp.pop %v458
      %v460 = vmul.f32 %v439, %v459
      %v461 = vmul.f32 %v441, %v459
      %v462 = vmul.f32 %v443, %v459
      %v463 = vmul.f32 %v445, %v459
      %v464 = vsel %vm234, %v460, 0.0
      %465 = vadd.xlane.f32.xlu0 %v464
      %v466 = vpop.xlane.xlu0 %465
      %v467 = vsel %vm234, %v461, 0.0
      %468 = vadd.xlane.f32.xlu0 %v467
      %v469 = vpop.xlane.xlu0 %468
      %v470 = vsel %vm234, %v462, 0.0
      %471 = vadd.xlane.f32.xlu0 %v470
      %v472 = vpop.xlane.xlu0 %471
      %v473 = vsel %vm234, %v463, 0.0
      %474 = vadd.xlane.f32.xlu0 %v473
      %v475 = vpop.xlane.xlu0 %474
      %v477 = vsel %vm234, %v460, 0
      %v480 = vsel %vm234, %v461, 0
      %v483 = vsel %vm234, %v462, 0
      %v486 = vsel %vm234, %v463, 0
      %v489 = vsel %vm234, %v198, 0
      %v492 = vsel %vm234, %v199, 0
      %v495 = vsel %vm234, %v200, 0
      %v498 = vsel %vm234, %v201, 0
      %v501 = vsel %vm234, %v202, 0
      %v504 = vsel %vm234, %v203, 0
      %v507 = vsel %vm234, %v204, 0
      %v510 = vsel %vm234, %v205, 0
      %v513 = vsel %vm234, %v206, 0
      %v516 = vsel %vm234, %v207, 0
      %v519 = vsel %vm234, %v208, 0
      %v522 = vsel %vm234, %v209, 0
      %v525 = vsel %vm234, %v210, 0
      %v528 = vsel %vm234, %v211, 0
      %v531 = vsel %vm234, %v212, 0
      %v534 = vsel %vm234, %v213, 0
      %536 = vmatprep.subr.mxu0 0.0
      %537 = vmatpush1.xpose.msra.mxu0 %v489
      %538 = vmatprep.subr.mxu0 0.0
      %539 = vmatpush1.xpose.msra.mxu0 %v492
      %540 = vmatprep.subr.mxu0 0.0
      %541 = vmatpush1.xpose.msra.mxu0 %v495
      %542 = vmatprep.subr.mxu0 0.0
      %543 = vmatpush1.xpose.msra.mxu0 %v498
      %544 = vmatprep.subr.mxu0 0.0
      %545 = vmatpush1.xpose.msra.mxu0 %v501
      %546 = vmatprep.subr.mxu0 0.0
      %547 = vmatpush1.xpose.msra.mxu0 %v504
      %548 = vmatprep.subr.mxu0 0.0
      %549 = vmatpush1.xpose.msra.mxu0 %v507
      %550 = vmatprep.subr.mxu0 0.0
      %551 = vmatpush1.xpose.msra.mxu0 %v510
      %552 = vmatprep.subr.mxu0 0.0
      %553 = vmatpush1.xpose.msra.mxu0 %v513
      %554 = vmatprep.subr.mxu0 0.0
      %555 = vmatpush1.xpose.msra.mxu0 %v516
      %556 = vmatprep.subr.mxu0 0.0
      %557 = vmatpush1.xpose.msra.mxu0 %v519
      %558 = vmatprep.subr.mxu0 0.0
      %559 = vmatpush1.xpose.msra.mxu0 %v522
      %560 = vmatprep.subr.mxu0 0.0
      %561 = vmatpush1.xpose.msra.mxu0 %v525
      %562 = vmatprep.subr.mxu0 0.0
      %563 = vmatpush1.xpose.msra.mxu0 %v528
      %564 = vmatprep.subr.mxu0 0.0
      %565 = vmatpush1.xpose.msra.mxu0 %v531
      %566 = vmatprep.subr.mxu0 0.0
      %567 = vmatpush1.xpose.msra.mxu0 %v534
      %568 = vmatprep.subr.mxu0 0.0
      %569 = vmatpush1.xpose.msra.mxu0 0.0
      %570 = vmatprep.subr.mxu0 0.0
      %571 = vmatpush1.xpose.msra.mxu0 0.0
      %572 = vmatprep.subr.mxu0 0.0
      %573 = vmatpush1.xpose.msra.mxu0 0.0
      %574 = vmatprep.subr.mxu0 0.0
      %575 = vmatpush1.xpose.msra.mxu0 0.0
      %576 = vmatprep.subr.mxu0 0.0
      %577 = vmatpush1.xpose.msra.mxu0 0.0
      %578 = vmatprep.subr.mxu0 0.0
      %579 = vmatpush1.xpose.msra.mxu0 0.0
      %580 = vmatprep.subr.mxu0 0.0
      %581 = vmatpush1.xpose.msra.mxu0 0.0
      %582 = vmatprep.subr.mxu0 0.0
      %583 = vmatpush1.xpose.msra.mxu0 0.0
      %584 = vmatprep.subr.mxu0 0.0
      %585 = vmatpush1.xpose.msra.mxu0 0.0
      %586 = vmatprep.subr.mxu0 0.0
      %587 = vmatpush1.xpose.msra.mxu0 0.0
      %588 = vmatprep.subr.mxu0 0.0
      %589 = vmatpush1.xpose.msra.mxu0 0.0
      %590 = vmatprep.subr.mxu0 0.0
      %591 = vmatpush1.xpose.msra.mxu0 0.0
      %592 = vmatprep.subr.mxu0 0.0
      %593 = vmatpush1.xpose.msra.mxu0 0.0
      %594 = vmatprep.subr.mxu0 0.0
      %595 = vmatpush1.xpose.msra.mxu0 0.0
      %596 = vmatprep.subr.mxu0 0.0
      %597 = vmatpush1.xpose.msra.mxu0 0.0
      %598 = vmatprep.subr.mxu0 0.0
      %599 = vmatpush1.xpose.msra.mxu0 0.0
      %600 = vmatprep.mubr.f32.mxu0 0.0
      %601 = vmatmul.mubr.f32.gmra.mrb[0].mxu0 %v477
      %v602 = vpop.f32.mrb[0].mxu0
      %v603 = vadd.f32 0.0, %v602
      %v604 = vpop.f32.mrb[0].mxu0
      %605 = vmatprep.mubr.f32.mxu0 0.0
      %606 = vmatmul.mubr.f32.gmra.mrb[0].mxu0 %v480
      %v607 = vpop.f32.mrb[0].mxu0
      %v608 = vadd.f32 0.0, %v607
      %v609 = vpop.f32.mrb[0].mxu0
      %610 = vmatprep.mubr.f32.mxu0 0.0
      %611 = vmatmul.mubr.f32.gmra.mrb[0].mxu0 %v483
      %v612 = vpop.f32.mrb[0].mxu0
      %v613 = vadd.f32 0.0, %v612
      %v614 = vpop.f32.mrb[0].mxu0
      %615 = vmatprep.mubr.f32.mxu0 0.0
      %616 = vmatmul.mubr.f32.gmra.mrb[0].mxu0 %v486
      %v617 = vpop.f32.mrb[0].mxu0
      %v618 = vadd.f32 0.0, %v617
      %v619 = vpop.f32.mrb[0].mxu0
      %620 = vdwg.mxu0
      %v621 = vmul.f32 %v466, %v214
      %v622 = vmul.f32 %v469, %v215
      %v623 = vmul.f32 %v472, %v216
      %v624 = vmul.f32 %v475, %v217
      %v625 = vsub.f32 %v603, %v621
      %v626 = vsub.f32 %v608, %v622
      %v627 = vsub.f32 %v613, %v623
      %v628 = vsub.f32 %v618, %v624
      %629 = vst [vmem:[%s197] sm:$0xff] %v625
      %630 = vst [vmem:[%s197 + $0x8] sm:$0xff] %v626
      %631 = vst [vmem:[%s197 + $0x10] sm:$0xff] %v627
      %632 = vst [vmem:[%s197 + $0x18] sm:$0xff] %v628
      %p633 = scmp.lt.s32.totalorder %s15, 1
      %s634 = scalar_select %p633, %s15, 1
      %s635 = smul.addr %s634, 4
      %s636 = smul.addr %s635, 8
      %s637 = scalar_lea.vmem %s4, %s636
      // Predicated region
      $region37: #{deepten_head.4} parent=35 // pred_check
        %p638 = pneg %p122
      $region38: #{deepten_head.4} parent=35 // pred_check_branch
        %640 = sbr.rel (%p638) target = $region40
      $region39: #{deepten_head.4} parent=35 // pred_region
        _
      $region40: #{deepten_head.4} parent=35 // pred_fallthru
        _
    $region36: #{deepten_head.4} parent=5 // pred_fallthru
      _
    %p641 = scmp.le.s32.totalorder 2, %s10
    // Predicated region
    $region41: #{deepten_head.4} parent=5 // pred_check
      %p642 = pneg %p641
    $region42: #{deepten_head.4} parent=5 // pred_check_branch
      %644 = sbr.rel (%p642) target = $region44
    $region43: #{deepten_head.4} parent=5 // pred_region
      %s645 = ssub.s32 %s10, 2
      // Predicated region
      $region45: #{deepten_head.4} parent=43 // pred_check
        %p646 = pneg %p128
      $region46: #{deepten_head.4} parent=43 // pred_check_branch
        %648 = sbr.rel (%p646) target = $region48
      $region47: #{deepten_head.4} parent=43 // pred_region
        %p649 = scmp.lt.s32.totalorder %s16, 1
        %s650 = scalar_select %p649, %s16, 1
        %s651 = smul.addr %s650, 4
        %s652 = smul.addr %s651, 8
        %s653 = scalar_lea.vmem %s4, %s652
      $region48: #{deepten_head.4} parent=43 // pred_fallthru
        _
    $region44: #{deepten_head.4} parent=5 // pred_fallthru
      _
  $region6: #{deepten_head.4} parent=0 // loop_footer
    %s14 = sadd.s32 1, %s10
  $region7: #{deepten_head.4} parent=0 // loop_footer_branch
    %9 = sbr.rel target = $region3
  $region8: #{deepten_head.4} parent=0 // loop_exit
    _

// kernel: deepten_head.3
$region0: #{deepten_head.3}
  #allocation0 [shape = 'u32[]', space=smem, size = 0x4, offset = 0x4, fixed_abs, tag = 'smem constant byte address 0x4 - core index']
  #allocation1 [shape = 'u32[144,128]{1,0:T(1,128)}', space=vmem, size = 0x12000, scoped, tag = 'internal scratch']
  %s0 = inlined_call_operand.vmem [shape: bf16[2,2048,16], index: 0, kind: input, shape index: {}]
  %s1 = inlined_call_operand.vmem [shape: bf16[128,2048], index: 1, kind: input, shape index: {}]
  %s2 = inlined_call_operand.vmem [shape: f32[128,1], index: 2, kind: input, shape index: {}]
  %s3 = inlined_call_operand.vmem [shape: f32[2,128,16], index: 3, kind: output, shape index: {}]
  %s4 = sld [smem:[#allocation0]]
  $region45: #{deepten_head.3} parent=0
    _
  %s6 = ssub.s32 1, %s4
  %s7 = scalar_select 0, %s6, %s4
  loop: start=0, step=1, limit=4
  $region2: #{deepten_head.3} parent=0 // loop_pre_header
    _
  $region3: #{deepten_head.3} parent=0 // loop_header
    %s9 = sphi 0, %s13
    %p10 = scmp.ge.s32.totalorder %s9, 4
    %s19 = sphi 0, %s21
    %s22 = sphi 0, %s19
    %s23 = sphi 0, %s22
    %s39 = sphi 0, %s23
    %s43 = sphi 0, %s43
    %s45 = sphi 0, %s43
    %s46 = sphi 0, %s45
    %s60 = sphi 0, %s46
    %s64 = sphi 0, %s64
    %s66 = sphi 0, %s64
    %s67 = sphi 0, %s66
    %s81 = sphi 0, %s67
    %s87 = sphi 0, %s89
    %s90 = sphi 0, %s87
    %s91 = sphi 0, %s90
    %s107 = sphi 0, %s91
  $region4: #{deepten_head.3} parent=0 // loop_header_branch
    %12 = sbr.rel (%p10) target = $region8
  $region5: #{deepten_head.3} parent=0 // loop_body
    %s14 = ssub.s32 %s9, 1
    %s15 = ssub.s32 %s9, 2
    %s16 = sadd.s32 %s9, 1
    %s17 = ssub.s32 %s9, %s16
    %p18 = scmp.eq.s32.totalorder %s17, 0
    %s20 = sadd.s32 %s19, 1
    %s21 = scalar_select %p18, %s19, %s20
    %p24 = pneg %p18
    %p25 = scmp.eq.s32.totalorder %s9, 1
    %p26 = por %p24, %p25
    %p27 = scmp.ne.s32.totalorder %s19, %s22
    %p28 = scmp.eq.s32.totalorder %s9, 0
    %p29 = por %p27, %p28
    %p30 = scmp.ne.s32.totalorder %s19, %s22
    %p31 = scmp.eq.s32.totalorder %s14, 1
    %p32 = por %p30, %p31
    %p33 = scmp.ne.s32.totalorder %s22, %s23
    %p34 = scmp.eq.s32.totalorder %s14, 0
    %p35 = por %p33, %p34
    %p36 = scmp.ne.s32.totalorder %s22, %s23
    %p37 = scmp.eq.s32.totalorder %s15, 1
    %p38 = por %p36, %p37
    %p40 = scmp.ne.s32.totalorder %s23, %s39
    %p41 = scmp.eq.s32.totalorder %s15, 0
    %p42 = por %p40, %p41
    %s44 = sadd.s32 %s43, 1
    %p47 = scmp.eq.s32.totalorder %s9, 1
    %p48 = scmp.ne.s32.totalorder %s43, %s45
    %p49 = scmp.eq.s32.totalorder %s9, 0
    %p50 = por %p48, %p49
    %p51 = scmp.ne.s32.totalorder %s43, %s45
    %p52 = scmp.eq.s32.totalorder %s14, 1
    %p53 = por %p51, %p52
    %p54 = scmp.ne.s32.totalorder %s45, %s46
    %p55 = scmp.eq.s32.totalorder %s14, 0
    %p56 = por %p54, %p55
    %p57 = scmp.ne.s32.totalorder %s45, %s46
    %p58 = scmp.eq.s32.totalorder %s15, 1
    %p59 = por %p57, %p58
    %p61 = scmp.ne.s32.totalorder %s46, %s60
    %p62 = scmp.eq.s32.totalorder %s15, 0
    %p63 = por %p61, %p62
    %s65 = sadd.s32 %s64, 1
    %p68 = scmp.eq.s32.totalorder %s9, 1
    %p69 = scmp.ne.s32.totalorder %s64, %s66
    %p70 = scmp.eq.s32.totalorder %s9, 0
    %p71 = por %p69, %p70
    %p72 = scmp.ne.s32.totalorder %s64, %s66
    %p73 = scmp.eq.s32.totalorder %s14, 1
    %p74 = por %p72, %p73
    %p75 = scmp.ne.s32.totalorder %s66, %s67
    %p76 = scmp.eq.s32.totalorder %s14, 0
    %p77 = por %p75, %p76
    %p78 = scmp.ne.s32.totalorder %s66, %s67
    %p79 = scmp.eq.s32.totalorder %s15, 1
    %p80 = por %p78, %p79
    %p82 = scmp.ne.s32.totalorder %s67, %s81
    %p83 = scmp.eq.s32.totalorder %s15, 0
    %p84 = por %p82, %p83
    %s85 = ssub.s32 %s9, %s16
    %p86 = scmp.eq.s32.totalorder %s85, 0
    %s88 = sadd.s32 %s87, 1
    %s89 = scalar_select %p86, %s87, %s88
    %p92 = pneg %p86
    %p93 = scmp.eq.s32.totalorder %s9, 1
    %p94 = por %p92, %p93
    %p95 = scmp.ne.s32.totalorder %s87, %s90
    %p96 = scmp.eq.s32.totalorder %s9, 0
    %p97 = por %p95, %p96
    %p98 = scmp.ne.s32.totalorder %s87, %s90
    %p99 = scmp.eq.s32.totalorder %s14, 1
    %p100 = por %p98, %p99
    %p101 = scmp.ne.s32.totalorder %s90, %s91
    %p102 = scmp.eq.s32.totalorder %s14, 0
    %p103 = por %p101, %p102
    %p104 = scmp.ne.s32.totalorder %s90, %s91
    %p105 = scmp.eq.s32.totalorder %s15, 1
    %p106 = por %p104, %p105
    %p108 = scmp.ne.s32.totalorder %s91, %s107
    %p109 = scmp.eq.s32.totalorder %s15, 0
    %p110 = por %p108, %p109
    %p111 = scmp.le.s32.totalorder 1, %s9
    %p112 = scmp.lt.s32.totalorder %s9, 3
    %p113 = pnand %p111, %p112
    %p114 = pneg %p113
    // Predicated region
    $region9: #{deepten_head.3} parent=5 // pred_check
      _
    $region10: #{deepten_head.3} parent=5 // pred_check_branch
      %116 = sbr.rel (%p113) target = $region12
    $region11: #{deepten_head.3} parent=5 // pred_region
      %s117 = ssub.s32 %s9, 1
      // Predicated region
      $region13: #{deepten_head.3} parent=11 // pred_check
        %p118 = pneg %p56
      $region14: #{deepten_head.3} parent=11 // pred_check_branch
        %120 = sbr.rel (%p118) target = $region16
      $region15: #{deepten_head.3} parent=11 // pred_region
        _
      $region16: #{deepten_head.3} parent=11 // pred_fallthru
        _
      // Predicated region
      $region17: #{deepten_head.3} parent=11 // pred_check
        %p121 = pneg %p77
      $region18: #{deepten_head.3} parent=11 // pred_check_branch
        %123 = sbr.rel (%p121) target = $region20
      $region19: #{deepten_head.3} parent=11 // pred_region
        _
      $region20: #{deepten_head.3} parent=11 // pred_fallthru
        _
    $region12: #{deepten_head.3} parent=5 // pred_fallthru
      _
    %p124 = scmp.lt.s32.totalorder %s9, 2
    // Predicated region
    $region21: #{deepten_head.3} parent=5 // pred_check
      %p125 = pneg %p124
    $region22: #{deepten_head.3} parent=5 // pred_check_branch
      %127 = sbr.rel (%p125) target = $region24
    $region23: #{deepten_head.3} parent=5 // pred_region
      // Predicated region
      $region25: #{deepten_head.3} parent=23 // pred_check
        %p128 = pneg %p29
      $region26: #{deepten_head.3} parent=23 // pred_check_branch
        %130 = sbr.rel (%p128) target = $region28
      $region27: #{deepten_head.3} parent=23 // pred_region
        %p131 = scmp.lt.s32.totalorder %s9, 1
        %s132 = scalar_select %p131, %s9, 1
        %s133 = smul.addr %s132, 256
        %s134 = smul.addr %s133, 4
        %s135 = scalar_lea.vmem %s0, %s134
      $region28: #{deepten_head.3} parent=23 // pred_fallthru
        _
    $region24: #{deepten_head.3} parent=5 // pred_fallthru
      _
    %p136 = scmp.le.s32.totalorder 1, %s9
    %p137 = scmp.lt.s32.totalorder %s9, 3
    %p138 = pnand %p136, %p137
    %p139 = pneg %p138
    // Predicated region
    $region29: #{deepten_head.3} parent=5 // pred_check
      _
    $region30: #{deepten_head.3} parent=5 // pred_check_branch
      %141 = sbr.rel (%p138) target = $region32
    $region31: #{deepten_head.3} parent=5 // pred_region
      %s142 = ssub.s32 %s9, 1
      %p143 = scmp.lt.s32.totalorder %s14, 1
      %s144 = scalar_select %p143, %s14, 1
      %s145 = smul.addr %s144, 256
      %s146 = smul.addr %s145, 4
      %s147 = scalar_lea.vmem %s0, %s146
      %p148 = pneg %p35
      %p149 = pneg %p32
      %p150 = pneg %p56
      %p151 = pneg %p53
      %p152 = pneg %p77
      %p153 = pneg %p74
      %p154 = pneg %p103
      %p155 = pneg %p100
      %p156 = scmp.lt.s32.totalorder %s14, 1
      %s157 = scalar_select %p156, %s14, 1
      %s158 = smul.addr %s157, 16
      %s159 = smul.addr %s158, 8
      %s160 = scalar_lea.vmem %s3, %s159
      %p161 = scmp.lt.s32.totalorder %s14, 1
      %s162 = scalar_select %p161, %s14, 1
      %s163 = smul.addr %s162, 256
      %s164 = smul.addr %s163, 4
      %s165 = scalar_lea.vmem %s0, %s164
      %p166 = scmp.lt.s32.totalorder %s14, 1
      %s167 = scalar_select %p166, %s14, 1
      %s168 = smul.addr %s167, 16
      %s169 = smul.addr %s168, 8
      %s170 = scalar_lea.vmem %s3, %s169
      %v172 = vld [vmem:[%s1] sm:$0xff]
      %v173 = vld [vmem:[%s1 + $0x8] sm:$0xff]
      %v174 = vld [vmem:[%s1 + $0x10] sm:$0xff]
      %v175 = vld [vmem:[%s1 + $0x18] sm:$0xff]
      %v176 = vld [vmem:[%s1 + $0x20] sm:$0xff]
      %v177 = vld [vmem:[%s1 + $0x28] sm:$0xff]
      %v178 = vld [vmem:[%s1 + $0x30] sm:$0xff]
      %v179 = vld [vmem:[%s1 + $0x38] sm:$0xff]
      %v180 = vld [vmem:[%s1 + $0x40] sm:$0xff]
      %v181 = vld [vmem:[%s1 + $0x48] sm:$0xff]
      %v182 = vld [vmem:[%s1 + $0x50] sm:$0xff]
      %v183 = vld [vmem:[%s1 + $0x58] sm:$0xff]
      %v184 = vld [vmem:[%s1 + $0x60] sm:$0xff]
      %v185 = vld [vmem:[%s1 + $0x68] sm:$0xff]
      %v186 = vld [vmem:[%s1 + $0x70] sm:$0xff]
      %v187 = vld [vmem:[%s1 + $0x78] sm:$0xff]
      %v188 = vld [vmem:[%s1 + $0x80] sm:$0xff]
      %v189 = vld [vmem:[%s1 + $0x88] sm:$0xff]
      %v190 = vld [vmem:[%s1 + $0x90] sm:$0xff]
      %v191 = vld [vmem:[%s1 + $0x98] sm:$0xff]
      %v192 = vld [vmem:[%s1 + $0xa0] sm:$0xff]
      %v193 = vld [vmem:[%s1 + $0xa8] sm:$0xff]
      %v194 = vld [vmem:[%s1 + $0xb0] sm:$0xff]
      %v195 = vld [vmem:[%s1 + $0xb8] sm:$0xff]
      %v196 = vld [vmem:[%s1 + $0xc0] sm:$0xff]
      %v197 = vld [vmem:[%s1 + $0xc8] sm:$0xff]
      %v198 = vld [vmem:[%s1 + $0xd0] sm:$0xff]
      %v199 = vld [vmem:[%s1 + $0xd8] sm:$0xff]
      %v200 = vld [vmem:[%s1 + $0xe0] sm:$0xff]
      %v201 = vld [vmem:[%s1 + $0xe8] sm:$0xff]
      %v202 = vld [vmem:[%s1 + $0xf0] sm:$0xff]
      %v203 = vld [vmem:[%s1 + $0xf8] sm:$0xff]
      %v204 = vld [vmem:[%s1 + $0x100] sm:$0xff]
      %v205 = vld [vmem:[%s1 + $0x108] sm:$0xff]
      %v206 = vld [vmem:[%s1 + $0x110] sm:$0xff]
      %v207 = vld [vmem:[%s1 + $0x118] sm:$0xff]
      %v208 = vld [vmem:[%s1 + $0x120] sm:$0xff]
      %v209 = vld [vmem:[%s1 + $0x128] sm:$0xff]
      %v210 = vld [vmem:[%s1 + $0x130] sm:$0xff]
      %v211 = vld [vmem:[%s1 + $0x138] sm:$0xff]
      %v212 = vld [vmem:[%s1 + $0x140] sm:$0xff]
      %v213 = vld [vmem:[%s1 + $0x148] sm:$0xff]
      %v214 = vld [vmem:[%s1 + $0x150] sm:$0xff]
      %v215 = vld [vmem:[%s1 + $0x158] sm:$0xff]
      %v216 = vld [vmem:[%s1 + $0x160] sm:$0xff]
      %v217 = vld [vmem:[%s1 + $0x168] sm:$0xff]
      %v218 = vld [vmem:[%s1 + $0x170] sm:$0xff]
      %v219 = vld [vmem:[%s1 + $0x178] sm:$0xff]
      %v220 = vld [vmem:[%s1 + $0x180] sm:$0xff]
      %v221 = vld [vmem:[%s1 + $0x188] sm:$0xff]
      %v222 = vld [vmem:[%s1 + $0x190] sm:$0xff]
      %v223 = vld [vmem:[%s1 + $0x198] sm:$0xff]
      %v224 = vld [vmem:[%s1 + $0x1a0] sm:$0xff]
      %v225 = vld [vmem:[%s1 + $0x1a8] sm:$0xff]
      %v226 = vld [vmem:[%s1 + $0x1b0] sm:$0xff]
      %v227 = vld [vmem:[%s1 + $0x1b8] sm:$0xff]
      %v228 = vld [vmem:[%s1 + $0x1c0] sm:$0xff]
      %v229 = vld [vmem:[%s1 + $0x1c8] sm:$0xff]
      %v230 = vld [vmem:[%s1 + $0x1d0] sm:$0xff]
      %v231 = vld [vmem:[%s1 + $0x1d8] sm:$0xff]
      %v232 = vld [vmem:[%s1 + $0x1e0] sm:$0xff]
      %v233 = vld [vmem:[%s1 + $0x1e8] sm:$0xff]
      %v234 = vld [vmem:[%s1 + $0x1f0] sm:$0xff]
      %v235 = vld [vmem:[%s1 + $0x1f8] sm:$0xff]
      %v236 = vld [vmem:[%s1 + $0x200] sm:$0xff]
      %v237 = vld [vmem:[%s1 + $0x208] sm:$0xff]
      %v238 = vld [vmem:[%s1 + $0x210] sm:$0xff]
      %v239 = vld [vmem:[%s1 + $0x218] sm:$0xff]
      %v240 = vld [vmem:[%s1 + $0x220] sm:$0xff]
      %v241 = vld [vmem:[%s1 + $0x228] sm:$0xff]
      %v242 = vld [vmem:[%s1 + $0x230] sm:$0xff]
      %v243 = vld [vmem:[%s1 + $0x238] sm:$0xff]
      %v244 = vld [vmem:[%s1 + $0x240] sm:$0xff]
      %v245 = vld [vmem:[%s1 + $0x248] sm:$0xff]
      %v246 = vld [vmem:[%s1 + $0x250] sm:$0xff]
      %v247 = vld [vmem:[%s1 + $0x258] sm:$0xff]
      %v248 = vld [vmem:[%s1 + $0x260] sm:$0xff]
      %v249 = vld [vmem:[%s1 + $0x268] sm:$0xff]
      %v250 = vld [vmem:[%s1 + $0x270] sm:$0xff]
      %v251 = vld [vmem:[%s1 + $0x278] sm:$0xff]
      %v252 = vld [vmem:[%s1 + $0x280] sm:$0xff]
      %v253 = vld [vmem:[%s1 + $0x288] sm:$0xff]
      %v254 = vld [vmem:[%s1 + $0x290] sm:$0xff]
      %v255 = vld [vmem:[%s1 + $0x298] sm:$0xff]
      %v256 = vld [vmem:[%s1 + $0x2a0] sm:$0xff]
      %v257 = vld [vmem:[%s1 + $0x2a8] sm:$0xff]
      %v258 = vld [vmem:[%s1 + $0x2b0] sm:$0xff]
      %v259 = vld [vmem:[%s1 + $0x2b8] sm:$0xff]
      %v260 = vld [vmem:[%s1 + $0x2c0] sm:$0xff]
      %v261 = vld [vmem:[%s1 + $0x2c8] sm:$0xff]
      %v262 = vld [vmem:[%s1 + $0x2d0] sm:$0xff]
      %v263 = vld [vmem:[%s1 + $0x2d8] sm:$0xff]
      %v264 = vld [vmem:[%s1 + $0x2e0] sm:$0xff]
      %v265 = vld [vmem:[%s1 + $0x2e8] sm:$0xff]
      %v266 = vld [vmem:[%s1 + $0x2f0] sm:$0xff]
      %v267 = vld [vmem:[%s1 + $0x2f8] sm:$0xff]
      %v268 = vld [vmem:[%s1 + $0x300] sm:$0xff]
      %v269 = vld [vmem:[%s1 + $0x308] sm:$0xff]
      %v270 = vld [vmem:[%s1 + $0x310] sm:$0xff]
      %v271 = vld [vmem:[%s1 + $0x318] sm:$0xff]
      %v272 = vld [vmem:[%s1 + $0x320] sm:$0xff]
      %v273 = vld [vmem:[%s1 + $0x328] sm:$0xff]
      %v274 = vld [vmem:[%s1 + $0x330] sm:$0xff]
      %v275 = vld [vmem:[%s1 + $0x338] sm:$0xff]
      %v276 = vld [vmem:[%s1 + $0x340] sm:$0xff]
      %v277 = vld [vmem:[%s1 + $0x348] sm:$0xff]
      %v278 = vld [vmem:[%s1 + $0x350] sm:$0xff]
      %v279 = vld [vmem:[%s1 + $0x358] sm:$0xff]
      %v280 = vld [vmem:[%s1 + $0x360] sm:$0xff]
      %v281 = vld [vmem:[%s1 + $0x368] sm:$0xff]
      %v282 = vld [vmem:[%s1 + $0x370] sm:$0xff]
      %v283 = vld [vmem:[%s1 + $0x378] sm:$0xff]
      %v284 = vld [vmem:[%s1 + $0x380] sm:$0xff]
      %v285 = vld [vmem:[%s1 + $0x388] sm:$0xff]
      %v286 = vld [vmem:[%s1 + $0x390] sm:$0xff]
      %v287 = vld [vmem:[%s1 + $0x398] sm:$0xff]
      %v288 = vld [vmem:[%s1 + $0x3a0] sm:$0xff]
      %v289 = vld [vmem:[%s1 + $0x3a8] sm:$0xff]
      %v290 = vld [vmem:[%s1 + $0x3b0] sm:$0xff]
      %v291 = vld [vmem:[%s1 + $0x3b8] sm:$0xff]
      %v292 = vld [vmem:[%s1 + $0x3c0] sm:$0xff]
      %v293 = vld [vmem:[%s1 + $0x3c8] sm:$0xff]
      %v294 = vld [vmem:[%s1 + $0x3d0] sm:$0xff]
      %v295 = vld [vmem:[%s1 + $0x3d8] sm:$0xff]
      %v296 = vld [vmem:[%s1 + $0x3e0] sm:$0xff]
      %v297 = vld [vmem:[%s1 + $0x3e8] sm:$0xff]
      %v298 = vld [vmem:[%s1 + $0x3f0] sm:$0xff]
      %v299 = vld [vmem:[%s1 + $0x3f8] sm:$0xff]
      %v300 = vld [vmem:[%s2] sm:$0xff]
      %v301 = vld [vmem:[%s2 + $0x8] sm:$0xff]
      %v302 = vld [vmem:[%s2 + $0x10] sm:$0xff]
      %v303 = vld [vmem:[%s2 + $0x18] sm:$0xff]
      %v304 = vld [vmem:[%s2 + $0x20] sm:$0xff]
      %v305 = vld [vmem:[%s2 + $0x28] sm:$0xff]
      %v306 = vld [vmem:[%s2 + $0x30] sm:$0xff]
      %v307 = vld [vmem:[%s2 + $0x38] sm:$0xff]
      %v308 = vld [vmem:[%s2 + $0x40] sm:$0xff]
      %v309 = vld [vmem:[%s2 + $0x48] sm:$0xff]
      %v310 = vld [vmem:[%s2 + $0x50] sm:$0xff]
      %v311 = vld [vmem:[%s2 + $0x58] sm:$0xff]
      %v312 = vld [vmem:[%s2 + $0x60] sm:$0xff]
      %v313 = vld [vmem:[%s2 + $0x68] sm:$0xff]
      %v314 = vld [vmem:[%s2 + $0x70] sm:$0xff]
      %v315 = vld [vmem:[%s2 + $0x78] sm:$0xff]
      %v316 = vld [vmem:[%s165] sm:$0xf]
      %v317 = vld [vmem:[%s165 + $0x4] sm:$0xf]
      %v318 = vld [vmem:[%s165 + $0x8] sm:$0xf]
      %v319 = vld [vmem:[%s165 + $0xc] sm:$0xf]
      %v320 = vld [vmem:[%s165 + $0x10] sm:$0xf]
      %v321 = vld [vmem:[%s165 + $0x14] sm:$0xf]
      %v322 = vld [vmem:[%s165 + $0x18] sm:$0xf]
      %v323 = vld [vmem:[%s165 + $0x1c] sm:$0xf]
      %v324 = vld [vmem:[%s165 + $0x20] sm:$0xf]
      %v325 = vld [vmem:[%s165 + $0x24] sm:$0xf]
      %v326 = vld [vmem:[%s165 + $0x28] sm:$0xf]
      %v327 = vld [vmem:[%s165 + $0x2c] sm:$0xf]
      %v328 = vld [vmem:[%s165 + $0x30] sm:$0xf]
      %v329 = vld [vmem:[%s165 + $0x34] sm:$0xf]
      %v330 = vld [vmem:[%s165 + $0x38] sm:$0xf]
      %v331 = vld [vmem:[%s165 + $0x3c] sm:$0xf]
      %v332 = vld [vmem:[%s165 + $0x40] sm:$0xf]
      %v333 = vld [vmem:[%s165 + $0x44] sm:$0xf]
      %v334 = vld [vmem:[%s165 + $0x48] sm:$0xf]
      %v335 = vld [vmem:[%s165 + $0x4c] sm:$0xf]
      %v336 = vld [vmem:[%s165 + $0x50] sm:$0xf]
      %v337 = vld [vmem:[%s165 + $0x54] sm:$0xf]
      %v338 = vld [vmem:[%s165 + $0x58] sm:$0xf]
      %v339 = vld [vmem:[%s165 + $0x5c] sm:$0xf]
      %v340 = vld [vmem:[%s165 + $0x60] sm:$0xf]
      %v341 = vld [vmem:[%s165 + $0x64] sm:$0xf]
      %v342 = vld [vmem:[%s165 + $0x68] sm:$0xf]
      %v343 = vld [vmem:[%s165 + $0x6c] sm:$0xf]
      %v344 = vld [vmem:[%s165 + $0x70] sm:$0xf]
      %v345 = vld [vmem:[%s165 + $0x74] sm:$0xf]
      %v346 = vld [vmem:[%s165 + $0x78] sm:$0xf]
      %v347 = vld [vmem:[%s165 + $0x7c] sm:$0xf]
      %v348 = vld [vmem:[%s165 + $0x80] sm:$0xf]
      %v349 = vld [vmem:[%s165 + $0x84] sm:$0xf]
      %v350 = vld [vmem:[%s165 + $0x88] sm:$0xf]
      %v351 = vld [vmem:[%s165 + $0x8c] sm:$0xf]
      %v352 = vld [vmem:[%s165 + $0x90] sm:$0xf]
      %v353 = vld [vmem:[%s165 + $0x94] sm:$0xf]
      %v354 = vld [vmem:[%s165 + $0x98] sm:$0xf]
      %v355 = vld [vmem:[%s165 + $0x9c] sm:$0xf]
      %v356 = vld [vmem:[%s165 + $0xa0] sm:$0xf]
      %v357 = vld [vmem:[%s165 + $0xa4] sm:$0xf]
      %v358 = vld [vmem:[%s165 + $0xa8] sm:$0xf]
      %v359 = vld [vmem:[%s165 + $0xac] sm:$0xf]
      %v360 = vld [vmem:[%s165 + $0xb0] sm:$0xf]
      %v361 = vld [vmem:[%s165 + $0xb4] sm:$0xf]
      %v362 = vld [vmem:[%s165 + $0xb8] sm:$0xf]
      %v363 = vld [vmem:[%s165 + $0xbc] sm:$0xf]
      %v364 = vld [vmem:[%s165 + $0xc0] sm:$0xf]
      %v365 = vld [vmem:[%s165 + $0xc4] sm:$0xf]
      %v366 = vld [vmem:[%s165 + $0xc8] sm:$0xf]
      %v367 = vld [vmem:[%s165 + $0xcc] sm:$0xf]
      %v368 = vld [vmem:[%s165 + $0xd0] sm:$0xf]
      %v369 = vld [vmem:[%s165 + $0xd4] sm:$0xf]
      %v370 = vld [vmem:[%s165 + $0xd8] sm:$0xf]
      %v371 = vld [vmem:[%s165 + $0xdc] sm:$0xf]
      %v372 = vld [vmem:[%s165 + $0xe0] sm:$0xf]
      %v373 = vld [vmem:[%s165 + $0xe4] sm:$0xf]
      %v374 = vld [vmem:[%s165 + $0xe8] sm:$0xf]
      %v375 = vld [vmem:[%s165 + $0xec] sm:$0xf]
      %v376 = vld [vmem:[%s165 + $0xf0] sm:$0xf]
      %v377 = vld [vmem:[%s165 + $0xf4] sm:$0xf]
      %v378 = vld [vmem:[%s165 + $0xf8] sm:$0xf]
      %v379 = vld [vmem:[%s165 + $0xfc] sm:$0xf]
      %v380 = vld [vmem:[%s165 + $0x100] sm:$0xf]
      %v381 = vld [vmem:[%s165 + $0x104] sm:$0xf]
      %v382 = vld [vmem:[%s165 + $0x108] sm:$0xf]
      %v383 = vld [vmem:[%s165 + $0x10c] sm:$0xf]
      %v384 = vld [vmem:[%s165 + $0x110] sm:$0xf]
      %v385 = vld [vmem:[%s165 + $0x114] sm:$0xf]
      %v386 = vld [vmem:[%s165 + $0x118] sm:$0xf]
      %v387 = vld [vmem:[%s165 + $0x11c] sm:$0xf]
      %v388 = vld [vmem:[%s165 + $0x120] sm:$0xf]
      %v389 = vld [vmem:[%s165 + $0x124] sm:$0xf]
      %v390 = vld [vmem:[%s165 + $0x128] sm:$0xf]
      %v391 = vld [vmem:[%s165 + $0x12c] sm:$0xf]
      %v392 = vld [vmem:[%s165 + $0x130] sm:$0xf]
      %v393 = vld [vmem:[%s165 + $0x134] sm:$0xf]
      %v394 = vld [vmem:[%s165 + $0x138] sm:$0xf]
      %v395 = vld [vmem:[%s165 + $0x13c] sm:$0xf]
      %v396 = vld [vmem:[%s165 + $0x140] sm:$0xf]
      %v397 = vld [vmem:[%s165 + $0x144] sm:$0xf]
      %v398 = vld [vmem:[%s165 + $0x148] sm:$0xf]
      %v399 = vld [vmem:[%s165 + $0x14c] sm:$0xf]
      %v400 = vld [vmem:[%s165 + $0x150] sm:$0xf]
      %v401 = vld [vmem:[%s165 + $0x154] sm:$0xf]
      %v402 = vld [vmem:[%s165 + $0x158] sm:$0xf]
      %v403 = vld [vmem:[%s165 + $0x15c] sm:$0xf]
      %v404 = vld [vmem:[%s165 + $0x160] sm:$0xf]
      %v405 = vld [vmem:[%s165 + $0x164] sm:$0xf]
      %v406 = vld [vmem:[%s165 + $0x168] sm:$0xf]
      %v407 = vld [vmem:[%s165 + $0x16c] sm:$0xf]
      %v408 = vld [vmem:[%s165 + $0x170] sm:$0xf]
      %v409 = vld [vmem:[%s165 + $0x174] sm:$0xf]
      %v410 = vld [vmem:[%s165 + $0x178] sm:$0xf]
      %v411 = vld [vmem:[%s165 + $0x17c] sm:$0xf]
      %v412 = vld [vmem:[%s165 + $0x180] sm:$0xf]
      %v413 = vld [vmem:[%s165 + $0x184] sm:$0xf]
      %v414 = vld [vmem:[%s165 + $0x188] sm:$0xf]
      %v415 = vld [vmem:[%s165 + $0x18c] sm:$0xf]
      %v416 = vld [vmem:[%s165 + $0x190] sm:$0xf]
      %v417 = vld [vmem:[%s165 + $0x194] sm:$0xf]
      %v418 = vld [vmem:[%s165 + $0x198] sm:$0xf]
      %v419 = vld [vmem:[%s165 + $0x19c] sm:$0xf]
      %v420 = vld [vmem:[%s165 + $0x1a0] sm:$0xf]
      %v421 = vld [vmem:[%s165 + $0x1a4] sm:$0xf]
      %v422 = vld [vmem:[%s165 + $0x1a8] sm:$0xf]
      %v423 = vld [vmem:[%s165 + $0x1ac] sm:$0xf]
      %v424 = vld [vmem:[%s165 + $0x1b0] sm:$0xf]
      %v425 = vld [vmem:[%s165 + $0x1b4] sm:$0xf]
      %v426 = vld [vmem:[%s165 + $0x1b8] sm:$0xf]
      %v427 = vld [vmem:[%s165 + $0x1bc] sm:$0xf]
      %v428 = vld [vmem:[%s165 + $0x1c0] sm:$0xf]
      %v429 = vld [vmem:[%s165 + $0x1c4] sm:$0xf]
      %v430 = vld [vmem:[%s165 + $0x1c8] sm:$0xf]
      %v431 = vld [vmem:[%s165 + $0x1cc] sm:$0xf]
      %v432 = vld [vmem:[%s165 + $0x1d0] sm:$0xf]
      %v433 = vld [vmem:[%s165 + $0x1d4] sm:$0xf]
      %v434 = vld [vmem:[%s165 + $0x1d8] sm:$0xf]
      %v435 = vld [vmem:[%s165 + $0x1dc] sm:$0xf]
      %v436 = vld [vmem:[%s165 + $0x1e0] sm:$0xf]
      %v437 = vld [vmem:[%s165 + $0x1e4] sm:$0xf]
      %v438 = vld [vmem:[%s165 + $0x1e8] sm:$0xf]
      %v439 = vld [vmem:[%s165 + $0x1ec] sm:$0xf]
      %v440 = vld [vmem:[%s165 + $0x1f0] sm:$0xf]
      %v441 = vld [vmem:[%s165 + $0x1f4] sm:$0xf]
      %v442 = vld [vmem:[%s165 + $0x1f8] sm:$0xf]
      %v443 = vld [vmem:[%s165 + $0x1fc] sm:$0xf]
      %v444 = vld [vmem:[%s165 + $0x200] sm:$0xf]
      %v445 = vld [vmem:[%s165 + $0x204] sm:$0xf]
      %v446 = vld [vmem:[%s165 + $0x208] sm:$0xf]
      %v447 = vld [vmem:[%s165 + $0x20c] sm:$0xf]
      %v448 = vld [vmem:[%s165 + $0x210] sm:$0xf]
      %v449 = vld [vmem:[%s165 + $0x214] sm:$0xf]
      %v450 = vld [vmem:[%s165 + $0x218] sm:$0xf]
      %v451 = vld [vmem:[%s165 + $0x21c] sm:$0xf]
      %v452 = vld [vmem:[%s165 + $0x220] sm:$0xf]
      %v453 = vld [vmem:[%s165 + $0x224] sm:$0xf]
      %v454 = vld [vmem:[%s165 + $0x228] sm:$0xf]
      %v455 = vld [vmem:[%s165 + $0x22c] sm:$0xf]
      %v456 = vld [vmem:[%s165 + $0x230] sm:$0xf]
      %v457 = vld [vmem:[%s165 + $0x234] sm:$0xf]
      %v458 = vld [vmem:[%s165 + $0x238] sm:$0xf]
      %v459 = vld [vmem:[%s165 + $0x23c] sm:$0xf]
      %v460 = vld [vmem:[%s165 + $0x240] sm:$0xf]
      %v461 = vld [vmem:[%s165 + $0x244] sm:$0xf]
      %v462 = vld [vmem:[%s165 + $0x248] sm:$0xf]
      %v463 = vld [vmem:[%s165 + $0x24c] sm:$0xf]
      %v464 = vld [vmem:[%s165 + $0x250] sm:$0xf]
      %v465 = vld [vmem:[%s165 + $0x254] sm:$0xf]
      %v466 = vld [vmem:[%s165 + $0x258] sm:$0xf]
      %v467 = vld [vmem:[%s165 + $0x25c] sm:$0xf]
      %v468 = vld [vmem:[%s165 + $0x260] sm:$0xf]
      %v469 = vld [vmem:[%s165 + $0x264] sm:$0xf]
      %v470 = vld [vmem:[%s165 + $0x268] sm:$0xf]
      %v471 = vld [vmem:[%s165 + $0x26c] sm:$0xf]
      %v472 = vld [vmem:[%s165 + $0x270] sm:$0xf]
      %v473 = vld [vmem:[%s165 + $0x274] sm:$0xf]
      %v474 = vld [vmem:[%s165 + $0x278] sm:$0xf]
      %v475 = vld [vmem:[%s165 + $0x27c] sm:$0xf]
      %v476 = vld [vmem:[%s165 + $0x280] sm:$0xf]
      %v477 = vld [vmem:[%s165 + $0x284] sm:$0xf]
      %v478 = vld [vmem:[%s165 + $0x288] sm:$0xf]
      %v479 = vld [vmem:[%s165 + $0x28c] sm:$0xf]
      %v480 = vld [vmem:[%s165 + $0x290] sm:$0xf]
      %v481 = vld [vmem:[%s165 + $0x294] sm:$0xf]
      %v482 = vld [vmem:[%s165 + $0x298] sm:$0xf]
      %v483 = vld [vmem:[%s165 + $0x29c] sm:$0xf]
      %v484 = vld [vmem:[%s165 + $0x2a0] sm:$0xf]
      %v485 = vld [vmem:[%s165 + $0x2a4] sm:$0xf]
      %v486 = vld [vmem:[%s165 + $0x2a8] sm:$0xf]
      %v487 = vld [vmem:[%s165 + $0x2ac] sm:$0xf]
      %v488 = vld [vmem:[%s165 + $0x2b0] sm:$0xf]
      %v489 = vld [vmem:[%s165 + $0x2b4] sm:$0xf]
      %v490 = vld [vmem:[%s165 + $0x2b8] sm:$0xf]
      %v491 = vld [vmem:[%s165 + $0x2bc] sm:$0xf]
      %v492 = vld [vmem:[%s165 + $0x2c0] sm:$0xf]
      %v493 = vld [vmem:[%s165 + $0x2c4] sm:$0xf]
      %v494 = vld [vmem:[%s165 + $0x2c8] sm:$0xf]
      %v495 = vld [vmem:[%s165 + $0x2cc] sm:$0xf]
      %v496 = vld [vmem:[%s165 + $0x2d0] sm:$0xf]
      %v497 = vld [vmem:[%s165 + $0x2d4] sm:$0xf]
      %v498 = vld [vmem:[%s165 + $0x2d8] sm:$0xf]
      %v499 = vld [vmem:[%s165 + $0x2dc] sm:$0xf]
      %v500 = vld [vmem:[%s165 + $0x2e0] sm:$0xf]
      %v501 = vld [vmem:[%s165 + $0x2e4] sm:$0xf]
      %v502 = vld [vmem:[%s165 + $0x2e8] sm:$0xf]
      %v503 = vld [vmem:[%s165 + $0x2ec] sm:$0xf]
      %v504 = vld [vmem:[%s165 + $0x2f0] sm:$0xf]
      %v505 = vld [vmem:[%s165 + $0x2f4] sm:$0xf]
      %v506 = vld [vmem:[%s165 + $0x2f8] sm:$0xf]
      %v507 = vld [vmem:[%s165 + $0x2fc] sm:$0xf]
      %v508 = vld [vmem:[%s165 + $0x300] sm:$0xf]
      %v509 = vld [vmem:[%s165 + $0x304] sm:$0xf]
      %v510 = vld [vmem:[%s165 + $0x308] sm:$0xf]
      %v511 = vld [vmem:[%s165 + $0x30c] sm:$0xf]
      %v512 = vld [vmem:[%s165 + $0x310] sm:$0xf]
      %v513 = vld [vmem:[%s165 + $0x314] sm:$0xf]
      %v514 = vld [vmem:[%s165 + $0x318] sm:$0xf]
      %v515 = vld [vmem:[%s165 + $0x31c] sm:$0xf]
      %v516 = vld [vmem:[%s165 + $0x320] sm:$0xf]
      %v517 = vld [vmem:[%s165 + $0x324] sm:$0xf]
      %v518 = vld [vmem:[%s165 + $0x328] sm:$0xf]
      %v519 = vld [vmem:[%s165 + $0x32c] sm:$0xf]
      %v520 = vld [vmem:[%s165 + $0x330] sm:$0xf]
      %v521 = vld [vmem:[%s165 + $0x334] sm:$0xf]
      %v522 = vld [vmem:[%s165 + $0x338] sm:$0xf]
      %v523 = vld [vmem:[%s165 + $0x33c] sm:$0xf]
      %v524 = vld [vmem:[%s165 + $0x340] sm:$0xf]
      %v525 = vld [vmem:[%s165 + $0x344] sm:$0xf]
      %v526 = vld [vmem:[%s165 + $0x348] sm:$0xf]
      %v527 = vld [vmem:[%s165 + $0x34c] sm:$0xf]
      %v528 = vld [vmem:[%s165 + $0x350] sm:$0xf]
      %v529 = vld [vmem:[%s165 + $0x354] sm:$0xf]
      %v530 = vld [vmem:[%s165 + $0x358] sm:$0xf]
      %v531 = vld [vmem:[%s165 + $0x35c] sm:$0xf]
      %v532 = vld [vmem:[%s165 + $0x360] sm:$0xf]
      %v533 = vld [vmem:[%s165 + $0x364] sm:$0xf]
      %v534 = vld [vmem:[%s165 + $0x368] sm:$0xf]
      %v535 = vld [vmem:[%s165 + $0x36c] sm:$0xf]
      %v536 = vld [vmem:[%s165 + $0x370] sm:$0xf]
      %v537 = vld [vmem:[%s165 + $0x374] sm:$0xf]
      %v538 = vld [vmem:[%s165 + $0x378] sm:$0xf]
      %v539 = vld [vmem:[%s165 + $0x37c] sm:$0xf]
      %v540 = vld [vmem:[%s165 + $0x380] sm:$0xf]
      %v541 = vld [vmem:[%s165 + $0x384] sm:$0xf]
      %v542 = vld [vmem:[%s165 + $0x388] sm:$0xf]
      %v543 = vld [vmem:[%s165 + $0x38c] sm:$0xf]
      %v544 = vld [vmem:[%s165 + $0x390] sm:$0xf]
      %v545 = vld [vmem:[%s165 + $0x394] sm:$0xf]
      %v546 = vld [vmem:[%s165 + $0x398] sm:$0xf]
      %v547 = vld [vmem:[%s165 + $0x39c] sm:$0xf]
      %v548 = vld [vmem:[%s165 + $0x3a0] sm:$0xf]
      %v549 = vld [vmem:[%s165 + $0x3a4] sm:$0xf]
      %v550 = vld [vmem:[%s165 + $0x3a8] sm:$0xf]
      %v551 = vld [vmem:[%s165 + $0x3ac] sm:$0xf]
      %v552 = vld [vmem:[%s165 + $0x3b0] sm:$0xf]
      %v553 = vld [vmem:[%s165 + $0x3b4] sm:$0xf]
      %v554 = vld [vmem:[%s165 + $0x3b8] sm:$0xf]
      %v555 = vld [vmem:[%s165 + $0x3bc] sm:$0xf]
      %v556 = vld [vmem:[%s165 + $0x3c0] sm:$0xf]
      %v557 = vld [vmem:[%s165 + $0x3c4] sm:$0xf]
      %v558 = vld [vmem:[%s165 + $0x3c8] sm:$0xf]
      %v559 = vld [vmem:[%s165 + $0x3cc] sm:$0xf]
      %v560 = vld [vmem:[%s165 + $0x3d0] sm:$0xf]
      %v561 = vld [vmem:[%s165 + $0x3d4] sm:$0xf]
      %v562 = vld [vmem:[%s165 + $0x3d8] sm:$0xf]
      %v563 = vld [vmem:[%s165 + $0x3dc] sm:$0xf]
      %v564 = vld [vmem:[%s165 + $0x3e0] sm:$0xf]
      %v565 = vld [vmem:[%s165 + $0x3e4] sm:$0xf]
      %v566 = vld [vmem:[%s165 + $0x3e8] sm:$0xf]
      %v567 = vld [vmem:[%s165 + $0x3ec] sm:$0xf]
      %v568 = vld [vmem:[%s165 + $0x3f0] sm:$0xf]
      %v569 = vld [vmem:[%s165 + $0x3f4] sm:$0xf]
      %v570 = vld [vmem:[%s165 + $0x3f8] sm:$0xf]
      %v571 = vld [vmem:[%s165 + $0x3fc] sm:$0xf]
      %573 = vset.pattern.permute.xlu0 0
      %574 = vperm.xlu0 %573, %v300
      %v575 = vpop.permute.xlu0 %574
      %578 = vset.pattern.permute.xlu0 0
      %579 = vperm.xlu0 %578, %v301
      %v580 = vpop.permute.xlu0 %579
      %583 = vset.pattern.permute.xlu0 0
      %584 = vperm.xlu0 %583, %v302
      %v585 = vpop.permute.xlu0 %584
      %588 = vset.pattern.permute.xlu0 0
      %589 = vperm.xlu0 %588, %v303
      %v590 = vpop.permute.xlu0 %589
      %593 = vset.pattern.permute.xlu0 0
      %594 = vperm.xlu0 %593, %v304
      %v595 = vpop.permute.xlu0 %594
      %598 = vset.pattern.permute.xlu0 0
      %599 = vperm.xlu0 %598, %v305
      %v600 = vpop.permute.xlu0 %599
      %603 = vset.pattern.permute.xlu0 0
      %604 = vperm.xlu0 %603, %v306
      %v605 = vpop.permute.xlu0 %604
      %608 = vset.pattern.permute.xlu0 0
      %609 = vperm.xlu0 %608, %v307
      %v610 = vpop.permute.xlu0 %609
      %613 = vset.pattern.permute.xlu0 0
      %614 = vperm.xlu0 %613, %v308
      %v615 = vpop.permute.xlu0 %614
      %618 = vset.pattern.permute.xlu0 0
      %619 = vperm.xlu0 %618, %v309
      %v620 = vpop.permute.xlu0 %619
      %623 = vset.pattern.permute.xlu0 0
      %624 = vperm.xlu0 %623, %v310
      %v625 = vpop.permute.xlu0 %624
      %628 = vset.pattern.permute.xlu0 0
      %629 = vperm.xlu0 %628, %v311
      %v630 = vpop.permute.xlu0 %629
      %633 = vset.pattern.permute.xlu0 0
      %634 = vperm.xlu0 %633, %v312
      %v635 = vpop.permute.xlu0 %634
      %638 = vset.pattern.permute.xlu0 0
      %639 = vperm.xlu0 %638, %v313
      %v640 = vpop.permute.xlu0 %639
      %643 = vset.pattern.permute.xlu0 0
      %644 = vperm.xlu0 %643, %v314
      %v645 = vpop.permute.xlu0 %644
      %648 = vset.pattern.permute.xlu0 0
      %649 = vperm.xlu0 %648, %v315
      %v650 = vpop.permute.xlu0 %649
      %v780 = vunpack.c.l.b16 %v172
      %v781 = vunpack.c.h.b16 %v172
      %v782 = vunpack.c.l.b16 %v173
      %v783 = vunpack.c.h.b16 %v173
      %v784 = vunpack.c.l.b16 %v174
      %v785 = vunpack.c.h.b16 %v174
      %v786 = vunpack.c.l.b16 %v175
      %v787 = vunpack.c.h.b16 %v175
      %v788 = vunpack.c.l.b16 %v176
      %v789 = vunpack.c.h.b16 %v176
      %v790 = vunpack.c.l.b16 %v177
      %v791 = vunpack.c.h.b16 %v177
      %v792 = vunpack.c.l.b16 %v178
      %v793 = vunpack.c.h.b16 %v178
      %v794 = vunpack.c.l.b16 %v179
      %v795 = vunpack.c.h.b16 %v179
      %v796 = vunpack.c.l.b16 %v180
      %v797 = vunpack.c.h.b16 %v180
      %v798 = vunpack.c.l.b16 %v181
      %v799 = vunpack.c.h.b16 %v181
      %v800 = vunpack.c.l.b16 %v182
      %v801 = vunpack.c.h.b16 %v182
      %v802 = vunpack.c.l.b16 %v183
      %v803 = vunpack.c.h.b16 %v183
      %v804 = vunpack.c.l.b16 %v184
      %v805 = vunpack.c.h.b16 %v184
      %v806 = vunpack.c.l.b16 %v185
      %v807 = vunpack.c.h.b16 %v185
      %v808 = vunpack.c.l.b16 %v186
      %v809 = vunpack.c.h.b16 %v186
      %v810 = vunpack.c.l.b16 %v187
      %v811 = vunpack.c.h.b16 %v187
      %v812 = vunpack.c.l.b16 %v188
      %v813 = vunpack.c.h.b16 %v188
      %v814 = vunpack.c.l.b16 %v189
      %v815 = vunpack.c.h.b16 %v189
      %v816 = vunpack.c.l.b16 %v190
      %v817 = vunpack.c.h.b16 %v190
      %v818 = vunpack.c.l.b16 %v191
      %v819 = vunpack.c.h.b16 %v191
      %v820 = vunpack.c.l.b16 %v192
      %v821 = vunpack.c.h.b16 %v192
      %v822 = vunpack.c.l.b16 %v193
      %v823 = vunpack.c.h.b16 %v193
      %v824 = vunpack.c.l.b16 %v194
      %v825 = vunpack.c.h.b16 %v194
      %v826 = vunpack.c.l.b16 %v195
      %v827 = vunpack.c.h.b16 %v195
      %v828 = vunpack.c.l.b16 %v196
      %v829 = vunpack.c.h.b16 %v196
      %v830 = vunpack.c.l.b16 %v197
      %v831 = vunpack.c.h.b16 %v197
      %v832 = vunpack.c.l.b16 %v198
      %v833 = vunpack.c.h.b16 %v198
      %v834 = vunpack.c.l.b16 %v199
      %v835 = vunpack.c.h.b16 %v199
      %v836 = vunpack.c.l.b16 %v200
      %v837 = vunpack.c.h.b16 %v200
      %v838 = vunpack.c.l.b16 %v201
      %v839 = vunpack.c.h.b16 %v201
      %v840 = vunpack.c.l.b16 %v202
      %v841 = vunpack.c.h.b16 %v202
      %v842 = vunpack.c.l.b16 %v203
      %v843 = vunpack.c.h.b16 %v203
      %v844 = vunpack.c.l.b16 %v204
      %v845 = vunpack.c.h.b16 %v204
      %v846 = vunpack.c.l.b16 %v205
      %v847 = vunpack.c.h.b16 %v205
      %v848 = vunpack.c.l.b16 %v206
      %v849 = vunpack.c.h.b16 %v206
      %v850 = vunpack.c.l.b16 %v207
      %v851 = vunpack.c.h.b16 %v207
      %v852 = vunpack.c.l.b16 %v208
      %v853 = vunpack.c.h.b16 %v208
      %v854 = vunpack.c.l.b16 %v209
      %v855 = vunpack.c.h.b16 %v209
      %v856 = vunpack.c.l.b16 %v210
      %v857 = vunpack.c.h.b16 %v210
      %v858 = vunpack.c.l.b16 %v211
      %v859 = vunpack.c.h.b16 %v211
      %v860 = vunpack.c.l.b16 %v212
      %v861 = vunpack.c.h.b16 %v212
      %v862 = vunpack.c.l.b16 %v213
      %v863 = vunpack.c.h.b16 %v213
      %v864 = vunpack.c.l.b16 %v214
      %v865 = vunpack.c.h.b16 %v214
      %v866 = vunpack.c.l.b16 %v215
      %v867 = vunpack.c.h.b16 %v215
      %v868 = vunpack.c.l.b16 %v216
      %v869 = vunpack.c.h.b16 %v216
      %v870 = vunpack.c.l.b16 %v217
      %v871 = vunpack.c.h.b16 %v217
      %v872 = vunpack.c.l.b16 %v218
      %v873 = vunpack.c.h.b16 %v218
      %v874 = vunpack.c.l.b16 %v219
      %v875 = vunpack.c.h.b16 %v219
      %v876 = vunpack.c.l.b16 %v220
      %v877 = vunpack.c.h.b16 %v220
      %v878 = vunpack.c.l.b16 %v221
      %v879 = vunpack.c.h.b16 %v221
      %v880 = vunpack.c.l.b16 %v222
      %v881 = vunpack.c.h.b16 %v222
      %v882 = vunpack.c.l.b16 %v223
      %v883 = vunpack.c.h.b16 %v223
      %v884 = vunpack.c.l.b16 %v224
      %v885 = vunpack.c.h.b16 %v224
      %v886 = vunpack.c.l.b16 %v225
      %v887 = vunpack.c.h.b16 %v225
      %v888 = vunpack.c.l.b16 %v226
      %v889 = vunpack.c.h.b16 %v226
      %v890 = vunpack.c.l.b16 %v227
      %v891 = vunpack.c.h.b16 %v227
      %v892 = vunpack.c.l.b16 %v228
      %v893 = vunpack.c.h.b16 %v228
      %v894 = vunpack.c.l.b16 %v229
      %v895 = vunpack.c.h.b16 %v229
      %v896 = vunpack.c.l.b16 %v230
      %v897 = vunpack.c.h.b16 %v230
      %v898 = vunpack.c.l.b16 %v231
      %v899 = vunpack.c.h.b16 %v231
      %v900 = vunpack.c.l.b16 %v232
      %v901 = vunpack.c.h.b16 %v232
      %v902 = vunpack.c.l.b16 %v233
      %v903 = vunpack.c.h.b16 %v233
      %v904 = vunpack.c.l.b16 %v234
      %v905 = vunpack.c.h.b16 %v234
      %v906 = vunpack.c.l.b16 %v235
      %v907 = vunpack.c.h.b16 %v235
      %v908 = vunpack.c.l.b16 %v236
      %v909 = vunpack.c.h.b16 %v236
      %v910 = vunpack.c.l.b16 %v237
      %v911 = vunpack.c.h.b16 %v237
      %v912 = vunpack.c.l.b16 %v238
      %v913 = vunpack.c.h.b16 %v238
      %v914 = vunpack.c.l.b16 %v239
      %v915 = vunpack.c.h.b16 %v239
      %v916 = vunpack.c.l.b16 %v240
      %v917 = vunpack.c.h.b16 %v240
      %v918 = vunpack.c.l.b16 %v241
      %v919 = vunpack.c.h.b16 %v241
      %v920 = vunpack.c.l.b16 %v242
      %v921 = vunpack.c.h.b16 %v242
      %v922 = vunpack.c.l.b16 %v243
      %v923 = vunpack.c.h.b16 %v243
      %v924 = vunpack.c.l.b16 %v244
      %v925 = vunpack.c.h.b16 %v244
      %v926 = vunpack.c.l.b16 %v245
      %v927 = vunpack.c.h.b16 %v245
      %v928 = vunpack.c.l.b16 %v246
      %v929 = vunpack.c.h.b16 %v246
      %v930 = vunpack.c.l.b16 %v247
      %v931 = vunpack.c.h.b16 %v247
      %v932 = vunpack.c.l.b16 %v248
      %v933 = vunpack.c.h.b16 %v248
      %v934 = vunpack.c.l.b16 %v249
      %v935 = vunpack.c.h.b16 %v249
      %v936 = vunpack.c.l.b16 %v250
      %v937 = vunpack.c.h.b16 %v250
      %v938 = vunpack.c.l.b16 %v251
      %v939 = vunpack.c.h.b16 %v251
      %v940 = vunpack.c.l.b16 %v252
      %v941 = vunpack.c.h.b16 %v252
      %v942 = vunpack.c.l.b16 %v253
      %v943 = vunpack.c.h.b16 %v253
      %v944 = vunpack.c.l.b16 %v254
      %v945 = vunpack.c.h.b16 %v254
      %v946 = vunpack.c.l.b16 %v255
      %v947 = vunpack.c.h.b16 %v255
      %v948 = vunpack.c.l.b16 %v256
      %v949 = vunpack.c.h.b16 %v256
      %v950 = vunpack.c.l.b16 %v257
      %v951 = vunpack.c.h.b16 %v257
      %v952 = vunpack.c.l.b16 %v258
      %v953 = vunpack.c.h.b16 %v258
      %v954 = vunpack.c.l.b16 %v259
      %v955 = vunpack.c.h.b16 %v259
      %v956 = vunpack.c.l.b16 %v260
      %v957 = vunpack.c.h.b16 %v260
      %v958 = vunpack.c.l.b16 %v261
      %v959 = vunpack.c.h.b16 %v261
      %v960 = vunpack.c.l.b16 %v262
      %v961 = vunpack.c.h.b16 %v262
      %v962 = vunpack.c.l.b16 %v263
      %v963 = vunpack.c.h.b16 %v263
      %v964 = vunpack.c.l.b16 %v264
      %v965 = vunpack.c.h.b16 %v264
      %v966 = vunpack.c.l.b16 %v265
      %v967 = vunpack.c.h.b16 %v265
      %v968 = vunpack.c.l.b16 %v266
      %v969 = vunpack.c.h.b16 %v266
      %v970 = vunpack.c.l.b16 %v267
      %v971 = vunpack.c.h.b16 %v267
      %v972 = vunpack.c.l.b16 %v268
      %v973 = vunpack.c.h.b16 %v268
      %v974 = vunpack.c.l.b16 %v269
      %v975 = vunpack.c.h.b16 %v269
      %v976 = vunpack.c.l.b16 %v270
      %v977 = vunpack.c.h.b16 %v270
      %v978 = vunpack.c.l.b16 %v271
      %v979 = vunpack.c.h.b16 %v271
      %v980 = vunpack.c.l.b16 %v272
      %v981 = vunpack.c.h.b16 %v272
      %v982 = vunpack.c.l.b16 %v273
      %v983 = vunpack.c.h.b16 %v273
      %v984 = vunpack.c.l.b16 %v274
      %v985 = vunpack.c.h.b16 %v274
      %v986 = vunpack.c.l.b16 %v275
      %v987 = vunpack.c.h.b16 %v275
      %v988 = vunpack.c.l.b16 %v276
      %v989 = vunpack.c.h.b16 %v276
      %v990 = vunpack.c.l.b16 %v277
      %v991 = vunpack.c.h.b16 %v277
      %v992 = vunpack.c.l.b16 %v278
      %v993 = vunpack.c.h.b16 %v278
      %v994 = vunpack.c.l.b16 %v279
      %v995 = vunpack.c.h.b16 %v279
      %v996 = vunpack.c.l.b16 %v280
      %v997 = vunpack.c.h.b16 %v280
      %v998 = vunpack.c.l.b16 %v281
      %v999 = vunpack.c.h.b16 %v281
      %v1000 = vunpack.c.l.b16 %v282
      %v1001 = vunpack.c.h.b16 %v282
      %v1002 = vunpack.c.l.b16 %v283
      %v1003 = vunpack.c.h.b16 %v283
      %v1004 = vunpack.c.l.b16 %v284
      %v1005 = vunpack.c.h.b16 %v284
      %v1006 = vunpack.c.l.b16 %v285
      %v1007 = vunpack.c.h.b16 %v285
      %v1008 = vunpack.c.l.b16 %v286
      %v1009 = vunpack.c.h.b16 %v286
      %v1010 = vunpack.c.l.b16 %v287
      %v1011 = vunpack.c.h.b16 %v287
      %v1012 = vunpack.c.l.b16 %v288
      %v1013 = vunpack.c.h.b16 %v288
      %v1014 = vunpack.c.l.b16 %v289
      %v1015 = vunpack.c.h.b16 %v289
      %v1016 = vunpack.c.l.b16 %v290
      %v1017 = vunpack.c.h.b16 %v290
      %v1018 = vunpack.c.l.b16 %v291
      %v1019 = vunpack.c.h.b16 %v291
      %v1020 = vunpack.c.l.b16 %v292
      %v1021 = vunpack.c.h.b16 %v292
      %v1022 = vunpack.c.l.b16 %v293
      %v1023 = vunpack.c.h.b16 %v293
      %v1024 = vunpack.c.l.b16 %v294
      %v1025 = vunpack.c.h.b16 %v294
      %v1026 = vunpack.c.l.b16 %v295
      %v1027 = vunpack.c.h.b16 %v295
      %v1028 = vunpack.c.l.b16 %v296
      %v1029 = vunpack.c.h.b16 %v296
      %v1030 = vunpack.c.l.b16 %v297
      %v1031 = vunpack.c.h.b16 %v297
      %v1032 = vunpack.c.l.b16 %v298
      %v1033 = vunpack.c.h.b16 %v298
      %v1034 = vunpack.c.l.b16 %v299
      %v1035 = vunpack.c.h.b16 %v299
      %v1036 = vpack.c.b16 %v796, %v780
      %v1037 = vpack.c.b16 %v797, %v781
      %v1038 = vpack.c.b16 %v798, %v782
      %v1039 = vpack.c.b16 %v799, %v783
      %v1040 = vpack.c.b16 %v800, %v784
      %v1041 = vpack.c.b16 %v801, %v785
      %v1042 = vpack.c.b16 %v802, %v786
      %v1043 = vpack.c.b16 %v803, %v787
      %v1044 = vpack.c.b16 %v804, %v788
      %v1045 = vpack.c.b16 %v805, %v789
      %v1046 = vpack.c.b16 %v806, %v790
      %v1047 = vpack.c.b16 %v807, %v791
      %v1048 = vpack.c.b16 %v808, %v792
      %v1049 = vpack.c.b16 %v809, %v793
      %v1050 = vpack.c.b16 %v810, %v794
      %v1051 = vpack.c.b16 %v811, %v795
      %v1052 = vpack.c.b16 %v828, %v812
      %v1053 = vpack.c.b16 %v829, %v813
      %v1054 = vpack.c.b16 %v830, %v814
      %v1055 = vpack.c.b16 %v831, %v815
      %v1056 = vpack.c.b16 %v832, %v816
      %v1057 = vpack.c.b16 %v833, %v817
      %v1058 = vpack.c.b16 %v834, %v818
      %v1059 = vpack.c.b16 %v835, %v819
      %v1060 = vpack.c.b16 %v836, %v820
      %v1061 = vpack.c.b16 %v837, %v821
      %v1062 = vpack.c.b16 %v838, %v822
      %v1063 = vpack.c.b16 %v839, %v823
      %v1064 = vpack.c.b16 %v840, %v824
      %v1065 = vpack.c.b16 %v841, %v825
      %v1066 = vpack.c.b16 %v842, %v826
      %v1067 = vpack.c.b16 %v843, %v827
      %v1068 = vpack.c.b16 %v860, %v844
      %v1069 = vpack.c.b16 %v861, %v845
      %v1070 = vpack.c.b16 %v862, %v846
      %v1071 = vpack.c.b16 %v863, %v847
      %v1072 = vpack.c.b16 %v864, %v848
      %v1073 = vpack.c.b16 %v865, %v849
      %v1074 = vpack.c.b16 %v866, %v850
      %v1075 = vpack.c.b16 %v867, %v851
      %v1076 = vpack.c.b16 %v868, %v852
      %v1077 = vpack.c.b16 %v869, %v853
      %v1078 = vpack.c.b16 %v870, %v854
      %v1079 = vpack.c.b16 %v871, %v855
      %v1080 = vpack.c.b16 %v872, %v856
      %v1081 = vpack.c.b16 %v873, %v857
      %v1082 = vpack.c.b16 %v874, %v858
      %v1083 = vpack.c.b16 %v875, %v859
      %v1084 = vpack.c.b16 %v892, %v876
      %v1085 = vpack.c.b16 %v893, %v877
      %v1086 = vpack.c.b16 %v894, %v878
      %v1087 = vpack.c.b16 %v895, %v879
      %v1088 = vpack.c.b16 %v896, %v880
      %v1089 = vpack.c.b16 %v897, %v881
      %v1090 = vpack.c.b16 %v898, %v882
      %v1091 = vpack.c.b16 %v899, %v883
      %v1092 = vpack.c.b16 %v900, %v884
      %v1093 = vpack.c.b16 %v901, %v885
      %v1094 = vpack.c.b16 %v902, %v886
      %v1095 = vpack.c.b16 %v903, %v887
      %v1096 = vpack.c.b16 %v904, %v888
      %v1097 = vpack.c.b16 %v905, %v889
      %v1098 = vpack.c.b16 %v906, %v890
      %v1099 = vpack.c.b16 %v907, %v891
      %v1100 = vpack.c.b16 %v924, %v908
      %v1101 = vpack.c.b16 %v925, %v909
      %v1102 = vpack.c.b16 %v926, %v910
      %v1103 = vpack.c.b16 %v927, %v911
      %v1104 = vpack.c.b16 %v928, %v912
      %v1105 = vpack.c.b16 %v929, %v913
      %v1106 = vpack.c.b16 %v930, %v914
      %v1107 = vpack.c.b16 %v931, %v915
      %v1108 = vpack.c.b16 %v932, %v916
      %v1109 = vpack.c.b16 %v933, %v917
      %v1110 = vpack.c.b16 %v934, %v918
      %v1111 = vpack.c.b16 %v935, %v919
      %v1112 = vpack.c.b16 %v936, %v920
      %v1113 = vpack.c.b16 %v937, %v921
      %v1114 = vpack.c.b16 %v938, %v922
      %v1115 = vpack.c.b16 %v939, %v923
      %v1116 = vpack.c.b16 %v956, %v940
      %v1117 = vpack.c.b16 %v957, %v941
      %v1118 = vpack.c.b16 %v958, %v942
      %v1119 = vpack.c.b16 %v959, %v943
      %v1120 = vpack.c.b16 %v960, %v944
      %v1121 = vpack.c.b16 %v961, %v945
      %v1122 = vpack.c.b16 %v962, %v946
      %v1123 = vpack.c.b16 %v963, %v947
      %v1124 = vpack.c.b16 %v964, %v948
      %v1125 = vpack.c.b16 %v965, %v949
      %v1126 = vpack.c.b16 %v966, %v950
      %v1127 = vpack.c.b16 %v967, %v951
      %v1128 = vpack.c.b16 %v968, %v952
      %v1129 = vpack.c.b16 %v969, %v953
      %v1130 = vpack.c.b16 %v970, %v954
      %v1131 = vpack.c.b16 %v971, %v955
      %v1132 = vpack.c.b16 %v988, %v972
      %v1133 = vpack.c.b16 %v989, %v973
      %v1134 = vpack.c.b16 %v990, %v974
      %v1135 = vpack.c.b16 %v991, %v975
      %v1136 = vpack.c.b16 %v992, %v976
      %v1137 = vpack.c.b16 %v993, %v977
      %v1138 = vpack.c.b16 %v994, %v978
      %v1139 = vpack.c.b16 %v995, %v979
      %v1140 = vpack.c.b16 %v996, %v980
      %v1141 = vpack.c.b16 %v997, %v981
      %v1142 = vpack.c.b16 %v998, %v982
      %v1143 = vpack.c.b16 %v999, %v983
      %v1144 = vpack.c.b16 %v1000, %v984
      %v1145 = vpack.c.b16 %v1001, %v985
      %v1146 = vpack.c.b16 %v1002, %v986
      %v1147 = vpack.c.b16 %v1003, %v987
      %v1148 = vpack.c.b16 %v1020, %v1004
      %v1149 = vpack.c.b16 %v1021, %v1005
      %v1150 = vpack.c.b16 %v1022, %v1006
      %v1151 = vpack.c.b16 %v1023, %v1007
      %v1152 = vpack.c.b16 %v1024, %v1008
      %v1153 = vpack.c.b16 %v1025, %v1009
      %v1154 = vpack.c.b16 %v1026, %v1010
      %v1155 = vpack.c.b16 %v1027, %v1011
      %v1156 = vpack.c.b16 %v1028, %v1012
      %v1157 = vpack.c.b16 %v1029, %v1013
      %v1158 = vpack.c.b16 %v1030, %v1014
      %v1159 = vpack.c.b16 %v1031, %v1015
      %v1160 = vpack.c.b16 %v1032, %v1016
      %v1161 = vpack.c.b16 %v1033, %v1017
      %v1162 = vpack.c.b16 %v1034, %v1018
      %v1163 = vpack.c.b16 %v1035, %v1019
      %v1548 = vunpack.c.l.b16 %v316
      %v1549 = vunpack.c.l.b16 %v317
      %v1550 = vunpack.c.l.b16 %v318
      %v1551 = vunpack.c.l.b16 %v319
      %v1552 = vunpack.c.l.b16 %v320
      %v1553 = vunpack.c.l.b16 %v321
      %v1554 = vunpack.c.l.b16 %v322
      %v1555 = vunpack.c.l.b16 %v323
      %v1556 = vunpack.c.l.b16 %v324
      %v1557 = vunpack.c.l.b16 %v325
      %v1558 = vunpack.c.l.b16 %v326
      %v1559 = vunpack.c.l.b16 %v327
      %v1560 = vunpack.c.l.b16 %v328
      %v1561 = vunpack.c.l.b16 %v329
      %v1562 = vunpack.c.l.b16 %v330
      %v1563 = vunpack.c.l.b16 %v331
      %v1564 = vunpack.c.l.b16 %v332
      %v1565 = vunpack.c.l.b16 %v333
      %v1566 = vunpack.c.l.b16 %v334
      %v1567 = vunpack.c.l.b16 %v335
      %v1568 = vunpack.c.l.b16 %v336
      %v1569 = vunpack.c.l.b16 %v337
      %v1570 = vunpack.c.l.b16 %v338
      %v1571 = vunpack.c.l.b16 %v339
      %v1572 = vunpack.c.l.b16 %v340
      %v1573 = vunpack.c.l.b16 %v341
      %v1574 = vunpack.c.l.b16 %v342
      %v1575 = vunpack.c.l.b16 %v343
      %v1576 = vunpack.c.l.b16 %v344
      %v1577 = vunpack.c.l.b16 %v345
      %v1578 = vunpack.c.l.b16 %v346
      %v1579 = vunpack.c.l.b16 %v347
      %v1580 = vunpack.c.l.b16 %v348
      %v1581 = vunpack.c.l.b16 %v349
      %v1582 = vunpack.c.l.b16 %v350
      %v1583 = vunpack.c.l.b16 %v351
      %v1584 = vunpack.c.l.b16 %v352
      %v1585 = vunpack.c.l.b16 %v353
      %v1586 = vunpack.c.l.b16 %v354
      %v1587 = vunpack.c.l.b16 %v355
      %v1588 = vunpack.c.l.b16 %v356
      %v1589 = vunpack.c.l.b16 %v357
      %v1590 = vunpack.c.l.b16 %v358
      %v1591 = vunpack.c.l.b16 %v359
      %v1592 = vunpack.c.l.b16 %v360
      %v1593 = vunpack.c.l.b16 %v361
      %v1594 = vunpack.c.l.b16 %v362
      %v1595 = vunpack.c.l.b16 %v363
      %v1596 = vunpack.c.l.b16 %v364
      %v1597 = vunpack.c.l.b16 %v365
      %v1598 = vunpack.c.l.b16 %v366
      %v1599 = vunpack.c.l.b16 %v367
      %v1600 = vunpack.c.l.b16 %v368
      %v1601 = vunpack.c.l.b16 %v369
      %v1602 = vunpack.c.l.b16 %v370
      %v1603 = vunpack.c.l.b16 %v371
      %v1604 = vunpack.c.l.b16 %v372
      %v1605 = vunpack.c.l.b16 %v373
      %v1606 = vunpack.c.l.b16 %v374
      %v1607 = vunpack.c.l.b16 %v375
      %v1608 = vunpack.c.l.b16 %v376
      %v1609 = vunpack.c.l.b16 %v377
      %v1610 = vunpack.c.l.b16 %v378
      %v1611 = vunpack.c.l.b16 %v379
      %v1612 = vunpack.c.l.b16 %v380
      %v1613 = vunpack.c.l.b16 %v381
      %v1614 = vunpack.c.l.b16 %v382
      %v1615 = vunpack.c.l.b16 %v383
      %v1616 = vunpack.c.l.b16 %v384
      %v1617 = vunpack.c.l.b16 %v385
      %v1618 = vunpack.c.l.b16 %v386
      %v1619 = vunpack.c.l.b16 %v387
      %v1620 = vunpack.c.l.b16 %v388
      %v1621 = vunpack.c.l.b16 %v389
      %v1622 = vunpack.c.l.b16 %v390
      %v1623 = vunpack.c.l.b16 %v391
      %v1624 = vunpack.c.l.b16 %v392
      %v1625 = vunpack.c.l.b16 %v393
      %v1626 = vunpack.c.l.b16 %v394
      %v1627 = vunpack.c.l.b16 %v395
      %v1628 = vunpack.c.l.b16 %v396
      %v1629 = vunpack.c.l.b16 %v397
      %v1630 = vunpack.c.l.b16 %v398
      %v1631 = vunpack.c.l.b16 %v399
      %v1632 = vunpack.c.l.b16 %v400
      %v1633 = vunpack.c.l.b16 %v401
      %v1634 = vunpack.c.l.b16 %v402
      %v1635 = vunpack.c.l.b16 %v403
      %v1636 = vunpack.c.l.b16 %v404
      %v1637 = vunpack.c.l.b16 %v405
      %v1638 = vunpack.c.l.b16 %v406
      %v1639 = vunpack.c.l.b16 %v407
      %v1640 = vunpack.c.l.b16 %v408
      %v1641 = vunpack.c.l.b16 %v409
      %v1642 = vunpack.c.l.b16 %v410
      %v1643 = vunpack.c.l.b16 %v411
      %v1644 = vunpack.c.l.b16 %v412
      %v1645 = vunpack.c.l.b16 %v413
      %v1646 = vunpack.c.l.b16 %v414
      %v1647 = vunpack.c.l.b16 %v415
      %v1648 = vunpack.c.l.b16 %v416
      %v1649 = vunpack.c.l.b16 %v417
      %v1650 = vunpack.c.l.b16 %v418
      %v1651 = vunpack.c.l.b16 %v419
      %v1652 = vunpack.c.l.b16 %v420
      %v1653 = vunpack.c.l.b16 %v421
      %v1654 = vunpack.c.l.b16 %v422
      %v1655 = vunpack.c.l.b16 %v423
      %v1656 = vunpack.c.l.b16 %v424
      %v1657 = vunpack.c.l.b16 %v425
      %v1658 = vunpack.c.l.b16 %v426
      %v1659 = vunpack.c.l.b16 %v427
      %v1660 = vunpack.c.l.b16 %v428
      %v1661 = vunpack.c.l.b16 %v429
      %v1662 = vunpack.c.l.b16 %v430
      %v1663 = vunpack.c.l.b16 %v431
      %v1664 = vunpack.c.l.b16 %v432
      %v1665 = vunpack.c.l.b16 %v433
      %v1666 = vunpack.c.l.b16 %v434
      %v1667 = vunpack.c.l.b16 %v435
      %v1668 = vunpack.c.l.b16 %v436
      %v1669 = vunpack.c.l.b16 %v437
      %v1670 = vunpack.c.l.b16 %v438
      %v1671 = vunpack.c.l.b16 %v439
      %v1672 = vunpack.c.l.b16 %v440
      %v1673 = vunpack.c.l.b16 %v441
      %v1674 = vunpack.c.l.b16 %v442
      %v1675 = vunpack.c.l.b16 %v443
      %v1676 = vunpack.c.l.b16 %v444
      %v1677 = vunpack.c.l.b16 %v445
      %v1678 = vunpack.c.l.b16 %v446
      %v1679 = vunpack.c.l.b16 %v447
      %v1680 = vunpack.c.l.b16 %v448
      %v1681 = vunpack.c.l.b16 %v449
      %v1682 = vunpack.c.l.b16 %v450
      %v1683 = vunpack.c.l.b16 %v451
      %v1684 = vunpack.c.l.b16 %v452
      %v1685 = vunpack.c.l.b16 %v453
      %v1686 = vunpack.c.l.b16 %v454
      %v1687 = vunpack.c.l.b16 %v455
      %v1688 = vunpack.c.l.b16 %v456
      %v1689 = vunpack.c.l.b16 %v457
      %v1690 = vunpack.c.l.b16 %v458
      %v1691 = vunpack.c.l.b16 %v459
      %v1692 = vunpack.c.l.b16 %v460
      %v1693 = vunpack.c.l.b16 %v461
      %v1694 = vunpack.c.l.b16 %v462
      %v1695 = vunpack.c.l.b16 %v463
      %v1696 = vunpack.c.l.b16 %v464
      %v1697 = vunpack.c.l.b16 %v465
      %v1698 = vunpack.c.l.b16 %v466
      %v1699 = vunpack.c.l.b16 %v467
      %v1700 = vunpack.c.l.b16 %v468
      %v1701 = vunpack.c.l.b16 %v469
      %v1702 = vunpack.c.l.b16 %v470
      %v1703 = vunpack.c.l.b16 %v471
      %v1704 = vunpack.c.l.b16 %v472
      %v1705 = vunpack.c.l.b16 %v473
      %v1706 = vunpack.c.l.b16 %v474
      %v1707 = vunpack.c.l.b16 %v475
      %v1708 = vunpack.c.l.b16 %v476
      %v1709 = vunpack.c.l.b16 %v477
      %v1710 = vunpack.c.l.b16 %v478
      %v1711 = vunpack.c.l.b16 %v479
      %v1712 = vunpack.c.l.b16 %v480
      %v1713 = vunpack.c.l.b16 %v481
      %v1714 = vunpack.c.l.b16 %v482
      %v1715 = vunpack.c.l.b16 %v483
      %v1716 = vunpack.c.l.b16 %v484
      %v1717 = vunpack.c.l.b16 %v485
      %v1718 = vunpack.c.l.b16 %v486
      %v1719 = vunpack.c.l.b16 %v487
      %v1720 = vunpack.c.l.b16 %v488
      %v1721 = vunpack.c.l.b16 %v489
      %v1722 = vunpack.c.l.b16 %v490
      %v1723 = vunpack.c.l.b16 %v491
      %v1724 = vunpack.c.l.b16 %v492
      %v1725 = vunpack.c.l.b16 %v493
      %v1726 = vunpack.c.l.b16 %v494
      %v1727 = vunpack.c.l.b16 %v495
      %v1728 = vunpack.c.l.b16 %v496
      %v1729 = vunpack.c.l.b16 %v497
      %v1730 = vunpack.c.l.b16 %v498
      %v1731 = vunpack.c.l.b16 %v499
      %v1732 = vunpack.c.l.b16 %v500
      %v1733 = vunpack.c.l.b16 %v501
      %v1734 = vunpack.c.l.b16 %v502
      %v1735 = vunpack.c.l.b16 %v503
      %v1736 = vunpack.c.l.b16 %v504
      %v1737 = vunpack.c.l.b16 %v505
      %v1738 = vunpack.c.l.b16 %v506
      %v1739 = vunpack.c.l.b16 %v507
      %v1740 = vunpack.c.l.b16 %v508
      %v1741 = vunpack.c.l.b16 %v509
      %v1742 = vunpack.c.l.b16 %v510
      %v1743 = vunpack.c.l.b16 %v511
      %v1744 = vunpack.c.l.b16 %v512
      %v1745 = vunpack.c.l.b16 %v513
      %v1746 = vunpack.c.l.b16 %v514
      %v1747 = vunpack.c.l.b16 %v515
      %v1748 = vunpack.c.l.b16 %v516
      %v1749 = vunpack.c.l.b16 %v517
      %v1750 = vunpack.c.l.b16 %v518
      %v1751 = vunpack.c.l.b16 %v519
      %v1752 = vunpack.c.l.b16 %v520
      %v1753 = vunpack.c.l.b16 %v521
      %v1754 = vunpack.c.l.b16 %v522
      %v1755 = vunpack.c.l.b16 %v523
      %v1756 = vunpack.c.l.b16 %v524
      %v1757 = vunpack.c.l.b16 %v525
      %v1758 = vunpack.c.l.b16 %v526
      %v1759 = vunpack.c.l.b16 %v527
      %v1760 = vunpack.c.l.b16 %v528
      %v1761 = vunpack.c.l.b16 %v529
      %v1762 = vunpack.c.l.b16 %v530
      %v1763 = vunpack.c.l.b16 %v531
      %v1764 = vunpack.c.l.b16 %v532
      %v1765 = vunpack.c.l.b16 %v533
      %v1766 = vunpack.c.l.b16 %v534
      %v1767 = vunpack.c.l.b16 %v535
      %v1768 = vunpack.c.l.b16 %v536
      %v1769 = vunpack.c.l.b16 %v537
      %v1770 = vunpack.c.l.b16 %v538
      %v1771 = vunpack.c.l.b16 %v539
      %v1772 = vunpack.c.l.b16 %v540
      %v1773 = vunpack.c.l.b16 %v541
      %v1774 = vunpack.c.l.b16 %v542
      %v1775 = vunpack.c.l.b16 %v543
      %v1776 = vunpack.c.l.b16 %v544
      %v1777 = vunpack.c.l.b16 %v545
      %v1778 = vunpack.c.l.b16 %v546
      %v1779 = vunpack.c.l.b16 %v547
      %v1780 = vunpack.c.l.b16 %v548
      %v1781 = vunpack.c.l.b16 %v549
      %v1782 = vunpack.c.l.b16 %v550
      %v1783 = vunpack.c.l.b16 %v551
      %v1784 = vunpack.c.l.b16 %v552
      %v1785 = vunpack.c.l.b16 %v553
      %v1786 = vunpack.c.l.b16 %v554
      %v1787 = vunpack.c.l.b16 %v555
      %v1788 = vunpack.c.l.b16 %v556
      %v1789 = vunpack.c.l.b16 %v557
      %v1790 = vunpack.c.l.b16 %v558
      %v1791 = vunpack.c.l.b16 %v559
      %v1792 = vunpack.c.l.b16 %v560
      %v1793 = vunpack.c.l.b16 %v561
      %v1794 = vunpack.c.l.b16 %v562
      %v1795 = vunpack.c.l.b16 %v563
      %v1796 = vunpack.c.l.b16 %v564
      %v1797 = vunpack.c.l.b16 %v565
      %v1798 = vunpack.c.l.b16 %v566
      %v1799 = vunpack.c.l.b16 %v567
      %v1800 = vunpack.c.l.b16 %v568
      %v1801 = vunpack.c.l.b16 %v569
      %v1802 = vunpack.c.l.b16 %v570
      %v1803 = vunpack.c.l.b16 %v571
      %v1804 = vpack.c.b16 %v1549, %v1548
      %v1805 = vpack.c.b16 %v1551, %v1550
      %v1806 = vpack.c.b16 %v1553, %v1552
      %v1807 = vpack.c.b16 %v1555, %v1554
      %v1808 = vpack.c.b16 %v1557, %v1556
      %v1809 = vpack.c.b16 %v1559, %v1558
      %v1810 = vpack.c.b16 %v1561, %v1560
      %v1811 = vpack.c.b16 %v1563, %v1562
      %v1812 = vpack.c.b16 %v1565, %v1564
      %v1813 = vpack.c.b16 %v1567, %v1566
      %v1814 = vpack.c.b16 %v1569, %v1568
      %v1815 = vpack.c.b16 %v1571, %v1570
      %v1816 = vpack.c.b16 %v1573, %v1572
      %v1817 = vpack.c.b16 %v1575, %v1574
      %v1818 = vpack.c.b16 %v1577, %v1576
      %v1819 = vpack.c.b16 %v1579, %v1578
      %v1820 = vpack.c.b16 %v1581, %v1580
      %v1821 = vpack.c.b16 %v1583, %v1582
      %v1822 = vpack.c.b16 %v1585, %v1584
      %v1823 = vpack.c.b16 %v1587, %v1586
      %v1824 = vpack.c.b16 %v1589, %v1588
      %v1825 = vpack.c.b16 %v1591, %v1590
      %v1826 = vpack.c.b16 %v1593, %v1592
      %v1827 = vpack.c.b16 %v1595, %v1594
      %v1828 = vpack.c.b16 %v1597, %v1596
      %v1829 = vpack.c.b16 %v1599, %v1598
      %v1830 = vpack.c.b16 %v1601, %v1600
      %v1831 = vpack.c.b16 %v1603, %v1602
      %v1832 = vpack.c.b16 %v1605, %v1604
      %v1833 = vpack.c.b16 %v1607, %v1606
      %v1834 = vpack.c.b16 %v1609, %v1608
      %v1835 = vpack.c.b16 %v1611, %v1610
      %v1836 = vpack.c.b16 %v1613, %v1612
      %v1837 = vpack.c.b16 %v1615, %v1614
      %v1838 = vpack.c.b16 %v1617, %v1616
      %v1839 = vpack.c.b16 %v1619, %v1618
      %v1840 = vpack.c.b16 %v1621, %v1620
      %v1841 = vpack.c.b16 %v1623, %v1622
      %v1842 = vpack.c.b16 %v1625, %v1624
      %v1843 = vpack.c.b16 %v1627, %v1626
      %v1844 = vpack.c.b16 %v1629, %v1628
      %v1845 = vpack.c.b16 %v1631, %v1630
      %v1846 = vpack.c.b16 %v1633, %v1632
      %v1847 = vpack.c.b16 %v1635, %v1634
      %v1848 = vpack.c.b16 %v1637, %v1636
      %v1849 = vpack.c.b16 %v1639, %v1638
      %v1850 = vpack.c.b16 %v1641, %v1640
      %v1851 = vpack.c.b16 %v1643, %v1642
      %v1852 = vpack.c.b16 %v1645, %v1644
      %v1853 = vpack.c.b16 %v1647, %v1646
      %v1854 = vpack.c.b16 %v1649, %v1648
      %v1855 = vpack.c.b16 %v1651, %v1650
      %v1856 = vpack.c.b16 %v1653, %v1652
      %v1857 = vpack.c.b16 %v1655, %v1654
      %v1858 = vpack.c.b16 %v1657, %v1656
      %v1859 = vpack.c.b16 %v1659, %v1658
      %v1860 = vpack.c.b16 %v1661, %v1660
      %v1861 = vpack.c.b16 %v1663, %v1662
      %v1862 = vpack.c.b16 %v1665, %v1664
      %v1863 = vpack.c.b16 %v1667, %v1666
      %v1864 = vpack.c.b16 %v1669, %v1668
      %v1865 = vpack.c.b16 %v1671, %v1670
      %v1866 = vpack.c.b16 %v1673, %v1672
      %v1867 = vpack.c.b16 %v1675, %v1674
      %v1868 = vpack.c.b16 %v1677, %v1676
      %v1869 = vpack.c.b16 %v1679, %v1678
      %v1870 = vpack.c.b16 %v1681, %v1680
      %v1871 = vpack.c.b16 %v1683, %v1682
      %v1872 = vpack.c.b16 %v1685, %v1684
      %v1873 = vpack.c.b16 %v1687, %v1686
      %v1874 = vpack.c.b16 %v1689, %v1688
      %v1875 = vpack.c.b16 %v1691, %v1690
      %v1876 = vpack.c.b16 %v1693, %v1692
      %v1877 = vpack.c.b16 %v1695, %v1694
      %v1878 = vpack.c.b16 %v1697, %v1696
      %v1879 = vpack.c.b16 %v1699, %v1698
      %v1880 = vpack.c.b16 %v1701, %v1700
      %v1881 = vpack.c.b16 %v1703, %v1702
      %v1882 = vpack.c.b16 %v1705, %v1704
      %v1883 = vpack.c.b16 %v1707, %v1706
      %v1884 = vpack.c.b16 %v1709, %v1708
      %v1885 = vpack.c.b16 %v1711, %v1710
      %v1886 = vpack.c.b16 %v1713, %v1712
      %v1887 = vpack.c.b16 %v1715, %v1714
      %v1888 = vpack.c.b16 %v1717, %v1716
      %v1889 = vpack.c.b16 %v1719, %v1718
      %v1890 = vpack.c.b16 %v1721, %v1720
      %v1891 = vpack.c.b16 %v1723, %v1722
      %v1892 = vpack.c.b16 %v1725, %v1724
      %v1893 = vpack.c.b16 %v1727, %v1726
      %v1894 = vpack.c.b16 %v1729, %v1728
      %v1895 = vpack.c.b16 %v1731, %v1730
      %v1896 = vpack.c.b16 %v1733, %v1732
      %v1897 = vpack.c.b16 %v1735, %v1734
      %v1898 = vpack.c.b16 %v1737, %v1736
      %v1899 = vpack.c.b16 %v1739, %v1738
      %v1900 = vpack.c.b16 %v1741, %v1740
      %v1901 = vpack.c.b16 %v1743, %v1742
      %v1902 = vpack.c.b16 %v1745, %v1744
      %v1903 = vpack.c.b16 %v1747, %v1746
      %v1904 = vpack.c.b16 %v1749, %v1748
      %v1905 = vpack.c.b16 %v1751, %v1750
      %v1906 = vpack.c.b16 %v1753, %v1752
      %v1907 = vpack.c.b16 %v1755, %v1754
      %v1908 = vpack.c.b16 %v1757, %v1756
      %v1909 = vpack.c.b16 %v1759, %v1758
      %v1910 = vpack.c.b16 %v1761, %v1760
      %v1911 = vpack.c.b16 %v1763, %v1762
      %v1912 = vpack.c.b16 %v1765, %v1764
      %v1913 = vpack.c.b16 %v1767, %v1766
      %v1914 = vpack.c.b16 %v1769, %v1768
      %v1915 = vpack.c.b16 %v1771, %v1770
      %v1916 = vpack.c.b16 %v1773, %v1772
      %v1917 = vpack.c.b16 %v1775, %v1774
      %v1918 = vpack.c.b16 %v1777, %v1776
      %v1919 = vpack.c.b16 %v1779, %v1778
      %v1920 = vpack.c.b16 %v1781, %v1780
      %v1921 = vpack.c.b16 %v1783, %v1782
      %v1922 = vpack.c.b16 %v1785, %v1784
      %v1923 = vpack.c.b16 %v1787, %v1786
      %v1924 = vpack.c.b16 %v1789, %v1788
      %v1925 = vpack.c.b16 %v1791, %v1790
      %v1926 = vpack.c.b16 %v1793, %v1792
      %v1927 = vpack.c.b16 %v1795, %v1794
      %v1928 = vpack.c.b16 %v1797, %v1796
      %v1929 = vpack.c.b16 %v1799, %v1798
      %v1930 = vpack.c.b16 %v1801, %v1800
      %v1931 = vpack.c.b16 %v1803, %v1802
      %2060 = vmatprep.subr.bf16.mxu0 0
      %2061 = vmatpush1.bf16.msra.mxu0 %v1804
      %2062 = vmatprep.subr.bf16.mxu0 0
      %2063 = vmatpush1.bf16.msra.mxu0 %v1805
      %2064 = vmatprep.subr.bf16.mxu0 0
      %2065 = vmatpush1.bf16.msra.mxu0 %v1806
      %2066 = vmatprep.subr.bf16.mxu0 0
      %2067 = vmatpush1.bf16.msra.mxu0 %v1807
      %2068 = vmatprep.subr.bf16.mxu0 0
      %2069 = vmatpush1.bf16.msra.mxu0 %v1808
      %2070 = vmatprep.subr.bf16.mxu0 0
      %2071 = vmatpush1.bf16.msra.mxu0 %v1809
      %2072 = vmatprep.subr.bf16.mxu0 0
      %2073 = vmatpush1.bf16.msra.mxu0 %v1810
      %2074 = vmatprep.subr.bf16.mxu0 0
      %2075 = vmatpush1.bf16.msra.mxu0 %v1811
      %2076 = vmatprep.subr.bf16.mxu0 0
      %2077 = vmatpush1.bf16.msra.mxu0 %v1812
      %2078 = vmatprep.subr.bf16.mxu0 0
      %2079 = vmatpush1.bf16.msra.mxu0 %v1813
      %2080 = vmatprep.subr.bf16.mxu0 0
      %2081 = vmatpush1.bf16.msra.mxu0 %v1814
      %2082 = vmatprep.subr.bf16.mxu0 0
      %2083 = vmatpush1.bf16.msra.mxu0 %v1815
      %2084 = vmatprep.subr.bf16.mxu0 0
      %2085 = vmatpush1.bf16.msra.mxu0 %v1816
      %2086 = vmatprep.subr.bf16.mxu0 0
      %2087 = vmatpush1.bf16.msra.mxu0 %v1817
      %2088 = vmatprep.subr.bf16.mxu0 0
      %2089 = vmatpush1.bf16.msra.mxu0 %v1818
      %2090 = vmatprep.subr.bf16.mxu0 0
      %2091 = vmatpush1.bf16.msra.mxu0 %v1819
      %2092 = vmatprep.mubr.bf16.mxu0 %v1037
      %2093 = vmatmul.mubr.bf16.gmra.mrb[0].mxu0 %v1036
      %v2094 = vpop.f32.mrb[0].mxu0
      %v2095 = vadd.f32 %v575, %v2094
      %v2096 = vpop.f32.mrb[0].mxu0
      %v2097 = vpop.f32.mrb[0].mxu0
      %v2098 = vadd.f32 %v580, %v2097
      %v2099 = vpop.f32.mrb[0].mxu0
      %2100 = vmatprep.mubr.bf16.mxu0 %v1053
      %2101 = vmatmul.mubr.bf16.gmra.mrb[0].mxu0 %v1052
      %v2102 = vpop.f32.mrb[0].mxu0
      %v2103 = vadd.f32 %v585, %v2102
      %v2104 = vpop.f32.mrb[0].mxu0
      %v2105 = vpop.f32.mrb[0].mxu0
      %v2106 = vadd.f32 %v590, %v2105
      %v2107 = vpop.f32.mrb[0].mxu0
      %2108 = vmatprep.mubr.bf16.mxu0 %v1069
      %2109 = vmatmul.mubr.bf16.gmra.mrb[0].mxu0 %v1068
      %v2110 = vpop.f32.mrb[0].mxu0
      %v2111 = vadd.f32 %v595, %v2110
      %v2112 = vpop.f32.mrb[0].mxu0
      %v2113 = vpop.f32.mrb[0].mxu0
      %v2114 = vadd.f32 %v600, %v2113
      %v2115 = vpop.f32.mrb[0].mxu0
      %2116 = vmatprep.mubr.bf16.mxu0 %v1085
      %2117 = vmatmul.mubr.bf16.gmra.mrb[0].mxu0 %v1084
      %v2118 = vpop.f32.mrb[0].mxu0
      %v2119 = vadd.f32 %v605, %v2118
      %v2120 = vpop.f32.mrb[0].mxu0
      %v2121 = vpop.f32.mrb[0].mxu0
      %v2122 = vadd.f32 %v610, %v2121
      %v2123 = vpop.f32.mrb[0].mxu0
      %2124 = vmatprep.mubr.bf16.mxu0 %v1101
      %2125 = vmatmul.mubr.bf16.gmra.mrb[0].mxu0 %v1100
      %v2126 = vpop.f32.mrb[0].mxu0
      %v2127 = vadd.f32 %v615, %v2126
      %v2128 = vpop.f32.mrb[0].mxu0
      %v2129 = vpop.f32.mrb[0].mxu0
      %v2130 = vadd.f32 %v620, %v2129
      %v2131 = vpop.f32.mrb[0].mxu0
      %2132 = vmatprep.mubr.bf16.mxu0 %v1117
      %2133 = vmatmul.mubr.bf16.gmra.mrb[0].mxu0 %v1116
      %v2134 = vpop.f32.mrb[0].mxu0
      %v2135 = vadd.f32 %v625, %v2134
      %v2136 = vpop.f32.mrb[0].mxu0
      %v2137 = vpop.f32.mrb[0].mxu0
      %v2138 = vadd.f32 %v630, %v2137
      %v2139 = vpop.f32.mrb[0].mxu0
      %2140 = vmatprep.mubr.bf16.mxu0 %v1133
      %2141 = vmatmul.mubr.bf16.gmra.mrb[0].mxu0 %v1132
      %v2142 = vpop.f32.mrb[0].mxu0
      %v2143 = vadd.f32 %v635, %v2142
      %v2144 = vpop.f32.mrb[0].mxu0
      %v2145 = vpop.f32.mrb[0].mxu0
      %v2146 = vadd.f32 %v640, %v2145
      %v2147 = vpop.f32.mrb[0].mxu0
      %2148 = vmatprep.mubr.bf16.mxu0 %v1149
      %2149 = vmatmul.mubr.bf16.gmra.mrb[0].mxu0 %v1148
      %v2150 = vpop.f32.mrb[0].mxu0
      %v2151 = vadd.f32 %v645, %v2150
      %v2152 = vpop.f32.mrb[0].mxu0
      %v2153 = vpop.f32.mrb[0].mxu0
      %v2154 = vadd.f32 %v650, %v2153
      %v2155 = vpop.f32.mrb[0].mxu0
      %2156 = vdwg.mxu0
      %2157 = vmatprep.subr.bf16.mxu0 0
      %2158 = vmatpush1.bf16.msra.mxu0 %v1820
      %2159 = vmatprep.subr.bf16.mxu0 0
      %2160 = vmatpush1.bf16.msra.mxu0 %v1821
      %2161 = vmatprep.subr.bf16.mxu0 0
      %2162 = vmatpush1.bf16.msra.mxu0 %v1822
      %2163 = vmatprep.subr.bf16.mxu0 0
      %2164 = vmatpush1.bf16.msra.mxu0 %v1823
      %2165 = vmatprep.subr.bf16.mxu0 0
      %2166 = vmatpush1.bf16.msra.mxu0 %v1824
      %2167 = vmatprep.subr.bf16.mxu0 0
      %2168 = vmatpush1.bf16.msra.mxu0 %v1825
      %2169 = vmatprep.subr.bf16.mxu0 0
      %2170 = vmatpush1.bf16.msra.mxu0 %v1826
      %2171 = vmatprep.subr.bf16.mxu0 0
      %2172 = vmatpush1.bf16.msra.mxu0 %v1827
      %2173 = vmatprep.subr.bf16.mxu0 0
      %2174 = vmatpush1.bf16.msra.mxu0 %v1828
      %2175 = vmatprep.subr.bf16.mxu0 0
      %2176 = vmatpush1.bf16.msra.mxu0 %v1829
      %2177 = vmatprep.subr.bf16.mxu0 0
      %2178 = vmatpush1.bf16.msra.mxu0 %v1830
      %2179 = vmatprep.subr.bf16.mxu0 0
      %2180 = vmatpush1.bf16.msra.mxu0 %v1831
      %2181 = vmatprep.subr.bf16.mxu0 0
      %2182 = vmatpush1.bf16.msra.mxu0 %v1832
      %2183 = vmatprep.subr.bf16.mxu0 0
      %2184 = vmatpush1.bf16.msra.mxu0 %v1833
      %2185 = vmatprep.subr.bf16.mxu0 0
      %2186 = vmatpush1.bf16.msra.mxu0 %v1834
      %2187 = vmatprep.subr.bf16.mxu0 0
      %2188 = vmatpush1.bf16.msra.mxu0 %v1835
      %2189 = vmatprep.mubr.bf16.mxu0 %v1039
      %2190 = vmatmul.mubr.bf16.gmra.mrb[0].mxu0 %v1038
      %v2191 = vpop.f32.mrb[0].mxu0
      %v2192 = vadd.f32 %v2095, %v2191
      %v2193 = vpop.f32.mrb[0].mxu0
      %v2194 = vpop.f32.mrb[0].mxu0
      %v2195 = vadd.f32 %v2098, %v2194
      %v2196 = vpop.f32.mrb[0].mxu0
      %2197 = vmatprep.mubr.bf16.mxu0 %v1055
      %2198 = vmatmul.mubr.bf16.gmra.mrb[0].mxu0 %v1054
      %v2199 = vpop.f32.mrb[0].mxu0
      %v2200 = vadd.f32 %v2103, %v2199
      %v2201 = vpop.f32.mrb[0].mxu0
      %v2202 = vpop.f32.mrb[0].mxu0
      %v2203 = vadd.f32 %v2106, %v2202
      %v2204 = vpop.f32.mrb[0].mxu0
      %2205 = vmatprep.mubr.bf16.mxu0 %v1071
      %2206 = vmatmul.mubr.bf16.gmra.mrb[0].mxu0 %v1070
      %v2207 = vpop.f32.mrb[0].mxu0
      %v2208 = vadd.f32 %v2111, %v2207
      %v2209 = vpop.f32.mrb[0].mxu0
      %v2210 = vpop.f32.mrb[0].mxu0
      %v2211 = vadd.f32 %v2114, %v2210
      %v2212 = vpop.f32.mrb[0].mxu0
      %2213 = vmatprep.mubr.bf16.mxu0 %v1087
      %2214 = vmatmul.mubr.bf16.gmra.mrb[0].mxu0 %v1086
      %v2215 = vpop.f32.mrb[0].mxu0
      %v2216 = vadd.f32 %v2119, %v2215
      %v2217 = vpop.f32.mrb[0].mxu0
      %v2218 = vpop.f32.mrb[0].mxu0
      %v2219 = vadd.f32 %v2122, %v2218
      %v2220 = vpop.f32.mrb[0].mxu0
      %2221 = vmatprep.mubr.bf16.mxu0 %v1103
      %2222 = vmatmul.mubr.bf16.gmra.mrb[0].mxu0 %v1102
      %v2223 = vpop.f32.mrb[0].mxu0
      %v2224 = vadd.f32 %v2127, %v2223
      %v2225 = vpop.f32.mrb[0].mxu0
      %v2226 = vpop.f32.mrb[0].mxu0
      %v2227 = vadd.f32 %v2130, %v2226
      %v2228 = vpop.f32.mrb[0].mxu0
      %2229 = vmatprep.mubr.bf16.mxu0 %v1119
      %2230 = vmatmul.mubr.bf16.gmra.mrb[0].mxu0 %v1118
      %v2231 = vpop.f32.mrb[0].mxu0
      %v2232 = vadd.f32 %v2135, %v2231
      %v2233 = vpop.f32.mrb[0].mxu0
      %v2234 = vpop.f32.mrb[0].mxu0
      %v2235 = vadd.f32 %v2138, %v2234
      %v2236 = vpop.f32.mrb[0].mxu0
      %2237 = vmatprep.mubr.bf16.mxu0 %v1135
      %2238 = vmatmul.mubr.bf16.gmra.mrb[0].mxu0 %v1134
      %v2239 = vpop.f32.mrb[0].mxu0
      %v2240 = vadd.f32 %v2143, %v2239
      %v2241 = vpop.f32.mrb[0].mxu0
      %v2242 = vpop.f32.mrb[0].mxu0
      %v2243 = vadd.f32 %v2146, %v2242
      %v2244 = vpop.f32.mrb[0].mxu0
      %2245 = vmatprep.mubr.bf16.mxu0 %v1151
      %2246 = vmatmul.mubr.bf16.gmra.mrb[0].mxu0 %v1150
      %v2247 = vpop.f32.mrb[0].mxu0
      %v2248 = vadd.f32 %v2151, %v2247
      %v2249 = vpop.f32.mrb[0].mxu0
      %v2250 = vpop.f32.mrb[0].mxu0
      %v2251 = vadd.f32 %v2154, %v2250
      %v2252 = vpop.f32.mrb[0].mxu0
      %2253 = vdwg.mxu0
      %2254 = vmatprep.subr.bf16.mxu0 0
      %2255 = vmatpush1.bf16.msra.mxu0 %v1836
      %2256 = vmatprep.subr.bf16.mxu0 0
      %2257 = vmatpush1.bf16.msra.mxu0 %v1837
      %2258 = vmatprep.subr.bf16.mxu0 0
      %2259 = vmatpush1.bf16.msra.mxu0 %v1838
      %2260 = vmatprep.subr.bf16.mxu0 0
      %2261 = vmatpush1.bf16.msra.mxu0 %v1839
      %2262 = vmatprep.subr.bf16.mxu0 0
      %2263 = vmatpush1.bf16.msra.mxu0 %v1840
      %2264 = vmatprep.subr.bf16.mxu0 0
      %2265 = vmatpush1.bf16.msra.mxu0 %v1841
      %2266 = vmatprep.subr.bf16.mxu0 0
      %2267 = vmatpush1.bf16.msra.mxu0 %v1842
      %2268 = vmatprep.subr.bf16.mxu0 0
      %2269 = vmatpush1.bf16.msra.mxu0 %v1843
      %2270 = vmatprep.subr.bf16.mxu0 0
      %2271 = vmatpush1.bf16.msra.mxu0 %v1844
      %2272 = vmatprep.subr.bf16.mxu0 0
      %2273 = vmatpush1.bf16.msra.mxu0 %v1845
      %2274 = vmatprep.subr.bf16.mxu0 0
      %2275 = vmatpush1.bf16.msra.mxu0 %v1846
      %2276 = vmatprep.subr.bf16.mxu0 0
      %2277 = vmatpush1.bf16.msra.mxu0 %v1847
      %2278 = vmatprep.subr.bf16.mxu0 0
      %2279 = vmatpush1.bf16.msra.mxu0 %v1848
      %2280 = vmatprep.subr.bf16.mxu0 0
      %2281 = vmatpush1.bf16.msra.mxu0 %v1849
      %2282 = vmatprep.subr.bf16.mxu0 0
      %2283 = vmatpush1.bf16.msra.mxu0 %v1850
      %2284 = vmatprep.subr.bf16.mxu0 0
      %2285 = vmatpush1.bf16.msra.mxu0 %v1851
      %2286 = vmatprep.mubr.bf16.mxu0 %v1041
      %2287 = vmatmul.mubr.bf16.gmra.mrb[0].mxu0 %v1040
      %v2288 = vpop.f32.mrb[0].mxu0
      %v2289 = vadd.f32 %v2192, %v2288
      %v2290 = vpop.f32.mrb[0].mxu0
      %v2291 = vpop.f32.mrb[0].mxu0
      %v2292 = vadd.f32 %v2195, %v2291
      %v2293 = vpop.f32.mrb[0].mxu0
      %2294 = vmatprep.mubr.bf16.mxu0 %v1057
      %2295 = vmatmul.mubr.bf16.gmra.mrb[0].mxu0 %v1056
      %v2296 = vpop.f32.mrb[0].mxu0
      %v2297 = vadd.f32 %v2200, %v2296
      %v2298 = vpop.f32.mrb[0].mxu0
      %v2299 = vpop.f32.mrb[0].mxu0
      %v2300 = vadd.f32 %v2203, %v2299
      %v2301 = vpop.f32.mrb[0].mxu0
      %2302 = vmatprep.mubr.bf16.mxu0 %v1073
      %2303 = vmatmul.mubr.bf16.gmra.mrb[0].mxu0 %v1072
      %v2304 = vpop.f32.mrb[0].mxu0
      %v2305 = vadd.f32 %v2208, %v2304
      %v2306 = vpop.f32.mrb[0].mxu0
      %v2307 = vpop.f32.mrb[0].mxu0
      %v2308 = vadd.f32 %v2211, %v2307
      %v2309 = vpop.f32.mrb[0].mxu0
      %2310 = vmatprep.mubr.bf16.mxu0 %v1089
      %2311 = vmatmul.mubr.bf16.gmra.mrb[0].mxu0 %v1088
      %v2312 = vpop.f32.mrb[0].mxu0
      %v2313 = vadd.f32 %v2216, %v2312
      %v2314 = vpop.f32.mrb[0].mxu0
      %v2315 = vpop.f32.mrb[0].mxu0
      %v2316 = vadd.f32 %v2219, %v2315
      %v2317 = vpop.f32.mrb[0].mxu0
      %2318 = vmatprep.mubr.bf16.mxu0 %v1105
      %2319 = vmatmul.mubr.bf16.gmra.mrb[0].mxu0 %v1104
      %v2320 = vpop.f32.mrb[0].mxu0
      %v2321 = vadd.f32 %v2224, %v2320
      %v2322 = vpop.f32.mrb[0].mxu0
      %v2323 = vpop.f32.mrb[0].mxu0
      %v2324 = vadd.f32 %v2227, %v2323
      %v2325 = vpop.f32.mrb[0].mxu0
      %2326 = vmatprep.mubr.bf16.mxu0 %v1121
      %2327 = vmatmul.mubr.bf16.gmra.mrb[0].mxu0 %v1120
      %v2328 = vpop.f32.mrb[0].mxu0
      %v2329 = vadd.f32 %v2232, %v2328
      %v2330 = vpop.f32.mrb[0].mxu0
      %v2331 = vpop.f32.mrb[0].mxu0
      %v2332 = vadd.f32 %v2235, %v2331
      %v2333 = vpop.f32.mrb[0].mxu0
      %2334 = vmatprep.mubr.bf16.mxu0 %v1137
      %2335 = vmatmul.mubr.bf16.gmra.mrb[0].mxu0 %v1136
      %v2336 = vpop.f32.mrb[0].mxu0
      %v2337 = vadd.f32 %v2240, %v2336
      %v2338 = vpop.f32.mrb[0].mxu0
      %v2339 = vpop.f32.mrb[0].mxu0
      %v2340 = vadd.f32 %v2243, %v2339
      %v2341 = vpop.f32.mrb[0].mxu0
      %2342 = vmatprep.mubr.bf16.mxu0 %v1153
      %2343 = vmatmul.mubr.bf16.gmra.mrb[0].mxu0 %v1152
      %v2344 = vpop.f32.mrb[0].mxu0
      %v2345 = vadd.f32 %v2248, %v2344
      %v2346 = vpop.f32.mrb[0].mxu0
      %v2347 = vpop.f32.mrb[0].mxu0
      %v2348 = vadd.f32 %v2251, %v2347
      %v2349 = vpop.f32.mrb[0].mxu0
      %2350 = vdwg.mxu0
      %2351 = vmatprep.subr.bf16.mxu0 0
      %2352 = vmatpush1.bf16.msra.mxu0 %v1852
      %2353 = vmatprep.subr.bf16.mxu0 0
      %2354 = vmatpush1.bf16.msra.mxu0 %v1853
      %2355 = vmatprep.subr.bf16.mxu0 0
      %2356 = vmatpush1.bf16.msra.mxu0 %v1854
      %2357 = vmatprep.subr.bf16.mxu0 0
      %2358 = vmatpush1.bf16.msra.mxu0 %v1855
      %2359 = vmatprep.subr.bf16.mxu0 0
      %2360 = vmatpush1.bf16.msra.mxu0 %v1856
      %2361 = vmatprep.subr.bf16.mxu0 0
      %2362 = vmatpush1.bf16.msra.mxu0 %v1857
      %2363 = vmatprep.subr.bf16.mxu0 0
      %2364 = vmatpush1.bf16.msra.mxu0 %v1858
      %2365 = vmatprep.subr.bf16.mxu0 0
      %2366 = vmatpush1.bf16.msra.mxu0 %v1859
      %2367 = vmatprep.subr.bf16.mxu0 0
      %2368 = vmatpush1.bf16.msra.mxu0 %v1860
      %2369 = vmatprep.subr.bf16.mxu0 0
      %2370 = vmatpush1.bf16.msra.mxu0 %v1861
      %2371 = vmatprep.subr.bf16.mxu0 0
      %2372 = vmatpush1.bf16.msra.mxu0 %v1862
      %2373 = vmatprep.subr.bf16.mxu0 0
      %2374 = vmatpush1.bf16.msra.mxu0 %v1863
      %2375 = vmatprep.subr.bf16.mxu0 0
      %2376 = vmatpush1.bf16.msra.mxu0 %v1864
      %2377 = vmatprep.subr.bf16.mxu0 0
      %2378 = vmatpush1.bf16.msra.mxu0 %v1865
      %2379 = vmatprep.subr.bf16.mxu0 0
      %2380 = vmatpush1.bf16.msra.mxu0 %v1866
      %2381 = vmatprep.subr.bf16.mxu0 0
      %2382 = vmatpush1.bf16.msra.mxu0 %v1867
      %2383 = vmatprep.mubr.bf16.mxu0 %v1043
      %2384 = vmatmul.mubr.bf16.gmra.mrb[0].mxu0 %v1042
      %v2385 = vpop.f32.mrb[0].mxu0
      %v2386 = vadd.f32 %v2289, %v2385
      %v2387 = vpop.f32.mrb[0].mxu0
      %v2388 = vpop.f32.mrb[0].mxu0
      %v2389 = vadd.f32 %v2292, %v2388
      %v2390 = vpop.f32.mrb[0].mxu0
      %2391 = vmatprep.mubr.bf16.mxu0 %v1059
      %2392 = vmatmul.mubr.bf16.gmra.mrb[0].mxu0 %v1058
      %v2393 = vpop.f32.mrb[0].mxu0
      %v2394 = vadd.f32 %v2297, %v2393
      %v2395 = vpop.f32.mrb[0].mxu0
      %v2396 = vpop.f32.mrb[0].mxu0
      %v2397 = vadd.f32 %v2300, %v2396
      %v2398 = vpop.f32.mrb[0].mxu0
      %2399 = vmatprep.mubr.bf16.mxu0 %v1075
      %2400 = vmatmul.mubr.bf16.gmra.mrb[0].mxu0 %v1074
      %v2401 = vpop.f32.mrb[0].mxu0
      %v2402 = vadd.f32 %v2305, %v2401
      %v2403 = vpop.f32.mrb[0].mxu0
      %v2404 = vpop.f32.mrb[0].mxu0
      %v2405 = vadd.f32 %v2308, %v2404
      %v2406 = vpop.f32.mrb[0].mxu0
      %2407 = vmatprep.mubr.bf16.mxu0 %v1091
      %2408 = vmatmul.mubr.bf16.gmra.mrb[0].mxu0 %v1090
      %v2409 = vpop.f32.mrb[0].mxu0
      %v2410 = vadd.f32 %v2313, %v2409
      %v2411 = vpop.f32.mrb[0].mxu0
      %v2412 = vpop.f32.mrb[0].mxu0
      %v2413 = vadd.f32 %v2316, %v2412
      %v2414 = vpop.f32.mrb[0].mxu0
      %2415 = vmatprep.mubr.bf16.mxu0 %v1107
      %2416 = vmatmul.mubr.bf16.gmra.mrb[0].mxu0 %v1106
      %v2417 = vpop.f32.mrb[0].mxu0
      %v2418 = vadd.f32 %v2321, %v2417
      %v2419 = vpop.f32.mrb[0].mxu0
      %v2420 = vpop.f32.mrb[0].mxu0
      %v2421 = vadd.f32 %v2324, %v2420
      %v2422 = vpop.f32.mrb[0].mxu0
      %2423 = vmatprep.mubr.bf16.mxu0 %v1123
      %2424 = vmatmul.mubr.bf16.gmra.mrb[0].mxu0 %v1122
      %v2425 = vpop.f32.mrb[0].mxu0
      %v2426 = vadd.f32 %v2329, %v2425
      %v2427 = vpop.f32.mrb[0].mxu0
      %v2428 = vpop.f32.mrb[0].mxu0
      %v2429 = vadd.f32 %v2332, %v2428
      %v2430 = vpop.f32.mrb[0].mxu0
      %2431 = vmatprep.mubr.bf16.mxu0 %v1139
      %2432 = vmatmul.mubr.bf16.gmra.mrb[0].mxu0 %v1138
      %v2433 = vpop.f32.mrb[0].mxu0
      %v2434 = vadd.f32 %v2337, %v2433
      %v2435 = vpop.f32.mrb[0].mxu0
      %v2436 = vpop.f32.mrb[0].mxu0
      %v2437 = vadd.f32 %v2340, %v2436
      %v2438 = vpop.f32.mrb[0].mxu0
      %2439 = vmatprep.mubr.bf16.mxu0 %v1155
      %2440 = vmatmul.mubr.bf16.gmra.mrb[0].mxu0 %v1154
      %v2441 = vpop.f32.mrb[0].mxu0
      %v2442 = vadd.f32 %v2345, %v2441
      %v2443 = vpop.f32.mrb[0].mxu0
      %v2444 = vpop.f32.mrb[0].mxu0
      %v2445 = vadd.f32 %v2348, %v2444
      %v2446 = vpop.f32.mrb[0].mxu0
      %2447 = vdwg.mxu0
      %2448 = vmatprep.subr.bf16.mxu0 0
      %2449 = vmatpush1.bf16.msra.mxu0 %v1868
      %2450 = vmatprep.subr.bf16.mxu0 0
      %2451 = vmatpush1.bf16.msra.mxu0 %v1869
      %2452 = vmatprep.subr.bf16.mxu0 0
      %2453 = vmatpush1.bf16.msra.mxu0 %v1870
      %2454 = vmatprep.subr.bf16.mxu0 0
      %2455 = vmatpush1.bf16.msra.mxu0 %v1871
      %2456 = vmatprep.subr.bf16.mxu0 0
      %2457 = vmatpush1.bf16.msra.mxu0 %v1872
      %2458 = vmatprep.subr.bf16.mxu0 0
      %2459 = vmatpush1.bf16.msra.mxu0 %v1873
      %2460 = vmatprep.subr.bf16.mxu0 0
      %2461 = vmatpush1.bf16.msra.mxu0 %v1874
      %2462 = vmatprep.subr.bf16.mxu0 0
      %2463 = vmatpush1.bf16.msra.mxu0 %v1875
      %2464 = vmatprep.subr.bf16.mxu0 0
      %2465 = vmatpush1.bf16.msra.mxu0 %v1876
      %2466 = vmatprep.subr.bf16.mxu0 0
      %2467 = vmatpush1.bf16.msra.mxu0 %v1877
      %2468 = vmatprep.subr.bf16.mxu0 0
      %2469 = vmatpush1.bf16.msra.mxu0 %v1878
      %2470 = vmatprep.subr.bf16.mxu0 0
      %2471 = vmatpush1.bf16.msra.mxu0 %v1879
      %2472 = vmatprep.subr.bf16.mxu0 0
      %2473 = vmatpush1.bf16.msra.mxu0 %v1880
      %2474 = vmatprep.subr.bf16.mxu0 0
      %2475 = vmatpush1.bf16.msra.mxu0 %v1881
      %2476 = vmatprep.subr.bf16.mxu0 0
      %2477 = vmatpush1.bf16.msra.mxu0 %v1882
      %2478 = vmatprep.subr.bf16.mxu0 0
      %2479 = vmatpush1.bf16.msra.mxu0 %v1883
      %2480 = vmatprep.mubr.bf16.mxu0 %v1045
      %2481 = vmatmul.mubr.bf16.gmra.mrb[0].mxu0 %v1044
      %v2482 = vpop.f32.mrb[0].mxu0
      %v2483 = vadd.f32 %v2386, %v2482
      %v2484 = vpop.f32.mrb[0].mxu0
      %v2485 = vpop.f32.mrb[0].mxu0
      %v2486 = vadd.f32 %v2389, %v2485
      %v2487 = vpop.f32.mrb[0].mxu0
      %2488 = vmatprep.mubr.bf16.mxu0 %v1061
      %2489 = vmatmul.mubr.bf16.gmra.mrb[0].mxu0 %v1060
      %v2490 = vpop.f32.mrb[0].mxu0
      %v2491 = vadd.f32 %v2394, %v2490
      %v2492 = vpop.f32.mrb[0].mxu0
      %v2493 = vpop.f32.mrb[0].mxu0
      %v2494 = vadd.f32 %v2397, %v2493
      %v2495 = vpop.f32.mrb[0].mxu0
      %2496 = vmatprep.mubr.bf16.mxu0 %v1077
      %2497 = vmatmul.mubr.bf16.gmra.mrb[0].mxu0 %v1076
      %v2498 = vpop.f32.mrb[0].mxu0
      %v2499 = vadd.f32 %v2402, %v2498
      %v2500 = vpop.f32.mrb[0].mxu0
      %v2501 = vpop.f32.mrb[0].mxu0
      %v2502 = vadd.f32 %v2405, %v2501
      %v2503 = vpop.f32.mrb[0].mxu0
      %2504 = vmatprep.mubr.bf16.mxu0 %v1093
      %2505 = vmatmul.mubr.bf16.gmra.mrb[0].mxu0 %v1092
      %v2506 = vpop.f32.mrb[0].mxu0
      %v2507 = vadd.f32 %v2410, %v2506
      %v2508 = vpop.f32.mrb[0].mxu0
      %v2509 = vpop.f32.mrb[0].mxu0
      %v2510 = vadd.f32 %v2413, %v2509
      %v2511 = vpop.f32.mrb[0].mxu0
      %2512 = vmatprep.mubr.bf16.mxu0 %v1109
      %2513 = vmatmul.mubr.bf16.gmra.mrb[0].mxu0 %v1108
      %v2514 = vpop.f32.mrb[0].mxu0
      %v2515 = vadd.f32 %v2418, %v2514
      %v2516 = vpop.f32.mrb[0].mxu0
      %v2517 = vpop.f32.mrb[0].mxu0
      %v2518 = vadd.f32 %v2421, %v2517
      %v2519 = vpop.f32.mrb[0].mxu0
      %2520 = vmatprep.mubr.bf16.mxu0 %v1125
      %2521 = vmatmul.mubr.bf16.gmra.mrb[0].mxu0 %v1124
      %v2522 = vpop.f32.mrb[0].mxu0
      %v2523 = vadd.f32 %v2426, %v2522
      %v2524 = vpop.f32.mrb[0].mxu0
      %v2525 = vpop.f32.mrb[0].mxu0
      %v2526 = vadd.f32 %v2429, %v2525
      %v2527 = vpop.f32.mrb[0].mxu0
      %2528 = vmatprep.mubr.bf16.mxu0 %v1141
      %2529 = vmatmul.mubr.bf16.gmra.mrb[0].mxu0 %v1140
      %v2530 = vpop.f32.mrb[0].mxu0
      %v2531 = vadd.f32 %v2434, %v2530
      %v2532 = vpop.f32.mrb[0].mxu0
      %v2533 = vpop.f32.mrb[0].mxu0
      %v2534 = vadd.f32 %v2437, %v2533
      %v2535 = vpop.f32.mrb[0].mxu0
      %2536 = vmatprep.mubr.bf16.mxu0 %v1157
      %2537 = vmatmul.mubr.bf16.gmra.mrb[0].mxu0 %v1156
      %v2538 = vpop.f32.mrb[0].mxu0
      %v2539 = vadd.f32 %v2442, %v2538
      %v2540 = vpop.f32.mrb[0].mxu0
      %v2541 = vpop.f32.mrb[0].mxu0
      %v2542 = vadd.f32 %v2445, %v2541
      %v2543 = vpop.f32.mrb[0].mxu0
      %2544 = vdwg.mxu0
      %2545 = vmatprep.subr.bf16.mxu0 0
      %2546 = vmatpush1.bf16.msra.mxu0 %v1884
      %2547 = vmatprep.subr.bf16.mxu0 0
      %2548 = vmatpush1.bf16.msra.mxu0 %v1885
      %2549 = vmatprep.subr.bf16.mxu0 0
      %2550 = vmatpush1.bf16.msra.mxu0 %v1886
      %2551 = vmatprep.subr.bf16.mxu0 0
      %2552 = vmatpush1.bf16.msra.mxu0 %v1887
      %2553 = vmatprep.subr.bf16.mxu0 0
      %2554 = vmatpush1.bf16.msra.mxu0 %v1888
      %2555 = vmatprep.subr.bf16.mxu0 0
      %2556 = vmatpush1.bf16.msra.mxu0 %v1889
      %2557 = vmatprep.subr.bf16.mxu0 0
      %2558 = vmatpush1.bf16.msra.mxu0 %v1890
      %2559 = vmatprep.subr.bf16.mxu0 0
      %2560 = vmatpush1.bf16.msra.mxu0 %v1891
      %2561 = vmatprep.subr.bf16.mxu0 0
      %2562 = vmatpush1.bf16.msra.mxu0 %v1892
      %2563 = vmatprep.subr.bf16.mxu0 0
      %2564 = vmatpush1.bf16.msra.mxu0 %v1893
      %2565 = vmatprep.subr.bf16.mxu0 0
      %2566 = vmatpush1.bf16.msra.mxu0 %v1894
      %2567 = vmatprep.subr.bf16.mxu0 0
      %2568 = vmatpush1.bf16.msra.mxu0 %v1895
      %2569 = vmatprep.subr.bf16.mxu0 0
      %2570 = vmatpush1.bf16.msra.mxu0 %v1896
      %2571 = vmatprep.subr.bf16.mxu0 0
      %2572 = vmatpush1.bf16.msra.mxu0 %v1897
      %2573 = vmatprep.subr.bf16.mxu0 0
      %2574 = vmatpush1.bf16.msra.mxu0 %v1898
      %2575 = vmatprep.subr.bf16.mxu0 0
      %2576 = vmatpush1.bf16.msra.mxu0 %v1899
      %2577 = vmatprep.mubr.bf16.mxu0 %v1047
      %2578 = vmatmul.mubr.bf16.gmra.mrb[0].mxu0 %v1046
      %v2579 = vpop.f32.mrb[0].mxu0
      %v2580 = vadd.f32 %v2483, %v2579
      %v2581 = vpop.f32.mrb[0].mxu0
      %v2582 = vpop.f32.mrb[0].mxu0
      %v2583 = vadd.f32 %v2486, %v2582
      %v2584 = vpop.f32.mrb[0].mxu0
      %2585 = vmatprep.mubr.bf16.mxu0 %v1063
      %2586 = vmatmul.mubr.bf16.gmra.mrb[0].mxu0 %v1062
      %v2587 = vpop.f32.mrb[0].mxu0
      %v2588 = vadd.f32 %v2491, %v2587
      %v2589 = vpop.f32.mrb[0].mxu0
      %v2590 = vpop.f32.mrb[0].mxu0
      %v2591 = vadd.f32 %v2494, %v2590
      %v2592 = vpop.f32.mrb[0].mxu0
      %2593 = vmatprep.mubr.bf16.mxu0 %v1079
      %2594 = vmatmul.mubr.bf16.gmra.mrb[0].mxu0 %v1078
      %v2595 = vpop.f32.mrb[0].mxu0
      %v2596 = vadd.f32 %v2499, %v2595
      %v2597 = vpop.f32.mrb[0].mxu0
      %v2598 = vpop.f32.mrb[0].mxu0
      %v2599 = vadd.f32 %v2502, %v2598
      %v2600 = vpop.f32.mrb[0].mxu0
      %2601 = vmatprep.mubr.bf16.mxu0 %v1095
      %2602 = vmatmul.mubr.bf16.gmra.mrb[0].mxu0 %v1094
      %v2603 = vpop.f32.mrb[0].mxu0
      %v2604 = vadd.f32 %v2507, %v2603
      %v2605 = vpop.f32.mrb[0].mxu0
      %v2606 = vpop.f32.mrb[0].mxu0
      %v2607 = vadd.f32 %v2510, %v2606
      %v2608 = vpop.f32.mrb[0].mxu0
      %2609 = vmatprep.mubr.bf16.mxu0 %v1111
      %2610 = vmatmul.mubr.bf16.gmra.mrb[0].mxu0 %v1110
      %v2611 = vpop.f32.mrb[0].mxu0
      %v2612 = vadd.f32 %v2515, %v2611
      %v2613 = vpop.f32.mrb[0].mxu0
      %v2614 = vpop.f32.mrb[0].mxu0
      %v2615 = vadd.f32 %v2518, %v2614
      %v2616 = vpop.f32.mrb[0].mxu0
      %2617 = vmatprep.mubr.bf16.mxu0 %v1127
      %2618 = vmatmul.mubr.bf16.gmra.mrb[0].mxu0 %v1126
      %v2619 = vpop.f32.mrb[0].mxu0
      %v2620 = vadd.f32 %v2523, %v2619
      %v2621 = vpop.f32.mrb[0].mxu0
      %v2622 = vpop.f32.mrb[0].mxu0
      %v2623 = vadd.f32 %v2526, %v2622
      %v2624 = vpop.f32.mrb[0].mxu0
      %2625 = vmatprep.mubr.bf16.mxu0 %v1143
      %2626 = vmatmul.mubr.bf16.gmra.mrb[0].mxu0 %v1142
      %v2627 = vpop.f32.mrb[0].mxu0
      %v2628 = vadd.f32 %v2531, %v2627
      %v2629 = vpop.f32.mrb[0].mxu0
      %v2630 = vpop.f32.mrb[0].mxu0
      %v2631 = vadd.f32 %v2534, %v2630
      %v2632 = vpop.f32.mrb[0].mxu0
      %2633 = vmatprep.mubr.bf16.mxu0 %v1159
      %2634 = vmatmul.mubr.bf16.gmra.mrb[0].mxu0 %v1158
      %v2635 = vpop.f32.mrb[0].mxu0
      %v2636 = vadd.f32 %v2539, %v2635
      %v2637 = vpop.f32.mrb[0].mxu0
      %v2638 = vpop.f32.mrb[0].mxu0
      %v2639 = vadd.f32 %v2542, %v2638
      %v2640 = vpop.f32.mrb[0].mxu0
      %2641 = vdwg.mxu0
      %2642 = vmatprep.subr.bf16.mxu0 0
      %2643 = vmatpush1.bf16.msra.mxu0 %v1900
      %2644 = vmatprep.subr.bf16.mxu0 0
      %2645 = vmatpush1.bf16.msra.mxu0 %v1901
      %2646 = vmatprep.subr.bf16.mxu0 0
      %2647 = vmatpush1.bf16.msra.mxu0 %v1902
      %2648 = vmatprep.subr.bf16.mxu0 0
      %2649 = vmatpush1.bf16.msra.mxu0 %v1903
      %2650 = vmatprep.subr.bf16.mxu0 0
      %2651 = vmatpush1.bf16.msra.mxu0 %v1904
      %2652 = vmatprep.subr.bf16.mxu0 0
      %2653 = vmatpush1.bf16.msra.mxu0 %v1905
      %2654 = vmatprep.subr.bf16.mxu0 0
      %2655 = vmatpush1.bf16.msra.mxu0 %v1906
      %2656 = vmatprep.subr.bf16.mxu0 0
      %2657 = vmatpush1.bf16.msra.mxu0 %v1907
      %2658 = vmatprep.subr.bf16.mxu0 0
      %2659 = vmatpush1.bf16.msra.mxu0 %v1908
      %2660 = vmatprep.subr.bf16.mxu0 0
      %2661 = vmatpush1.bf16.msra.mxu0 %v1909
      %2662 = vmatprep.subr.bf16.mxu0 0
      %2663 = vmatpush1.bf16.msra.mxu0 %v1910
      %2664 = vmatprep.subr.bf16.mxu0 0
      %2665 = vmatpush1.bf16.msra.mxu0 %v1911
      %2666 = vmatprep.subr.bf16.mxu0 0
      %2667 = vmatpush1.bf16.msra.mxu0 %v1912
      %2668 = vmatprep.subr.bf16.mxu0 0
      %2669 = vmatpush1.bf16.msra.mxu0 %v1913
      %2670 = vmatprep.subr.bf16.mxu0 0
      %2671 = vmatpush1.bf16.msra.mxu0 %v1914
      %2672 = vmatprep.subr.bf16.mxu0 0
      %2673 = vmatpush1.bf16.msra.mxu0 %v1915
      %2674 = vmatprep.mubr.bf16.mxu0 %v1049
      %2675 = vmatmul.mubr.bf16.gmra.mrb[0].mxu0 %v1048
      %v2676 = vpop.f32.mrb[0].mxu0
      %v2677 = vadd.f32 %v2580, %v2676
      %v2678 = vpop.f32.mrb[0].mxu0
      %v2679 = vpop.f32.mrb[0].mxu0
      %v2680 = vadd.f32 %v2583, %v2679
      %v2681 = vpop.f32.mrb[0].mxu0
      %2682 = vmatprep.mubr.bf16.mxu0 %v1065
      %2683 = vmatmul.mubr.bf16.gmra.mrb[0].mxu0 %v1064
      %v2684 = vpop.f32.mrb[0].mxu0
      %v2685 = vadd.f32 %v2588, %v2684
      %v2686 = vpop.f32.mrb[0].mxu0
      %v2687 = vpop.f32.mrb[0].mxu0
      %v2688 = vadd.f32 %v2591, %v2687
      %v2689 = vpop.f32.mrb[0].mxu0
      %2690 = vmatprep.mubr.bf16.mxu0 %v1081
      %2691 = vmatmul.mubr.bf16.gmra.mrb[0].mxu0 %v1080
      %v2692 = vpop.f32.mrb[0].mxu0
      %v2693 = vadd.f32 %v2596, %v2692
      %v2694 = vpop.f32.mrb[0].mxu0
      %v2695 = vpop.f32.mrb[0].mxu0
      %v2696 = vadd.f32 %v2599, %v2695
      %v2697 = vpop.f32.mrb[0].mxu0
      %2698 = vmatprep.mubr.bf16.mxu0 %v1097
      %2699 = vmatmul.mubr.bf16.gmra.mrb[0].mxu0 %v1096
      %v2700 = vpop.f32.mrb[0].mxu0
      %v2701 = vadd.f32 %v2604, %v2700
      %v2702 = vpop.f32.mrb[0].mxu0
      %v2703 = vpop.f32.mrb[0].mxu0
      %v2704 = vadd.f32 %v2607, %v2703
      %v2705 = vpop.f32.mrb[0].mxu0
      %2706 = vmatprep.mubr.bf16.mxu0 %v1113
      %2707 = vmatmul.mubr.bf16.gmra.mrb[0].mxu0 %v1112
      %v2708 = vpop.f32.mrb[0].mxu0
      %v2709 = vadd.f32 %v2612, %v2708
      %v2710 = vpop.f32.mrb[0].mxu0
      %v2711 = vpop.f32.mrb[0].mxu0
      %v2712 = vadd.f32 %v2615, %v2711
      %v2713 = vpop.f32.mrb[0].mxu0
      %2714 = vmatprep.mubr.bf16.mxu0 %v1129
      %2715 = vmatmul.mubr.bf16.gmra.mrb[0].mxu0 %v1128
      %v2716 = vpop.f32.mrb[0].mxu0
      %v2717 = vadd.f32 %v2620, %v2716
      %v2718 = vpop.f32.mrb[0].mxu0
      %v2719 = vpop.f32.mrb[0].mxu0
      %v2720 = vadd.f32 %v2623, %v2719
      %v2721 = vpop.f32.mrb[0].mxu0
      %2722 = vmatprep.mubr.bf16.mxu0 %v1145
      %2723 = vmatmul.mubr.bf16.gmra.mrb[0].mxu0 %v1144
      %v2724 = vpop.f32.mrb[0].mxu0
      %v2725 = vadd.f32 %v2628, %v2724
      %v2726 = vpop.f32.mrb[0].mxu0
      %v2727 = vpop.f32.mrb[0].mxu0
      %v2728 = vadd.f32 %v2631, %v2727
      %v2729 = vpop.f32.mrb[0].mxu0
      %2730 = vmatprep.mubr.bf16.mxu0 %v1161
      %2731 = vmatmul.mubr.bf16.gmra.mrb[0].mxu0 %v1160
      %v2732 = vpop.f32.mrb[0].mxu0
      %v2733 = vadd.f32 %v2636, %v2732
      %v2734 = vpop.f32.mrb[0].mxu0
      %v2735 = vpop.f32.mrb[0].mxu0
      %v2736 = vadd.f32 %v2639, %v2735
      %v2737 = vpop.f32.mrb[0].mxu0
      %2738 = vdwg.mxu0
      %2739 = vmatprep.subr.bf16.mxu0 0
      %2740 = vmatpush1.bf16.msra.mxu0 %v1916
      %2741 = vmatprep.subr.bf16.mxu0 0
      %2742 = vmatpush1.bf16.msra.mxu0 %v1917
      %2743 = vmatprep.subr.bf16.mxu0 0
      %2744 = vmatpush1.bf16.msra.mxu0 %v1918
      %2745 = vmatprep.subr.bf16.mxu0 0
      %2746 = vmatpush1.bf16.msra.mxu0 %v1919
      %2747 = vmatprep.subr.bf16.mxu0 0
      %2748 = vmatpush1.bf16.msra.mxu0 %v1920
      %2749 = vmatprep.subr.bf16.mxu0 0
      %2750 = vmatpush1.bf16.msra.mxu0 %v1921
      %2751 = vmatprep.subr.bf16.mxu0 0
      %2752 = vmatpush1.bf16.msra.mxu0 %v1922
      %2753 = vmatprep.subr.bf16.mxu0 0
      %2754 = vmatpush1.bf16.msra.mxu0 %v1923
      %2755 = vmatprep.subr.bf16.mxu0 0
      %2756 = vmatpush1.bf16.msra.mxu0 %v1924
      %2757 = vmatprep.subr.bf16.mxu0 0
      %2758 = vmatpush1.bf16.msra.mxu0 %v1925
      %2759 = vmatprep.subr.bf16.mxu0 0
      %2760 = vmatpush1.bf16.msra.mxu0 %v1926
      %2761 = vmatprep.subr.bf16.mxu0 0
      %2762 = vmatpush1.bf16.msra.mxu0 %v1927
      %2763 = vmatprep.subr.bf16.mxu0 0
      %2764 = vmatpush1.bf16.msra.mxu0 %v1928
      %2765 = vmatprep.subr.bf16.mxu0 0
      %2766 = vmatpush1.bf16.msra.mxu0 %v1929
      %2767 = vmatprep.subr.bf16.mxu0 0
      %2768 = vmatpush1.bf16.msra.mxu0 %v1930
      %2769 = vmatprep.subr.bf16.mxu0 0
      %2770 = vmatpush1.bf16.msra.mxu0 %v1931
      %2771 = vmatprep.mubr.bf16.mxu0 %v1051
      %2772 = vmatmul.mubr.bf16.gmra.mrb[0].mxu0 %v1050
      %v2773 = vpop.f32.mrb[0].mxu0
      %v2774 = vadd.f32 %v2677, %v2773
      %v2775 = vpop.f32.mrb[0].mxu0
      %v2776 = vpop.f32.mrb[0].mxu0
      %v2777 = vadd.f32 %v2680, %v2776
      %v2778 = vpop.f32.mrb[0].mxu0
      %2779 = vmatprep.mubr.bf16.mxu0 %v1067
      %2780 = vmatmul.mubr.bf16.gmra.mrb[0].mxu0 %v1066
      %v2781 = vpop.f32.mrb[0].mxu0
      %v2782 = vadd.f32 %v2685, %v2781
      %v2783 = vpop.f32.mrb[0].mxu0
      %v2784 = vpop.f32.mrb[0].mxu0
      %v2785 = vadd.f32 %v2688, %v2784
      %v2786 = vpop.f32.mrb[0].mxu0
      %2787 = vmatprep.mubr.bf16.mxu0 %v1083
      %2788 = vmatmul.mubr.bf16.gmra.mrb[0].mxu0 %v1082
      %v2789 = vpop.f32.mrb[0].mxu0
      %v2790 = vadd.f32 %v2693, %v2789
      %v2791 = vpop.f32.mrb[0].mxu0
      %v2792 = vpop.f32.mrb[0].mxu0
      %v2793 = vadd.f32 %v2696, %v2792
      %v2794 = vpop.f32.mrb[0].mxu0
      %2795 = vmatprep.mubr.bf16.mxu0 %v1099
      %2796 = vmatmul.mubr.bf16.gmra.mrb[0].mxu0 %v1098
      %v2797 = vpop.f32.mrb[0].mxu0
      %v2798 = vadd.f32 %v2701, %v2797
      %v2799 = vpop.f32.mrb[0].mxu0
      %v2800 = vpop.f32.mrb[0].mxu0
      %v2801 = vadd.f32 %v2704, %v2800
      %v2802 = vpop.f32.mrb[0].mxu0
      %2803 = vmatprep.mubr.bf16.mxu0 %v1115
      %2804 = vmatmul.mubr.bf16.gmra.mrb[0].mxu0 %v1114
      %v2805 = vpop.f32.mrb[0].mxu0
      %v2806 = vadd.f32 %v2709, %v2805
      %v2807 = vpop.f32.mrb[0].mxu0
      %v2808 = vpop.f32.mrb[0].mxu0
      %v2809 = vadd.f32 %v2712, %v2808
      %v2810 = vpop.f32.mrb[0].mxu0
      %2811 = vmatprep.mubr.bf16.mxu0 %v1131
      %2812 = vmatmul.mubr.bf16.gmra.mrb[0].mxu0 %v1130
      %v2813 = vpop.f32.mrb[0].mxu0
      %v2814 = vadd.f32 %v2717, %v2813
      %v2815 = vpop.f32.mrb[0].mxu0
      %v2816 = vpop.f32.mrb[0].mxu0
      %v2817 = vadd.f32 %v2720, %v2816
      %v2818 = vpop.f32.mrb[0].mxu0
      %2819 = vmatprep.mubr.bf16.mxu0 %v1147
      %2820 = vmatmul.mubr.bf16.gmra.mrb[0].mxu0 %v1146
      %v2821 = vpop.f32.mrb[0].mxu0
      %v2822 = vadd.f32 %v2725, %v2821
      %v2823 = vpop.f32.mrb[0].mxu0
      %v2824 = vpop.f32.mrb[0].mxu0
      %v2825 = vadd.f32 %v2728, %v2824
      %v2826 = vpop.f32.mrb[0].mxu0
      %2827 = vmatprep.mubr.bf16.mxu0 %v1163
      %2828 = vmatmul.mubr.bf16.gmra.mrb[0].mxu0 %v1162
      %v2829 = vpop.f32.mrb[0].mxu0
      %v2830 = vadd.f32 %v2733, %v2829
      %v2831 = vpop.f32.mrb[0].mxu0
      %v2832 = vpop.f32.mrb[0].mxu0
      %v2833 = vadd.f32 %v2736, %v2832
      %v2834 = vpop.f32.mrb[0].mxu0
      %2835 = vdwg.mxu0
      %v2836 = vmax.f32 %v2774, 0.0
      %v2837 = vmax.f32 %v2777, 0.0
      %v2838 = vmax.f32 %v2782, 0.0
      %v2839 = vmax.f32 %v2785, 0.0
      %v2840 = vmax.f32 %v2790, 0.0
      %v2841 = vmax.f32 %v2793, 0.0
      %v2842 = vmax.f32 %v2798, 0.0
      %v2843 = vmax.f32 %v2801, 0.0
      %v2844 = vmax.f32 %v2806, 0.0
      %v2845 = vmax.f32 %v2809, 0.0
      %v2846 = vmax.f32 %v2814, 0.0
      %v2847 = vmax.f32 %v2817, 0.0
      %v2848 = vmax.f32 %v2822, 0.0
      %v2849 = vmax.f32 %v2825, 0.0
      %v2850 = vmax.f32 %v2830, 0.0
      %v2851 = vmax.f32 %v2833, 0.0
      %vm2852 = vcmask 130048
      %2853 = vst.msk [vmem:[%s170] sm:$0xff] %vm2852, %v2836
      %2854 = vst.msk [vmem:[%s170 + $0x8] sm:$0xff] %vm2852, %v2837
      %2855 = vst.msk [vmem:[%s170 + $0x10] sm:$0xff] %vm2852, %v2838
      %2856 = vst.msk [vmem:[%s170 + $0x18] sm:$0xff] %vm2852, %v2839
      %2857 = vst.msk [vmem:[%s170 + $0x20] sm:$0xff] %vm2852, %v2840
      %2858 = vst.msk [vmem:[%s170 + $0x28] sm:$0xff] %vm2852, %v2841
      %2859 = vst.msk [vmem:[%s170 + $0x30] sm:$0xff] %vm2852, %v2842
      %2860 = vst.msk [vmem:[%s170 + $0x38] sm:$0xff] %vm2852, %v2843
      %2861 = vst.msk [vmem:[%s170 + $0x40] sm:$0xff] %vm2852, %v2844
      %2862 = vst.msk [vmem:[%s170 + $0x48] sm:$0xff] %vm2852, %v2845
      %2863 = vst.msk [vmem:[%s170 + $0x50] sm:$0xff] %vm2852, %v2846
      %2864 = vst.msk [vmem:[%s170 + $0x58] sm:$0xff] %vm2852, %v2847
      %2865 = vst.msk [vmem:[%s170 + $0x60] sm:$0xff] %vm2852, %v2848
      %2866 = vst.msk [vmem:[%s170 + $0x68] sm:$0xff] %vm2852, %v2849
      %2867 = vst.msk [vmem:[%s170 + $0x70] sm:$0xff] %vm2852, %v2850
      %2868 = vst.msk [vmem:[%s170 + $0x78] sm:$0xff] %vm2852, %v2851
      %p2869 = scmp.lt.s32.totalorder %s14, 1
      %s2870 = scalar_select %p2869, %s14, 1
      %s2871 = smul.addr %s2870, 16
      %s2872 = smul.addr %s2871, 8
      %s2873 = scalar_lea.vmem %s3, %s2872
      // Predicated region
      $region33: #{deepten_head.3} parent=31 // pred_check
        %p2874 = pneg %p100
      $region34: #{deepten_head.3} parent=31 // pred_check_branch
        %2876 = sbr.rel (%p2874) target = $region36
      $region35: #{deepten_head.3} parent=31 // pred_region
        _
      $region36: #{deepten_head.3} parent=31 // pred_fallthru
        _
    $region32: #{deepten_head.3} parent=5 // pred_fallthru
      _
    %p2877 = scmp.le.s32.totalorder 2, %s9
    // Predicated region
    $region37: #{deepten_head.3} parent=5 // pred_check
      %p2878 = pneg %p2877
    $region38: #{deepten_head.3} parent=5 // pred_check_branch
      %2880 = sbr.rel (%p2878) target = $region40
    $region39: #{deepten_head.3} parent=5 // pred_region
      %s2881 = ssub.s32 %s9, 2
      // Predicated region
      $region41: #{deepten_head.3} parent=39 // pred_check
        %p2882 = pneg %p106
      $region42: #{deepten_head.3} parent=39 // pred_check_branch
        %2884 = sbr.rel (%p2882) target = $region44
      $region43: #{deepten_head.3} parent=39 // pred_region
        %p2885 = scmp.lt.s32.totalorder %s15, 1
        %s2886 = scalar_select %p2885, %s15, 1
        %s2887 = smul.addr %s2886, 16
        %s2888 = smul.addr %s2887, 8
        %s2889 = scalar_lea.vmem %s3, %s2888
      $region44: #{deepten_head.3} parent=39 // pred_fallthru
        _
    $region40: #{deepten_head.3} parent=5 // pred_fallthru
      _
  $region6: #{deepten_head.3} parent=0 // loop_footer
    %s13 = sadd.s32 1, %s9
  $region7: #{deepten_head.3} parent=0 // loop_footer_branch
    %8 = sbr.rel target = $region3
  $region8: #{deepten_head.3} parent=0 // loop_exit
    _

// kernel: deepten_head.5
$region0: #{deepten_head.5}
  #allocation0 [shape = 'u32[]', space=smem, size = 0x4, offset = 0x4, fixed_abs, tag = 'smem constant byte address 0x4 - core index']
  #allocation1 [shape = 'u32[144,128]{1,0:T(1,128)}', space=vmem, size = 0x12000, scoped, tag = 'internal scratch']
  %s0 = inlined_call_operand.vmem [shape: f32[2,4096], index: 0, kind: input, shape index: {}]
  %s1 = inlined_call_operand.vmem [shape: f32[4096,10], index: 1, kind: input, shape index: {}]
  %s2 = inlined_call_operand.vmem [shape: f32[1,10], index: 2, kind: input, shape index: {}]
  %s3 = inlined_call_operand.hbm [shape: f32[2,10], index: 3, kind: output, shape index: {}]
  %s4 = sld [smem:[#allocation0]]
  $region22: #{deepten_head.5} parent=0
    _
  %s6 = ssub.s32 1, %s4
  %s7 = scalar_select 0, %s6, %s4
  $region1: #{deepten_head.5} parent=0
    #allocation2 [shape = 'u8[1024]{0}', space=vmem, size = 0x400, scoped, tag = 'output window, operand 0, single buffered']
    #allocation3 [shape = 's32[1]{0}', space=sflag, size = 0x4, scoped, tag = 'scoped memory for deepten_head.5']
    %8 = vsyncpa [#allocation3], 0
    // Predicated region
    $region2: #{deepten_head.5} parent=1 // pred_check
      _
    $region3: #{deepten_head.5} parent=1 // pred_check_branch
      %10 = sbr.rel (0) target = $region5
    $region4: #{deepten_head.5} parent=1 // pred_region
      _
    $region5: #{deepten_head.5} parent=1 // pred_fallthru
      _
    // Predicated region
    $region6: #{deepten_head.5} parent=1 // pred_check
      _
    $region7: #{deepten_head.5} parent=1 // pred_check_branch
      %12 = sbr.rel (0) target = $region9
    $region8: #{deepten_head.5} parent=1 // pred_region
      _
    $region9: #{deepten_head.5} parent=1 // pred_fallthru
      _
    // Predicated region
    $region10: #{deepten_head.5} parent=1 // pred_check
      _
    $region11: #{deepten_head.5} parent=1 // pred_check_branch
      %14 = sbr.rel (0) target = $region13
    $region12: #{deepten_head.5} parent=1 // pred_region
      _
    $region13: #{deepten_head.5} parent=1 // pred_fallthru
      _
    %v15 = vld [vmem:[%s0] sm:$0xff]
    %v16 = vld [vmem:[%s0 + $0x8] sm:$0xff]
    %v17 = vld [vmem:[%s0 + $0x10] sm:$0xff]
    %v18 = vld [vmem:[%s0 + $0x18] sm:$0xff]
    %v19 = vld [vmem:[%s0 + $0x20] sm:$0xff]
    %v20 = vld [vmem:[%s0 + $0x28] sm:$0xff]
    %v21 = vld [vmem:[%s0 + $0x30] sm:$0xff]
    %v22 = vld [vmem:[%s0 + $0x38] sm:$0xff]
    %v23 = vmul.f32 %v15, %v15
    %v24 = vmul.f32 %v16, %v16
    %v25 = vmul.f32 %v17, %v17
    %v26 = vmul.f32 %v18, %v18
    %v27 = vmul.f32 %v19, %v19
    %v28 = vmul.f32 %v20, %v20
    %v29 = vmul.f32 %v21, %v21
    %v30 = vmul.f32 %v22, %v22
    %v39 = vcombine.high %v23, %v23
    %v41 = vunpack.c.l.s4 1983009808
    %v42 = vunpack.c.0.s8 %v41
    %v43 = vlaneseq
    %v44 = vshrl.u32 %v43, 7
    %v45 = vsub.s32 %v42, %v44
    %v46 = vrot.slane %v23, %v45
    %v48 = vunpack.c.l.s4 1983009808
    %v49 = vunpack.c.0.s8 %v48
    %v50 = vlaneseq
    %v51 = vshrl.u32 %v50, 7
    %v52 = vsub.s32 %v49, %v51
    %v53 = vrot.slane %v39, %v52
    %v54 = vcombine.high %v46, %v46
    %v55 = vcombine.high %v53, %v53
    %v56 = vcombine.high %v24, %v24
    %v58 = vunpack.c.l.s4 1983009808
    %v59 = vunpack.c.0.s8 %v58
    %v60 = vlaneseq
    %v61 = vshrl.u32 %v60, 7
    %v62 = vsub.s32 %v59, %v61
    %v63 = vrot.slane %v24, %v62
    %v65 = vunpack.c.l.s4 1983009808
    %v66 = vunpack.c.0.s8 %v65
    %v67 = vlaneseq
    %v68 = vshrl.u32 %v67, 7
    %v69 = vsub.s32 %v66, %v68
    %v70 = vrot.slane %v56, %v69
    %v71 = vcombine.high %v63, %v63
    %v72 = vcombine.high %v70, %v70
    %v73 = vcombine.high %v25, %v25
    %v75 = vunpack.c.l.s4 1983009808
    %v76 = vunpack.c.0.s8 %v75
    %v77 = vlaneseq
    %v78 = vshrl.u32 %v77, 7
    %v79 = vsub.s32 %v76, %v78
    %v80 = vrot.slane %v25, %v79
    %v82 = vunpack.c.l.s4 1983009808
    %v83 = vunpack.c.0.s8 %v82
    %v84 = vlaneseq
    %v85 = vshrl.u32 %v84, 7
    %v86 = vsub.s32 %v83, %v85
    %v87 = vrot.slane %v73, %v86
    %v88 = vcombine.high %v80, %v80
    %v89 = vcombine.high %v87, %v87
    %v90 = vcombine.high %v26, %v26
    %v92 = vunpack.c.l.s4 1983009808
    %v93 = vunpack.c.0.s8 %v92
    %v94 = vlaneseq
    %v95 = vshrl.u32 %v94, 7
    %v96 = vsub.s32 %v93, %v95
    %v97 = vrot.slane %v26, %v96
    %v99 = vunpack.c.l.s4 1983009808
    %v100 = vunpack.c.0.s8 %v99
    %v101 = vlaneseq
    %v102 = vshrl.u32 %v101, 7
    %v103 = vsub.s32 %v100, %v102
    %v104 = vrot.slane %v90, %v103
    %v105 = vcombine.high %v97, %v97
    %v106 = vcombine.high %v104, %v104
    %v107 = vcombine.high %v27, %v27
    %v109 = vunpack.c.l.s4 1983009808
    %v110 = vunpack.c.0.s8 %v109
    %v111 = vlaneseq
    %v112 = vshrl.u32 %v111, 7
    %v113 = vsub.s32 %v110, %v112
    %v114 = vrot.slane %v27, %v113
    %v116 = vunpack.c.l.s4 1983009808
    %v117 = vunpack.c.0.s8 %v116
    %v118 = vlaneseq
    %v119 = vshrl.u32 %v118, 7
    %v120 = vsub.s32 %v117, %v119
    %v121 = vrot.slane %v107, %v120
    %v122 = vcombine.high %v114, %v114
    %v123 = vcombine.high %v121, %v121
    %v124 = vcombine.high %v28, %v28
    %v126 = vunpack.c.l.s4 1983009808
    %v127 = vunpack.c.0.s8 %v126
    %v128 = vlaneseq
    %v129 = vshrl.u32 %v128, 7
    %v130 = vsub.s32 %v127, %v129
    %v131 = vrot.slane %v28, %v130
    %v133 = vunpack.c.l.s4 1983009808
    %v134 = vunpack.c.0.s8 %v133
    %v135 = vlaneseq
    %v136 = vshrl.u32 %v135, 7
    %v137 = vsub.s32 %v134, %v136
    %v138 = vrot.slane %v124, %v137
    %v139 = vcombine.high %v131, %v131
    %v140 = vcombine.high %v138, %v138
    %v141 = vcombine.high %v29, %v29
    %v143 = vunpack.c.l.s4 1983009808
    %v144 = vunpack.c.0.s8 %v143
    %v145 = vlaneseq
    %v146 = vshrl.u32 %v145, 7
    %v147 = vsub.s32 %v144, %v146
    %v148 = vrot.slane %v29, %v147
    %v150 = vunpack.c.l.s4 1983009808
    %v151 = vunpack.c.0.s8 %v150
    %v152 = vlaneseq
    %v153 = vshrl.u32 %v152, 7
    %v154 = vsub.s32 %v151, %v153
    %v155 = vrot.slane %v141, %v154
    %v156 = vcombine.high %v148, %v148
    %v157 = vcombine.high %v155, %v155
    %v158 = vcombine.high %v30, %v30
    %v160 = vunpack.c.l.s4 1983009808
    %v161 = vunpack.c.0.s8 %v160
    %v162 = vlaneseq
    %v163 = vshrl.u32 %v162, 7
    %v164 = vsub.s32 %v161, %v163
    %v165 = vrot.slane %v30, %v164
    %v167 = vunpack.c.l.s4 1983009808
    %v168 = vunpack.c.0.s8 %v167
    %v169 = vlaneseq
    %v170 = vshrl.u32 %v169, 7
    %v171 = vsub.s32 %v168, %v170
    %v172 = vrot.slane %v158, %v171
    %v173 = vcombine.high %v165, %v165
    %v174 = vcombine.high %v172, %v172
    %vm207 = vcmask 1041408
    %v208 = vsel %vm207, %v46, 0.0
    %v209 = vsel %vm207, %v54, 0.0
    %v210 = vadd.f32 %v208, %v209
    %v211 = vsel %vm207, %v53, 0.0
    %v212 = vadd.f32 %v210, %v211
    %v213 = vsel %vm207, %v55, 0.0
    %v214 = vadd.f32 %v212, %v213
    %v215 = vsel %vm207, %v63, 0.0
    %v216 = vadd.f32 %v214, %v215
    %v217 = vsel %vm207, %v71, 0.0
    %v218 = vadd.f32 %v216, %v217
    %v219 = vsel %vm207, %v70, 0.0
    %v220 = vadd.f32 %v218, %v219
    %v221 = vsel %vm207, %v72, 0.0
    %v222 = vadd.f32 %v220, %v221
    %v223 = vsel %vm207, %v80, 0.0
    %v224 = vadd.f32 %v222, %v223
    %v225 = vsel %vm207, %v88, 0.0
    %v226 = vadd.f32 %v224, %v225
    %v227 = vsel %vm207, %v87, 0.0
    %v228 = vadd.f32 %v226, %v227
    %v229 = vsel %vm207, %v89, 0.0
    %v230 = vadd.f32 %v228, %v229
    %v231 = vsel %vm207, %v97, 0.0
    %v232 = vadd.f32 %v230, %v231
    %v233 = vsel %vm207, %v105, 0.0
    %v234 = vadd.f32 %v232, %v233
    %v235 = vsel %vm207, %v104, 0.0
    %v236 = vadd.f32 %v234, %v235
    %v237 = vsel %vm207, %v106, 0.0
    %v238 = vadd.f32 %v236, %v237
    %v239 = vsel %vm207, %v114, 0.0
    %v240 = vadd.f32 %v238, %v239
    %v241 = vsel %vm207, %v122, 0.0
    %v242 = vadd.f32 %v240, %v241
    %v243 = vsel %vm207, %v121, 0.0
    %v244 = vadd.f32 %v242, %v243
    %v245 = vsel %vm207, %v123, 0.0
    %v246 = vadd.f32 %v244, %v245
    %v247 = vsel %vm207, %v131, 0.0
    %v248 = vadd.f32 %v246, %v247
    %v249 = vsel %vm207, %v139, 0.0
    %v250 = vadd.f32 %v248, %v249
    %v251 = vsel %vm207, %v138, 0.0
    %v252 = vadd.f32 %v250, %v251
    %v253 = vsel %vm207, %v140, 0.0
    %v254 = vadd.f32 %v252, %v253
    %v255 = vsel %vm207, %v148, 0.0
    %v256 = vadd.f32 %v254, %v255
    %v257 = vsel %vm207, %v156, 0.0
    %v258 = vadd.f32 %v256, %v257
    %v259 = vsel %vm207, %v155, 0.0
    %v260 = vadd.f32 %v258, %v259
    %v261 = vsel %vm207, %v157, 0.0
    %v262 = vadd.f32 %v260, %v261
    %v263 = vsel %vm207, %v165, 0.0
    %v264 = vadd.f32 %v262, %v263
    %v265 = vsel %vm207, %v173, 0.0
    %v266 = vadd.f32 %v264, %v265
    %v267 = vsel %vm207, %v172, 0.0
    %v268 = vadd.f32 %v266, %v267
    %v269 = vsel %vm207, %v174, 0.0
    %v270 = vadd.f32 %v268, %v269
    %271 = vadd.xlane.f32.xlu0 %v270
    %v272 = vpop.xlane.xlu0 %271
    %v273 = vmax.f32 %v272, 1e-24
    %v274 = vrsqrt.pop %v273
    %v277 = vunpack.c.l.s4 269488144
    %v278 = vunpack.c.0.s8 %v277
    %v279 = vlaneseq
    %v280 = vshrl.u32 %v279, 7
    %v281 = vsub.s32 %v278, %v280
    %v282 = vrot.slane %v274, %v281
    %v284 = vmul.f32 %v15, %v282
    %v285 = vmul.f32 %v16, %v282
    %v286 = vmul.f32 %v17, %v282
    %v287 = vmul.f32 %v18, %v282
    %v288 = vmul.f32 %v19, %v282
    %v289 = vmul.f32 %v20, %v282
    %v290 = vmul.f32 %v21, %v282
    %v291 = vmul.f32 %v22, %v282
    %v292 = vld [vmem:[%s1] sm:$0xff]
    %v293 = vld [vmem:[%s1 + $0x8] sm:$0xff]
    %v294 = vld [vmem:[%s1 + $0x10] sm:$0xff]
    %v295 = vld [vmem:[%s1 + $0x18] sm:$0xff]
    %v296 = vld [vmem:[%s1 + $0x20] sm:$0xff]
    %v297 = vld [vmem:[%s1 + $0x28] sm:$0xff]
    %v298 = vld [vmem:[%s1 + $0x30] sm:$0xff]
    %v299 = vld [vmem:[%s1 + $0x38] sm:$0xff]
    %v300 = vld [vmem:[%s1 + $0x40] sm:$0xff]
    %v301 = vld [vmem:[%s1 + $0x48] sm:$0xff]
    %v302 = vld [vmem:[%s1 + $0x50] sm:$0xff]
    %v303 = vld [vmem:[%s1 + $0x58] sm:$0xff]
    %v304 = vld [vmem:[%s1 + $0x60] sm:$0xff]
    %v305 = vld [vmem:[%s1 + $0x68] sm:$0xff]
    %v306 = vld [vmem:[%s1 + $0x70] sm:$0xff]
    %v307 = vld [vmem:[%s1 + $0x78] sm:$0xff]
    %v308 = vld [vmem:[%s1 + $0x80] sm:$0xff]
    %v309 = vld [vmem:[%s1 + $0x88] sm:$0xff]
    %v310 = vld [vmem:[%s1 + $0x90] sm:$0xff]
    %v311 = vld [vmem:[%s1 + $0x98] sm:$0xff]
    %v312 = vld [vmem:[%s1 + $0xa0] sm:$0xff]
    %v313 = vld [vmem:[%s1 + $0xa8] sm:$0xff]
    %v314 = vld [vmem:[%s1 + $0xb0] sm:$0xff]
    %v315 = vld [vmem:[%s1 + $0xb8] sm:$0xff]
    %v316 = vld [vmem:[%s1 + $0xc0] sm:$0xff]
    %v317 = vld [vmem:[%s1 + $0xc8] sm:$0xff]
    %v318 = vld [vmem:[%s1 + $0xd0] sm:$0xff]
    %v319 = vld [vmem:[%s1 + $0xd8] sm:$0xff]
    %v320 = vld [vmem:[%s1 + $0xe0] sm:$0xff]
    %v321 = vld [vmem:[%s1 + $0xe8] sm:$0xff]
    %v322 = vld [vmem:[%s1 + $0xf0] sm:$0xff]
    %v323 = vld [vmem:[%s1 + $0xf8] sm:$0xff]
    %v324 = vld [vmem:[%s1 + $0x100] sm:$0xff]
    %v325 = vld [vmem:[%s1 + $0x108] sm:$0xff]
    %v326 = vld [vmem:[%s1 + $0x110] sm:$0xff]
    %v327 = vld [vmem:[%s1 + $0x118] sm:$0xff]
    %v328 = vld [vmem:[%s1 + $0x120] sm:$0xff]
    %v329 = vld [vmem:[%s1 + $0x128] sm:$0xff]
    %v330 = vld [vmem:[%s1 + $0x130] sm:$0xff]
    %v331 = vld [vmem:[%s1 + $0x138] sm:$0xff]
    %v332 = vld [vmem:[%s1 + $0x140] sm:$0xff]
    %v333 = vld [vmem:[%s1 + $0x148] sm:$0xff]
    %v334 = vld [vmem:[%s1 + $0x150] sm:$0xff]
    %v335 = vld [vmem:[%s1 + $0x158] sm:$0xff]
    %v336 = vld [vmem:[%s1 + $0x160] sm:$0xff]
    %v337 = vld [vmem:[%s1 + $0x168] sm:$0xff]
    %v338 = vld [vmem:[%s1 + $0x170] sm:$0xff]
    %v339 = vld [vmem:[%s1 + $0x178] sm:$0xff]
    %v340 = vld [vmem:[%s1 + $0x180] sm:$0xff]
    %v341 = vld [vmem:[%s1 + $0x188] sm:$0xff]
    %v342 = vld [vmem:[%s1 + $0x190] sm:$0xff]
    %v343 = vld [vmem:[%s1 + $0x198] sm:$0xff]
    %v344 = vld [vmem:[%s1 + $0x1a0] sm:$0xff]
    %v345 = vld [vmem:[%s1 + $0x1a8] sm:$0xff]
    %v346 = vld [vmem:[%s1 + $0x1b0] sm:$0xff]
    %v347 = vld [vmem:[%s1 + $0x1b8] sm:$0xff]
    %v348 = vld [vmem:[%s1 + $0x1c0] sm:$0xff]
    %v349 = vld [vmem:[%s1 + $0x1c8] sm:$0xff]
    %v350 = vld [vmem:[%s1 + $0x1d0] sm:$0xff]
    %v351 = vld [vmem:[%s1 + $0x1d8] sm:$0xff]
    %v352 = vld [vmem:[%s1 + $0x1e0] sm:$0xff]
    %v353 = vld [vmem:[%s1 + $0x1e8] sm:$0xff]
    %v354 = vld [vmem:[%s1 + $0x1f0] sm:$0xff]
    %v355 = vld [vmem:[%s1 + $0x1f8] sm:$0xff]
    %v356 = vld [vmem:[%s1 + $0x200] sm:$0xff]
    %v357 = vld [vmem:[%s1 + $0x208] sm:$0xff]
    %v358 = vld [vmem:[%s1 + $0x210] sm:$0xff]
    %v359 = vld [vmem:[%s1 + $0x218] sm:$0xff]
    %v360 = vld [vmem:[%s1 + $0x220] sm:$0xff]
    %v361 = vld [vmem:[%s1 + $0x228] sm:$0xff]
    %v362 = vld [vmem:[%s1 + $0x230] sm:$0xff]
    %v363 = vld [vmem:[%s1 + $0x238] sm:$0xff]
    %v364 = vld [vmem:[%s1 + $0x240] sm:$0xff]
    %v365 = vld [vmem:[%s1 + $0x248] sm:$0xff]
    %v366 = vld [vmem:[%s1 + $0x250] sm:$0xff]
    %v367 = vld [vmem:[%s1 + $0x258] sm:$0xff]
    %v368 = vld [vmem:[%s1 + $0x260] sm:$0xff]
    %v369 = vld [vmem:[%s1 + $0x268] sm:$0xff]
    %v370 = vld [vmem:[%s1 + $0x270] sm:$0xff]
    %v371 = vld [vmem:[%s1 + $0x278] sm:$0xff]
    %v372 = vld [vmem:[%s1 + $0x280] sm:$0xff]
    %v373 = vld [vmem:[%s1 + $0x288] sm:$0xff]
    %v374 = vld [vmem:[%s1 + $0x290] sm:$0xff]
    %v375 = vld [vmem:[%s1 + $0x298] sm:$0xff]
    %v376 = vld [vmem:[%s1 + $0x2a0] sm:$0xff]
    %v377 = vld [vmem:[%s1 + $0x2a8] sm:$0xff]
    %v378 = vld [vmem:[%s1 + $0x2b0] sm:$0xff]
    %v379 = vld [vmem:[%s1 + $0x2b8] sm:$0xff]
    %v380 = vld [vmem:[%s1 + $0x2c0] sm:$0xff]
    %v381 = vld [vmem:[%s1 + $0x2c8] sm:$0xff]
    %v382 = vld [vmem:[%s1 + $0x2d0] sm:$0xff]
    %v383 = vld [vmem:[%s1 + $0x2d8] sm:$0xff]
    %v384 = vld [vmem:[%s1 + $0x2e0] sm:$0xff]
    %v385 = vld [vmem:[%s1 + $0x2e8] sm:$0xff]
    %v386 = vld [vmem:[%s1 + $0x2f0] sm:$0xff]
    %v387 = vld [vmem:[%s1 + $0x2f8] sm:$0xff]
    %v388 = vld [vmem:[%s1 + $0x300] sm:$0xff]
    %v389 = vld [vmem:[%s1 + $0x308] sm:$0xff]
    %v390 = vld [vmem:[%s1 + $0x310] sm:$0xff]
    %v391 = vld [vmem:[%s1 + $0x318] sm:$0xff]
    %v392 = vld [vmem:[%s1 + $0x320] sm:$0xff]
    %v393 = vld [vmem:[%s1 + $0x328] sm:$0xff]
    %v394 = vld [vmem:[%s1 + $0x330] sm:$0xff]
    %v395 = vld [vmem:[%s1 + $0x338] sm:$0xff]
    %v396 = vld [vmem:[%s1 + $0x340] sm:$0xff]
    %v397 = vld [vmem:[%s1 + $0x348] sm:$0xff]
    %v398 = vld [vmem:[%s1 + $0x350] sm:$0xff]
    %v399 = vld [vmem:[%s1 + $0x358] sm:$0xff]
    %v400 = vld [vmem:[%s1 + $0x360] sm:$0xff]
    %v401 = vld [vmem:[%s1 + $0x368] sm:$0xff]
    %v402 = vld [vmem:[%s1 + $0x370] sm:$0xff]
    %v403 = vld [vmem:[%s1 + $0x378] sm:$0xff]
    %v404 = vld [vmem:[%s1 + $0x380] sm:$0xff]
    %v405 = vld [vmem:[%s1 + $0x388] sm:$0xff]
    %v406 = vld [vmem:[%s1 + $0x390] sm:$0xff]
    %v407 = vld [vmem:[%s1 + $0x398] sm:$0xff]
    %v408 = vld [vmem:[%s1 + $0x3a0] sm:$0xff]
    %v409 = vld [vmem:[%s1 + $0x3a8] sm:$0xff]
    %v410 = vld [vmem:[%s1 + $0x3b0] sm:$0xff]
    %v411 = vld [vmem:[%s1 + $0x3b8] sm:$0xff]
    %v412 = vld [vmem:[%s1 + $0x3c0] sm:$0xff]
    %v413 = vld [vmem:[%s1 + $0x3c8] sm:$0xff]
    %v414 = vld [vmem:[%s1 + $0x3d0] sm:$0xff]
    %v415 = vld [vmem:[%s1 + $0x3d8] sm:$0xff]
    %v416 = vld [vmem:[%s1 + $0x3e0] sm:$0xff]
    %v417 = vld [vmem:[%s1 + $0x3e8] sm:$0xff]
    %v418 = vld [vmem:[%s1 + $0x3f0] sm:$0xff]
    %v419 = vld [vmem:[%s1 + $0x3f8] sm:$0xff]
    %v420 = vld [vmem:[%s1 + $0x400] sm:$0xff]
    %v421 = vld [vmem:[%s1 + $0x408] sm:$0xff]
    %v422 = vld [vmem:[%s1 + $0x410] sm:$0xff]
    %v423 = vld [vmem:[%s1 + $0x418] sm:$0xff]
    %v424 = vld [vmem:[%s1 + $0x420] sm:$0xff]
    %v425 = vld [vmem:[%s1 + $0x428] sm:$0xff]
    %v426 = vld [vmem:[%s1 + $0x430] sm:$0xff]
    %v427 = vld [vmem:[%s1 + $0x438] sm:$0xff]
    %v428 = vld [vmem:[%s1 + $0x440] sm:$0xff]
    %v429 = vld [vmem:[%s1 + $0x448] sm:$0xff]
    %v430 = vld [vmem:[%s1 + $0x450] sm:$0xff]
    %v431 = vld [vmem:[%s1 + $0x458] sm:$0xff]
    %v432 = vld [vmem:[%s1 + $0x460] sm:$0xff]
    %v433 = vld [vmem:[%s1 + $0x468] sm:$0xff]
    %v434 = vld [vmem:[%s1 + $0x470] sm:$0xff]
    %v435 = vld [vmem:[%s1 + $0x478] sm:$0xff]
    %v436 = vld [vmem:[%s1 + $0x480] sm:$0xff]
    %v437 = vld [vmem:[%s1 + $0x488] sm:$0xff]
    %v438 = vld [vmem:[%s1 + $0x490] sm:$0xff]
    %v439 = vld [vmem:[%s1 + $0x498] sm:$0xff]
    %v440 = vld [vmem:[%s1 + $0x4a0] sm:$0xff]
    %v441 = vld [vmem:[%s1 + $0x4a8] sm:$0xff]
    %v442 = vld [vmem:[%s1 + $0x4b0] sm:$0xff]
    %v443 = vld [vmem:[%s1 + $0x4b8] sm:$0xff]
    %v444 = vld [vmem:[%s1 + $0x4c0] sm:$0xff]
    %v445 = vld [vmem:[%s1 + $0x4c8] sm:$0xff]
    %v446 = vld [vmem:[%s1 + $0x4d0] sm:$0xff]
    %v447 = vld [vmem:[%s1 + $0x4d8] sm:$0xff]
    %v448 = vld [vmem:[%s1 + $0x4e0] sm:$0xff]
    %v449 = vld [vmem:[%s1 + $0x4e8] sm:$0xff]
    %v450 = vld [vmem:[%s1 + $0x4f0] sm:$0xff]
    %v451 = vld [vmem:[%s1 + $0x4f8] sm:$0xff]
    %v452 = vld [vmem:[%s1 + $0x500] sm:$0xff]
    %v453 = vld [vmem:[%s1 + $0x508] sm:$0xff]
    %v454 = vld [vmem:[%s1 + $0x510] sm:$0xff]
    %v455 = vld [vmem:[%s1 + $0x518] sm:$0xff]
    %v456 = vld [vmem:[%s1 + $0x520] sm:$0xff]
    %v457 = vld [vmem:[%s1 + $0x528] sm:$0xff]
    %v458 = vld [vmem:[%s1 + $0x530] sm:$0xff]
    %v459 = vld [vmem:[%s1 + $0x538] sm:$0xff]
    %v460 = vld [vmem:[%s1 + $0x540] sm:$0xff]
    %v461 = vld [vmem:[%s1 + $0x548] sm:$0xff]
    %v462 = vld [vmem:[%s1 + $0x550] sm:$0xff]
    %v463 = vld [vmem:[%s1 + $0x558] sm:$0xff]
    %v464 = vld [vmem:[%s1 + $0x560] sm:$0xff]
    %v465 = vld [vmem:[%s1 + $0x568] sm:$0xff]
    %v466 = vld [vmem:[%s1 + $0x570] sm:$0xff]
    %v467 = vld [vmem:[%s1 + $0x578] sm:$0xff]
    %v468 = vld [vmem:[%s1 + $0x580] sm:$0xff]
    %v469 = vld [vmem:[%s1 + $0x588] sm:$0xff]
    %v470 = vld [vmem:[%s1 + $0x590] sm:$0xff]
    %v471 = vld [vmem:[%s1 + $0x598] sm:$0xff]
    %v472 = vld [vmem:[%s1 + $0x5a0] sm:$0xff]
    %v473 = vld [vmem:[%s1 + $0x5a8] sm:$0xff]
    %v474 = vld [vmem:[%s1 + $0x5b0] sm:$0xff]
    %v475 = vld [vmem:[%s1 + $0x5b8] sm:$0xff]
    %v476 = vld [vmem:[%s1 + $0x5c0] sm:$0xff]
    %v477 = vld [vmem:[%s1 + $0x5c8] sm:$0xff]
    %v478 = vld [vmem:[%s1 + $0x5d0] sm:$0xff]
    %v479 = vld [vmem:[%s1 + $0x5d8] sm:$0xff]
    %v480 = vld [vmem:[%s1 + $0x5e0] sm:$0xff]
    %v481 = vld [vmem:[%s1 + $0x5e8] sm:$0xff]
    %v482 = vld [vmem:[%s1 + $0x5f0] sm:$0xff]
    %v483 = vld [vmem:[%s1 + $0x5f8] sm:$0xff]
    %v484 = vld [vmem:[%s1 + $0x600] sm:$0xff]
    %v485 = vld [vmem:[%s1 + $0x608] sm:$0xff]
    %v486 = vld [vmem:[%s1 + $0x610] sm:$0xff]
    %v487 = vld [vmem:[%s1 + $0x618] sm:$0xff]
    %v488 = vld [vmem:[%s1 + $0x620] sm:$0xff]
    %v489 = vld [vmem:[%s1 + $0x628] sm:$0xff]
    %v490 = vld [vmem:[%s1 + $0x630] sm:$0xff]
    %v491 = vld [vmem:[%s1 + $0x638] sm:$0xff]
    %v492 = vld [vmem:[%s1 + $0x640] sm:$0xff]
    %v493 = vld [vmem:[%s1 + $0x648] sm:$0xff]
    %v494 = vld [vmem:[%s1 + $0x650] sm:$0xff]
    %v495 = vld [vmem:[%s1 + $0x658] sm:$0xff]
    %v496 = vld [vmem:[%s1 + $0x660] sm:$0xff]
    %v497 = vld [vmem:[%s1 + $0x668] sm:$0xff]
    %v498 = vld [vmem:[%s1 + $0x670] sm:$0xff]
    %v499 = vld [vmem:[%s1 + $0x678] sm:$0xff]
    %v500 = vld [vmem:[%s1 + $0x680] sm:$0xff]
    %v501 = vld [vmem:[%s1 + $0x688] sm:$0xff]
    %v502 = vld [vmem:[%s1 + $0x690] sm:$0xff]
    %v503 = vld [vmem:[%s1 + $0x698] sm:$0xff]
    %v504 = vld [vmem:[%s1 + $0x6a0] sm:$0xff]
    %v505 = vld [vmem:[%s1 + $0x6a8] sm:$0xff]
    %v506 = vld [vmem:[%s1 + $0x6b0] sm:$0xff]
    %v507 = vld [vmem:[%s1 + $0x6b8] sm:$0xff]
    %v508 = vld [vmem:[%s1 + $0x6c0] sm:$0xff]
    %v509 = vld [vmem:[%s1 + $0x6c8] sm:$0xff]
    %v510 = vld [vmem:[%s1 + $0x6d0] sm:$0xff]
    %v511 = vld [vmem:[%s1 + $0x6d8] sm:$0xff]
    %v512 = vld [vmem:[%s1 + $0x6e0] sm:$0xff]
    %v513 = vld [vmem:[%s1 + $0x6e8] sm:$0xff]
    %v514 = vld [vmem:[%s1 + $0x6f0] sm:$0xff]
    %v515 = vld [vmem:[%s1 + $0x6f8] sm:$0xff]
    %v516 = vld [vmem:[%s1 + $0x700] sm:$0xff]
    %v517 = vld [vmem:[%s1 + $0x708] sm:$0xff]
    %v518 = vld [vmem:[%s1 + $0x710] sm:$0xff]
    %v519 = vld [vmem:[%s1 + $0x718] sm:$0xff]
    %v520 = vld [vmem:[%s1 + $0x720] sm:$0xff]
    %v521 = vld [vmem:[%s1 + $0x728] sm:$0xff]
    %v522 = vld [vmem:[%s1 + $0x730] sm:$0xff]
    %v523 = vld [vmem:[%s1 + $0x738] sm:$0xff]
    %v524 = vld [vmem:[%s1 + $0x740] sm:$0xff]
    %v525 = vld [vmem:[%s1 + $0x748] sm:$0xff]
    %v526 = vld [vmem:[%s1 + $0x750] sm:$0xff]
    %v527 = vld [vmem:[%s1 + $0x758] sm:$0xff]
    %v528 = vld [vmem:[%s1 + $0x760] sm:$0xff]
    %v529 = vld [vmem:[%s1 + $0x768] sm:$0xff]
    %v530 = vld [vmem:[%s1 + $0x770] sm:$0xff]
    %v531 = vld [vmem:[%s1 + $0x778] sm:$0xff]
    %v532 = vld [vmem:[%s1 + $0x780] sm:$0xff]
    %v533 = vld [vmem:[%s1 + $0x788] sm:$0xff]
    %v534 = vld [vmem:[%s1 + $0x790] sm:$0xff]
    %v535 = vld [vmem:[%s1 + $0x798] sm:$0xff]
    %v536 = vld [vmem:[%s1 + $0x7a0] sm:$0xff]
    %v537 = vld [vmem:[%s1 + $0x7a8] sm:$0xff]
    %v538 = vld [vmem:[%s1 + $0x7b0] sm:$0xff]
    %v539 = vld [vmem:[%s1 + $0x7b8] sm:$0xff]
    %v540 = vld [vmem:[%s1 + $0x7c0] sm:$0xff]
    %v541 = vld [vmem:[%s1 + $0x7c8] sm:$0xff]
    %v542 = vld [vmem:[%s1 + $0x7d0] sm:$0xff]
    %v543 = vld [vmem:[%s1 + $0x7d8] sm:$0xff]
    %v544 = vld [vmem:[%s1 + $0x7e0] sm:$0xff]
    %v545 = vld [vmem:[%s1 + $0x7e8] sm:$0xff]
    %v546 = vld [vmem:[%s1 + $0x7f0] sm:$0xff]
    %v547 = vld [vmem:[%s1 + $0x7f8] sm:$0xff]
    %v548 = vld [vmem:[%s1 + $0x800] sm:$0xff]
    %v549 = vld [vmem:[%s1 + $0x808] sm:$0xff]
    %v550 = vld [vmem:[%s1 + $0x810] sm:$0xff]
    %v551 = vld [vmem:[%s1 + $0x818] sm:$0xff]
    %v552 = vld [vmem:[%s1 + $0x820] sm:$0xff]
    %v553 = vld [vmem:[%s1 + $0x828] sm:$0xff]
    %v554 = vld [vmem:[%s1 + $0x830] sm:$0xff]
    %v555 = vld [vmem:[%s1 + $0x838] sm:$0xff]
    %v556 = vld [vmem:[%s1 + $0x840] sm:$0xff]
    %v557 = vld [vmem:[%s1 + $0x848] sm:$0xff]
    %v558 = vld [vmem:[%s1 + $0x850] sm:$0xff]
    %v559 = vld [vmem:[%s1 + $0x858] sm:$0xff]
    %v560 = vld [vmem:[%s1 + $0x860] sm:$0xff]
    %v561 = vld [vmem:[%s1 + $0x868] sm:$0xff]
    %v562 = vld [vmem:[%s1 + $0x870] sm:$0xff]
    %v563 = vld [vmem:[%s1 + $0x878] sm:$0xff]
    %v564 = vld [vmem:[%s1 + $0x880] sm:$0xff]
    %v565 = vld [vmem:[%s1 + $0x888] sm:$0xff]
    %v566 = vld [vmem:[%s1 + $0x890] sm:$0xff]
    %v567 = vld [vmem:[%s1 + $0x898] sm:$0xff]
    %v568 = vld [vmem:[%s1 + $0x8a0] sm:$0xff]
    %v569 = vld [vmem:[%s1 + $0x8a8] sm:$0xff]
    %v570 = vld [vmem:[%s1 + $0x8b0] sm:$0xff]
    %v571 = vld [vmem:[%s1 + $0x8b8] sm:$0xff]
    %v572 = vld [vmem:[%s1 + $0x8c0] sm:$0xff]
    %v573 = vld [vmem:[%s1 + $0x8c8] sm:$0xff]
    %v574 = vld [vmem:[%s1 + $0x8d0] sm:$0xff]
    %v575 = vld [vmem:[%s1 + $0x8d8] sm:$0xff]
    %v576 = vld [vmem:[%s1 + $0x8e0] sm:$0xff]
    %v577 = vld [vmem:[%s1 + $0x8e8] sm:$0xff]
    %v578 = vld [vmem:[%s1 + $0x8f0] sm:$0xff]
    %v579 = vld [vmem:[%s1 + $0x8f8] sm:$0xff]
    %v580 = vld [vmem:[%s1 + $0x900] sm:$0xff]
    %v581 = vld [vmem:[%s1 + $0x908] sm:$0xff]
    %v582 = vld [vmem:[%s1 + $0x910] sm:$0xff]
    %v583 = vld [vmem:[%s1 + $0x918] sm:$0xff]
    %v584 = vld [vmem:[%s1 + $0x920] sm:$0xff]
    %v585 = vld [vmem:[%s1 + $0x928] sm:$0xff]
    %v586 = vld [vmem:[%s1 + $0x930] sm:$0xff]
    %v587 = vld [vmem:[%s1 + $0x938] sm:$0xff]
    %v588 = vld [vmem:[%s1 + $0x940] sm:$0xff]
    %v589 = vld [vmem:[%s1 + $0x948] sm:$0xff]
    %v590 = vld [vmem:[%s1 + $0x950] sm:$0xff]
    %v591 = vld [vmem:[%s1 + $0x958] sm:$0xff]
    %v592 = vld [vmem:[%s1 + $0x960] sm:$0xff]
    %v593 = vld [vmem:[%s1 + $0x968] sm:$0xff]
    %v594 = vld [vmem:[%s1 + $0x970] sm:$0xff]
    %v595 = vld [vmem:[%s1 + $0x978] sm:$0xff]
    %v596 = vld [vmem:[%s1 + $0x980] sm:$0xff]
    %v597 = vld [vmem:[%s1 + $0x988] sm:$0xff]
    %v598 = vld [vmem:[%s1 + $0x990] sm:$0xff]
    %v599 = vld [vmem:[%s1 + $0x998] sm:$0xff]
    %v600 = vld [vmem:[%s1 + $0x9a0] sm:$0xff]
    %v601 = vld [vmem:[%s1 + $0x9a8] sm:$0xff]
    %v602 = vld [vmem:[%s1 + $0x9b0] sm:$0xff]
    %v603 = vld [vmem:[%s1 + $0x9b8] sm:$0xff]
    %v604 = vld [vmem:[%s1 + $0x9c0] sm:$0xff]
    %v605 = vld [vmem:[%s1 + $0x9c8] sm:$0xff]
    %v606 = vld [vmem:[%s1 + $0x9d0] sm:$0xff]
    %v607 = vld [vmem:[%s1 + $0x9d8] sm:$0xff]
    %v608 = vld [vmem:[%s1 + $0x9e0] sm:$0xff]
    %v609 = vld [vmem:[%s1 + $0x9e8] sm:$0xff]
    %v610 = vld [vmem:[%s1 + $0x9f0] sm:$0xff]
    %v611 = vld [vmem:[%s1 + $0x9f8] sm:$0xff]
    %v612 = vld [vmem:[%s1 + $0xa00] sm:$0xff]
    %v613 = vld [vmem:[%s1 + $0xa08] sm:$0xff]
    %v614 = vld [vmem:[%s1 + $0xa10] sm:$0xff]
    %v615 = vld [vmem:[%s1 + $0xa18] sm:$0xff]
    %v616 = vld [vmem:[%s1 + $0xa20] sm:$0xff]
    %v617 = vld [vmem:[%s1 + $0xa28] sm:$0xff]
    %v618 = vld [vmem:[%s1 + $0xa30] sm:$0xff]
    %v619 = vld [vmem:[%s1 + $0xa38] sm:$0xff]
    %v620 = vld [vmem:[%s1 + $0xa40] sm:$0xff]
    %v621 = vld [vmem:[%s1 + $0xa48] sm:$0xff]
    %v622 = vld [vmem:[%s1 + $0xa50] sm:$0xff]
    %v623 = vld [vmem:[%s1 + $0xa58] sm:$0xff]
    %v624 = vld [vmem:[%s1 + $0xa60] sm:$0xff]
    %v625 = vld [vmem:[%s1 + $0xa68] sm:$0xff]
    %v626 = vld [vmem:[%s1 + $0xa70] sm:$0xff]
    %v627 = vld [vmem:[%s1 + $0xa78] sm:$0xff]
    %v628 = vld [vmem:[%s1 + $0xa80] sm:$0xff]
    %v629 = vld [vmem:[%s1 + $0xa88] sm:$0xff]
    %v630 = vld [vmem:[%s1 + $0xa90] sm:$0xff]
    %v631 = vld [vmem:[%s1 + $0xa98] sm:$0xff]
    %v632 = vld [vmem:[%s1 + $0xaa0] sm:$0xff]
    %v633 = vld [vmem:[%s1 + $0xaa8] sm:$0xff]
    %v634 = vld [vmem:[%s1 + $0xab0] sm:$0xff]
    %v635 = vld [vmem:[%s1 + $0xab8] sm:$0xff]
    %v636 = vld [vmem:[%s1 + $0xac0] sm:$0xff]
    %v637 = vld [vmem:[%s1 + $0xac8] sm:$0xff]
    %v638 = vld [vmem:[%s1 + $0xad0] sm:$0xff]
    %v639 = vld [vmem:[%s1 + $0xad8] sm:$0xff]
    %v640 = vld [vmem:[%s1 + $0xae0] sm:$0xff]
    %v641 = vld [vmem:[%s1 + $0xae8] sm:$0xff]
    %v642 = vld [vmem:[%s1 + $0xaf0] sm:$0xff]
    %v643 = vld [vmem:[%s1 + $0xaf8] sm:$0xff]
    %v644 = vld [vmem:[%s1 + $0xb00] sm:$0xff]
    %v645 = vld [vmem:[%s1 + $0xb08] sm:$0xff]
    %v646 = vld [vmem:[%s1 + $0xb10] sm:$0xff]
    %v647 = vld [vmem:[%s1 + $0xb18] sm:$0xff]
    %v648 = vld [vmem:[%s1 + $0xb20] sm:$0xff]
    %v649 = vld [vmem:[%s1 + $0xb28] sm:$0xff]
    %v650 = vld [vmem:[%s1 + $0xb30] sm:$0xff]
    %v651 = vld [vmem:[%s1 + $0xb38] sm:$0xff]
    %v652 = vld [vmem:[%s1 + $0xb40] sm:$0xff]
    %v653 = vld [vmem:[%s1 + $0xb48] sm:$0xff]
    %v654 = vld [vmem:[%s1 + $0xb50] sm:$0xff]
    %v655 = vld [vmem:[%s1 + $0xb58] sm:$0xff]
    %v656 = vld [vmem:[%s1 + $0xb60] sm:$0xff]
    %v657 = vld [vmem:[%s1 + $0xb68] sm:$0xff]
    %v658 = vld [vmem:[%s1 + $0xb70] sm:$0xff]
    %v659 = vld [vmem:[%s1 + $0xb78] sm:$0xff]
    %v660 = vld [vmem:[%s1 + $0xb80] sm:$0xff]
    %v661 = vld [vmem:[%s1 + $0xb88] sm:$0xff]
    %v662 = vld [vmem:[%s1 + $0xb90] sm:$0xff]
    %v663 = vld [vmem:[%s1 + $0xb98] sm:$0xff]
    %v664 = vld [vmem:[%s1 + $0xba0] sm:$0xff]
    %v665 = vld [vmem:[%s1 + $0xba8] sm:$0xff]
    %v666 = vld [vmem:[%s1 + $0xbb0] sm:$0xff]
    %v667 = vld [vmem:[%s1 + $0xbb8] sm:$0xff]
    %v668 = vld [vmem:[%s1 + $0xbc0] sm:$0xff]
    %v669 = vld [vmem:[%s1 + $0xbc8] sm:$0xff]
    %v670 = vld [vmem:[%s1 + $0xbd0] sm:$0xff]
    %v671 = vld [vmem:[%s1 + $0xbd8] sm:$0xff]
    %v672 = vld [vmem:[%s1 + $0xbe0] sm:$0xff]
    %v673 = vld [vmem:[%s1 + $0xbe8] sm:$0xff]
    %v674 = vld [vmem:[%s1 + $0xbf0] sm:$0xff]
    %v675 = vld [vmem:[%s1 + $0xbf8] sm:$0xff]
    %v676 = vld [vmem:[%s1 + $0xc00] sm:$0xff]
    %v677 = vld [vmem:[%s1 + $0xc08] sm:$0xff]
    %v678 = vld [vmem:[%s1 + $0xc10] sm:$0xff]
    %v679 = vld [vmem:[%s1 + $0xc18] sm:$0xff]
    %v680 = vld [vmem:[%s1 + $0xc20] sm:$0xff]
    %v681 = vld [vmem:[%s1 + $0xc28] sm:$0xff]
    %v682 = vld [vmem:[%s1 + $0xc30] sm:$0xff]
    %v683 = vld [vmem:[%s1 + $0xc38] sm:$0xff]
    %v684 = vld [vmem:[%s1 + $0xc40] sm:$0xff]
    %v685 = vld [vmem:[%s1 + $0xc48] sm:$0xff]
    %v686 = vld [vmem:[%s1 + $0xc50] sm:$0xff]
    %v687 = vld [vmem:[%s1 + $0xc58] sm:$0xff]
    %v688 = vld [vmem:[%s1 + $0xc60] sm:$0xff]
    %v689 = vld [vmem:[%s1 + $0xc68] sm:$0xff]
    %v690 = vld [vmem:[%s1 + $0xc70] sm:$0xff]
    %v691 = vld [vmem:[%s1 + $0xc78] sm:$0xff]
    %v692 = vld [vmem:[%s1 + $0xc80] sm:$0xff]
    %v693 = vld [vmem:[%s1 + $0xc88] sm:$0xff]
    %v694 = vld [vmem:[%s1 + $0xc90] sm:$0xff]
    %v695 = vld [vmem:[%s1 + $0xc98] sm:$0xff]
    %v696 = vld [vmem:[%s1 + $0xca0] sm:$0xff]
    %v697 = vld [vmem:[%s1 + $0xca8] sm:$0xff]
    %v698 = vld [vmem:[%s1 + $0xcb0] sm:$0xff]
    %v699 = vld [vmem:[%s1 + $0xcb8] sm:$0xff]
    %v700 = vld [vmem:[%s1 + $0xcc0] sm:$0xff]
    %v701 = vld [vmem:[%s1 + $0xcc8] sm:$0xff]
    %v702 = vld [vmem:[%s1 + $0xcd0] sm:$0xff]
    %v703 = vld [vmem:[%s1 + $0xcd8] sm:$0xff]
    %v704 = vld [vmem:[%s1 + $0xce0] sm:$0xff]
    %v705 = vld [vmem:[%s1 + $0xce8] sm:$0xff]
    %v706 = vld [vmem:[%s1 + $0xcf0] sm:$0xff]
    %v707 = vld [vmem:[%s1 + $0xcf8] sm:$0xff]
    %v708 = vld [vmem:[%s1 + $0xd00] sm:$0xff]
    %v709 = vld [vmem:[%s1 + $0xd08] sm:$0xff]
    %v710 = vld [vmem:[%s1 + $0xd10] sm:$0xff]
    %v711 = vld [vmem:[%s1 + $0xd18] sm:$0xff]
    %v712 = vld [vmem:[%s1 + $0xd20] sm:$0xff]
    %v713 = vld [vmem:[%s1 + $0xd28] sm:$0xff]
    %v714 = vld [vmem:[%s1 + $0xd30] sm:$0xff]
    %v715 = vld [vmem:[%s1 + $0xd38] sm:$0xff]
    %v716 = vld [vmem:[%s1 + $0xd40] sm:$0xff]
    %v717 = vld [vmem:[%s1 + $0xd48] sm:$0xff]
    %v718 = vld [vmem:[%s1 + $0xd50] sm:$0xff]
    %v719 = vld [vmem:[%s1 + $0xd58] sm:$0xff]
    %v720 = vld [vmem:[%s1 + $0xd60] sm:$0xff]
    %v721 = vld [vmem:[%s1 + $0xd68] sm:$0xff]
    %v722 = vld [vmem:[%s1 + $0xd70] sm:$0xff]
    %v723 = vld [vmem:[%s1 + $0xd78] sm:$0xff]
    %v724 = vld [vmem:[%s1 + $0xd80] sm:$0xff]
    %v725 = vld [vmem:[%s1 + $0xd88] sm:$0xff]
    %v726 = vld [vmem:[%s1 + $0xd90] sm:$0xff]
    %v727 = vld [vmem:[%s1 + $0xd98] sm:$0xff]
    %v728 = vld [vmem:[%s1 + $0xda0] sm:$0xff]
    %v729 = vld [vmem:[%s1 + $0xda8] sm:$0xff]
    %v730 = vld [vmem:[%s1 + $0xdb0] sm:$0xff]
    %v731 = vld [vmem:[%s1 + $0xdb8] sm:$0xff]
    %v732 = vld [vmem:[%s1 + $0xdc0] sm:$0xff]
    %v733 = vld [vmem:[%s1 + $0xdc8] sm:$0xff]
    %v734 = vld [vmem:[%s1 + $0xdd0] sm:$0xff]
    %v735 = vld [vmem:[%s1 + $0xdd8] sm:$0xff]
    %v736 = vld [vmem:[%s1 + $0xde0] sm:$0xff]
    %v737 = vld [vmem:[%s1 + $0xde8] sm:$0xff]
    %v738 = vld [vmem:[%s1 + $0xdf0] sm:$0xff]
    %v739 = vld [vmem:[%s1 + $0xdf8] sm:$0xff]
    %v740 = vld [vmem:[%s1 + $0xe00] sm:$0xff]
    %v741 = vld [vmem:[%s1 + $0xe08] sm:$0xff]
    %v742 = vld [vmem:[%s1 + $0xe10] sm:$0xff]
    %v743 = vld [vmem:[%s1 + $0xe18] sm:$0xff]
    %v744 = vld [vmem:[%s1 + $0xe20] sm:$0xff]
    %v745 = vld [vmem:[%s1 + $0xe28] sm:$0xff]
    %v746 = vld [vmem:[%s1 + $0xe30] sm:$0xff]
    %v747 = vld [vmem:[%s1 + $0xe38] sm:$0xff]
    %v748 = vld [vmem:[%s1 + $0xe40] sm:$0xff]
    %v749 = vld [vmem:[%s1 + $0xe48] sm:$0xff]
    %v750 = vld [vmem:[%s1 + $0xe50] sm:$0xff]
    %v751 = vld [vmem:[%s1 + $0xe58] sm:$0xff]
    %v752 = vld [vmem:[%s1 + $0xe60] sm:$0xff]
    %v753 = vld [vmem:[%s1 + $0xe68] sm:$0xff]
    %v754 = vld [vmem:[%s1 + $0xe70] sm:$0xff]
    %v755 = vld [vmem:[%s1 + $0xe78] sm:$0xff]
    %v756 = vld [vmem:[%s1 + $0xe80] sm:$0xff]
    %v757 = vld [vmem:[%s1 + $0xe88] sm:$0xff]
    %v758 = vld [vmem:[%s1 + $0xe90] sm:$0xff]
    %v759 = vld [vmem:[%s1 + $0xe98] sm:$0xff]
    %v760 = vld [vmem:[%s1 + $0xea0] sm:$0xff]
    %v761 = vld [vmem:[%s1 + $0xea8] sm:$0xff]
    %v762 = vld [vmem:[%s1 + $0xeb0] sm:$0xff]
    %v763 = vld [vmem:[%s1 + $0xeb8] sm:$0xff]
    %v764 = vld [vmem:[%s1 + $0xec0] sm:$0xff]
    %v765 = vld [vmem:[%s1 + $0xec8] sm:$0xff]
    %v766 = vld [vmem:[%s1 + $0xed0] sm:$0xff]
    %v767 = vld [vmem:[%s1 + $0xed8] sm:$0xff]
    %v768 = vld [vmem:[%s1 + $0xee0] sm:$0xff]
    %v769 = vld [vmem:[%s1 + $0xee8] sm:$0xff]
    %v770 = vld [vmem:[%s1 + $0xef0] sm:$0xff]
    %v771 = vld [vmem:[%s1 + $0xef8] sm:$0xff]
    %v772 = vld [vmem:[%s1 + $0xf00] sm:$0xff]
    %v773 = vld [vmem:[%s1 + $0xf08] sm:$0xff]
    %v774 = vld [vmem:[%s1 + $0xf10] sm:$0xff]
    %v775 = vld [vmem:[%s1 + $0xf18] sm:$0xff]
    %v776 = vld [vmem:[%s1 + $0xf20] sm:$0xff]
    %v777 = vld [vmem:[%s1 + $0xf28] sm:$0xff]
    %v778 = vld [vmem:[%s1 + $0xf30] sm:$0xff]
    %v779 = vld [vmem:[%s1 + $0xf38] sm:$0xff]
    %v780 = vld [vmem:[%s1 + $0xf40] sm:$0xff]
    %v781 = vld [vmem:[%s1 + $0xf48] sm:$0xff]
    %v782 = vld [vmem:[%s1 + $0xf50] sm:$0xff]
    %v783 = vld [vmem:[%s1 + $0xf58] sm:$0xff]
    %v784 = vld [vmem:[%s1 + $0xf60] sm:$0xff]
    %v785 = vld [vmem:[%s1 + $0xf68] sm:$0xff]
    %v786 = vld [vmem:[%s1 + $0xf70] sm:$0xff]
    %v787 = vld [vmem:[%s1 + $0xf78] sm:$0xff]
    %v788 = vld [vmem:[%s1 + $0xf80] sm:$0xff]
    %v789 = vld [vmem:[%s1 + $0xf88] sm:$0xff]
    %v790 = vld [vmem:[%s1 + $0xf90] sm:$0xff]
    %v791 = vld [vmem:[%s1 + $0xf98] sm:$0xff]
    %v792 = vld [vmem:[%s1 + $0xfa0] sm:$0xff]
    %v793 = vld [vmem:[%s1 + $0xfa8] sm:$0xff]
    %v794 = vld [vmem:[%s1 + $0xfb0] sm:$0xff]
    %v795 = vld [vmem:[%s1 + $0xfb8] sm:$0xff]
    %v796 = vld [vmem:[%s1 + $0xfc0] sm:$0xff]
    %v797 = vld [vmem:[%s1 + $0xfc8] sm:$0xff]
    %v798 = vld [vmem:[%s1 + $0xfd0] sm:$0xff]
    %v799 = vld [vmem:[%s1 + $0xfd8] sm:$0xff]
    %v800 = vld [vmem:[%s1 + $0xfe0] sm:$0xff]
    %v801 = vld [vmem:[%s1 + $0xfe8] sm:$0xff]
    %v802 = vld [vmem:[%s1 + $0xff0] sm:$0xff]
    %v803 = vld [vmem:[%s1 + $0xff8] sm:$0xff]
    %v804 = vld [vmem:[%s2] sm:$0x1]
    %v806 = vlaneseq
    %v807 = vshrl.u32 %v806, 7
    %v808 = vsub.s32 0, %v807
    %v809 = vrot.slane %v804, %v808
    %v819 = vcombine.high %v284, %v284
    %v821 = vunpack.c.l.s4 1983009808
    %v822 = vunpack.c.0.s8 %v821
    %v823 = vlaneseq
    %v824 = vshrl.u32 %v823, 7
    %v825 = vsub.s32 %v822, %v824
    %v826 = vrot.slane %v284, %v825
    %v828 = vunpack.c.l.s4 1983009808
    %v829 = vunpack.c.0.s8 %v828
    %v830 = vlaneseq
    %v831 = vshrl.u32 %v830, 7
    %v832 = vsub.s32 %v829, %v831
    %v833 = vrot.slane %v819, %v832
    %v834 = vcombine.high %v826, %v826
    %v835 = vcombine.high %v833, %v833
    %v836 = vcombine.high %v285, %v285
    %v838 = vunpack.c.l.s4 1983009808
    %v839 = vunpack.c.0.s8 %v838
    %v840 = vlaneseq
    %v841 = vshrl.u32 %v840, 7
    %v842 = vsub.s32 %v839, %v841
    %v843 = vrot.slane %v285, %v842
    %v845 = vunpack.c.l.s4 1983009808
    %v846 = vunpack.c.0.s8 %v845
    %v847 = vlaneseq
    %v848 = vshrl.u32 %v847, 7
    %v849 = vsub.s32 %v846, %v848
    %v850 = vrot.slane %v836, %v849
    %v851 = vcombine.high %v843, %v843
    %v852 = vcombine.high %v850, %v850
    %v853 = vcombine.high %v286, %v286
    %v855 = vunpack.c.l.s4 1983009808
    %v856 = vunpack.c.0.s8 %v855
    %v857 = vlaneseq
    %v858 = vshrl.u32 %v857, 7
    %v859 = vsub.s32 %v856, %v858
    %v860 = vrot.slane %v286, %v859
    %v862 = vunpack.c.l.s4 1983009808
    %v863 = vunpack.c.0.s8 %v862
    %v864 = vlaneseq
    %v865 = vshrl.u32 %v864, 7
    %v866 = vsub.s32 %v863, %v865
    %v867 = vrot.slane %v853, %v866
    %v868 = vcombine.high %v860, %v860
    %v869 = vcombine.high %v867, %v867
    %v870 = vcombine.high %v287, %v287
    %v872 = vunpack.c.l.s4 1983009808
    %v873 = vunpack.c.0.s8 %v872
    %v874 = vlaneseq
    %v875 = vshrl.u32 %v874, 7
    %v876 = vsub.s32 %v873, %v875
    %v877 = vrot.slane %v287, %v876
    %v879 = vunpack.c.l.s4 1983009808
    %v880 = vunpack.c.0.s8 %v879
    %v881 = vlaneseq
    %v882 = vshrl.u32 %v881, 7
    %v883 = vsub.s32 %v880, %v882
    %v884 = vrot.slane %v870, %v883
    %v885 = vcombine.high %v877, %v877
    %v886 = vcombine.high %v884, %v884
    %v887 = vcombine.high %v288, %v288
    %v889 = vunpack.c.l.s4 1983009808
    %v890 = vunpack.c.0.s8 %v889
    %v891 = vlaneseq
    %v892 = vshrl.u32 %v891, 7
    %v893 = vsub.s32 %v890, %v892
    %v894 = vrot.slane %v288, %v893
    %v896 = vunpack.c.l.s4 1983009808
    %v897 = vunpack.c.0.s8 %v896
    %v898 = vlaneseq
    %v899 = vshrl.u32 %v898, 7
    %v900 = vsub.s32 %v897, %v899
    %v901 = vrot.slane %v887, %v900
    %v902 = vcombine.high %v894, %v894
    %v903 = vcombine.high %v901, %v901
    %v904 = vcombine.high %v289, %v289
    %v906 = vunpack.c.l.s4 1983009808
    %v907 = vunpack.c.0.s8 %v906
    %v908 = vlaneseq
    %v909 = vshrl.u32 %v908, 7
    %v910 = vsub.s32 %v907, %v909
    %v911 = vrot.slane %v289, %v910
    %v913 = vunpack.c.l.s4 1983009808
    %v914 = vunpack.c.0.s8 %v913
    %v915 = vlaneseq
    %v916 = vshrl.u32 %v915, 7
    %v917 = vsub.s32 %v914, %v916
    %v918 = vrot.slane %v904, %v917
    %v919 = vcombine.high %v911, %v911
    %v920 = vcombine.high %v918, %v918
    %v921 = vcombine.high %v290, %v290
    %v923 = vunpack.c.l.s4 1983009808
    %v924 = vunpack.c.0.s8 %v923
    %v925 = vlaneseq
    %v926 = vshrl.u32 %v925, 7
    %v927 = vsub.s32 %v924, %v926
    %v928 = vrot.slane %v290, %v927
    %v930 = vunpack.c.l.s4 1983009808
    %v931 = vunpack.c.0.s8 %v930
    %v932 = vlaneseq
    %v933 = vshrl.u32 %v932, 7
    %v934 = vsub.s32 %v931, %v933
    %v935 = vrot.slane %v921, %v934
    %v936 = vcombine.high %v928, %v928
    %v937 = vcombine.high %v935, %v935
    %v938 = vcombine.high %v291, %v291
    %v940 = vunpack.c.l.s4 1983009808
    %v941 = vunpack.c.0.s8 %v940
    %v942 = vlaneseq
    %v943 = vshrl.u32 %v942, 7
    %v944 = vsub.s32 %v941, %v943
    %v945 = vrot.slane %v291, %v944
    %v947 = vunpack.c.l.s4 1983009808
    %v948 = vunpack.c.0.s8 %v947
    %v949 = vlaneseq
    %v950 = vshrl.u32 %v949, 7
    %v951 = vsub.s32 %v948, %v950
    %v952 = vrot.slane %v938, %v951
    %v953 = vcombine.high %v945, %v945
    %v954 = vcombine.high %v952, %v952
    %987 = vmatprep.subr.mxu0 0.0
    %988 = vmatpush1.msra.mxu0 %v292
    %989 = vmatprep.subr.mxu0 0.0
    %990 = vmatpush1.msra.mxu0 %v293
    %991 = vmatprep.subr.mxu0 0.0
    %992 = vmatpush1.msra.mxu0 %v294
    %993 = vmatprep.subr.mxu0 0.0
    %994 = vmatpush1.msra.mxu0 %v295
    %995 = vmatprep.subr.mxu0 0.0
    %996 = vmatpush1.msra.mxu0 %v296
    %997 = vmatprep.subr.mxu0 0.0
    %998 = vmatpush1.msra.mxu0 %v297
    %999 = vmatprep.subr.mxu0 0.0
    %1000 = vmatpush1.msra.mxu0 %v298
    %1001 = vmatprep.subr.mxu0 0.0
    %1002 = vmatpush1.msra.mxu0 %v299
    %1003 = vmatprep.subr.mxu0 0.0
    %1004 = vmatpush1.msra.mxu0 %v300
    %1005 = vmatprep.subr.mxu0 0.0
    %1006 = vmatpush1.msra.mxu0 %v301
    %1007 = vmatprep.subr.mxu0 0.0
    %1008 = vmatpush1.msra.mxu0 %v302
    %1009 = vmatprep.subr.mxu0 0.0
    %1010 = vmatpush1.msra.mxu0 %v303
    %1011 = vmatprep.subr.mxu0 0.0
    %1012 = vmatpush1.msra.mxu0 %v304
    %1013 = vmatprep.subr.mxu0 0.0
    %1014 = vmatpush1.msra.mxu0 %v305
    %1015 = vmatprep.subr.mxu0 0.0
    %1016 = vmatpush1.msra.mxu0 %v306
    %1017 = vmatprep.subr.mxu0 0.0
    %1018 = vmatpush1.msra.mxu0 %v307
    %1019 = vmatprep.subr.mxu0 0.0
    %1020 = vmatpush1.msra.mxu0 %v308
    %1021 = vmatprep.subr.mxu0 0.0
    %1022 = vmatpush1.msra.mxu0 %v309
    %1023 = vmatprep.subr.mxu0 0.0
    %1024 = vmatpush1.msra.mxu0 %v310
    %1025 = vmatprep.subr.mxu0 0.0
    %1026 = vmatpush1.msra.mxu0 %v311
    %1027 = vmatprep.subr.mxu0 0.0
    %1028 = vmatpush1.msra.mxu0 %v312
    %1029 = vmatprep.subr.mxu0 0.0
    %1030 = vmatpush1.msra.mxu0 %v313
    %1031 = vmatprep.subr.mxu0 0.0
    %1032 = vmatpush1.msra.mxu0 %v314
    %1033 = vmatprep.subr.mxu0 0.0
    %1034 = vmatpush1.msra.mxu0 %v315
    %1035 = vmatprep.subr.mxu0 0.0
    %1036 = vmatpush1.msra.mxu0 %v316
    %1037 = vmatprep.subr.mxu0 0.0
    %1038 = vmatpush1.msra.mxu0 %v317
    %1039 = vmatprep.subr.mxu0 0.0
    %1040 = vmatpush1.msra.mxu0 %v318
    %1041 = vmatprep.subr.mxu0 0.0
    %1042 = vmatpush1.msra.mxu0 %v319
    %1043 = vmatprep.subr.mxu0 0.0
    %1044 = vmatpush1.msra.mxu0 %v320
    %1045 = vmatprep.subr.mxu0 0.0
    %1046 = vmatpush1.msra.mxu0 %v321
    %1047 = vmatprep.subr.mxu0 0.0
    %1048 = vmatpush1.msra.mxu0 %v322
    %1049 = vmatprep.subr.mxu0 0.0
    %1050 = vmatpush1.msra.mxu0 %v323
    %1051 = vmatprep.mubr.f32.mxu0 %v834
    %1052 = vmatmul.mubr.f32.gmra.mrb[0].mxu0 %v826
    %v1053 = vpop.f32.mrb[0].mxu0
    %v1054 = vadd.f32 %v809, %v1053
    %v1055 = vpop.f32.mrb[0].mxu0
    %1056 = vdwg.mxu0
    %1057 = vmatprep.subr.mxu0 0.0
    %1058 = vmatpush1.msra.mxu0 %v324
    %1059 = vmatprep.subr.mxu0 0.0
    %1060 = vmatpush1.msra.mxu0 %v325
    %1061 = vmatprep.subr.mxu0 0.0
    %1062 = vmatpush1.msra.mxu0 %v326
    %1063 = vmatprep.subr.mxu0 0.0
    %1064 = vmatpush1.msra.mxu0 %v327
    %1065 = vmatprep.subr.mxu0 0.0
    %1066 = vmatpush1.msra.mxu0 %v328
    %1067 = vmatprep.subr.mxu0 0.0
    %1068 = vmatpush1.msra.mxu0 %v329
    %1069 = vmatprep.subr.mxu0 0.0
    %1070 = vmatpush1.msra.mxu0 %v330
    %1071 = vmatprep.subr.mxu0 0.0
    %1072 = vmatpush1.msra.mxu0 %v331
    %1073 = vmatprep.subr.mxu0 0.0
    %1074 = vmatpush1.msra.mxu0 %v332
    %1075 = vmatprep.subr.mxu0 0.0
    %1076 = vmatpush1.msra.mxu0 %v333
    %1077 = vmatprep.subr.mxu0 0.0
    %1078 = vmatpush1.msra.mxu0 %v334
    %1079 = vmatprep.subr.mxu0 0.0
    %1080 = vmatpush1.msra.mxu0 %v335
    %1081 = vmatprep.subr.mxu0 0.0
    %1082 = vmatpush1.msra.mxu0 %v336
    %1083 = vmatprep.subr.mxu0 0.0
    %1084 = vmatpush1.msra.mxu0 %v337
    %1085 = vmatprep.subr.mxu0 0.0
    %1086 = vmatpush1.msra.mxu0 %v338
    %1087 = vmatprep.subr.mxu0 0.0
    %1088 = vmatpush1.msra.mxu0 %v339
    %1089 = vmatprep.subr.mxu0 0.0
    %1090 = vmatpush1.msra.mxu0 %v340
    %1091 = vmatprep.subr.mxu0 0.0
    %1092 = vmatpush1.msra.mxu0 %v341
    %1093 = vmatprep.subr.mxu0 0.0
    %1094 = vmatpush1.msra.mxu0 %v342
    %1095 = vmatprep.subr.mxu0 0.0
    %1096 = vmatpush1.msra.mxu0 %v343
    %1097 = vmatprep.subr.mxu0 0.0
    %1098 = vmatpush1.msra.mxu0 %v344
    %1099 = vmatprep.subr.mxu0 0.0
    %1100 = vmatpush1.msra.mxu0 %v345
    %1101 = vmatprep.subr.mxu0 0.0
    %1102 = vmatpush1.msra.mxu0 %v346
    %1103 = vmatprep.subr.mxu0 0.0
    %1104 = vmatpush1.msra.mxu0 %v347
    %1105 = vmatprep.subr.mxu0 0.0
    %1106 = vmatpush1.msra.mxu0 %v348
    %1107 = vmatprep.subr.mxu0 0.0
    %1108 = vmatpush1.msra.mxu0 %v349
    %1109 = vmatprep.subr.mxu0 0.0
    %1110 = vmatpush1.msra.mxu0 %v350
    %1111 = vmatprep.subr.mxu0 0.0
    %1112 = vmatpush1.msra.mxu0 %v351
    %1113 = vmatprep.subr.mxu0 0.0
    %1114 = vmatpush1.msra.mxu0 %v352
    %1115 = vmatprep.subr.mxu0 0.0
    %1116 = vmatpush1.msra.mxu0 %v353
    %1117 = vmatprep.subr.mxu0 0.0
    %1118 = vmatpush1.msra.mxu0 %v354
    %1119 = vmatprep.subr.mxu0 0.0
    %1120 = vmatpush1.msra.mxu0 %v355
    %1121 = vmatprep.mubr.f32.mxu0 %v835
    %1122 = vmatmul.mubr.f32.gmra.mrb[0].mxu0 %v833
    %v1123 = vpop.f32.mrb[0].mxu0
    %v1124 = vadd.f32 %v1054, %v1123
    %v1125 = vpop.f32.mrb[0].mxu0
    %1126 = vdwg.mxu0
    %1127 = vmatprep.subr.mxu0 0.0
    %1128 = vmatpush1.msra.mxu0 %v356
    %1129 = vmatprep.subr.mxu0 0.0
    %1130 = vmatpush1.msra.mxu0 %v357
    %1131 = vmatprep.subr.mxu0 0.0
    %1132 = vmatpush1.msra.mxu0 %v358
    %1133 = vmatprep.subr.mxu0 0.0
    %1134 = vmatpush1.msra.mxu0 %v359
    %1135 = vmatprep.subr.mxu0 0.0
    %1136 = vmatpush1.msra.mxu0 %v360
    %1137 = vmatprep.subr.mxu0 0.0
    %1138 = vmatpush1.msra.mxu0 %v361
    %1139 = vmatprep.subr.mxu0 0.0
    %1140 = vmatpush1.msra.mxu0 %v362
    %1141 = vmatprep.subr.mxu0 0.0
    %1142 = vmatpush1.msra.mxu0 %v363
    %1143 = vmatprep.subr.mxu0 0.0
    %1144 = vmatpush1.msra.mxu0 %v364
    %1145 = vmatprep.subr.mxu0 0.0
    %1146 = vmatpush1.msra.mxu0 %v365
    %1147 = vmatprep.subr.mxu0 0.0
    %1148 = vmatpush1.msra.mxu0 %v366
    %1149 = vmatprep.subr.mxu0 0.0
    %1150 = vmatpush1.msra.mxu0 %v367
    %1151 = vmatprep.subr.mxu0 0.0
    %1152 = vmatpush1.msra.mxu0 %v368
    %1153 = vmatprep.subr.mxu0 0.0
    %1154 = vmatpush1.msra.mxu0 %v369
    %1155 = vmatprep.subr.mxu0 0.0
    %1156 = vmatpush1.msra.mxu0 %v370
    %1157 = vmatprep.subr.mxu0 0.0
    %1158 = vmatpush1.msra.mxu0 %v371
    %1159 = vmatprep.subr.mxu0 0.0
    %1160 = vmatpush1.msra.mxu0 %v372
    %1161 = vmatprep.subr.mxu0 0.0
    %1162 = vmatpush1.msra.mxu0 %v373
    %1163 = vmatprep.subr.mxu0 0.0
    %1164 = vmatpush1.msra.mxu0 %v374
    %1165 = vmatprep.subr.mxu0 0.0
    %1166 = vmatpush1.msra.mxu0 %v375
    %1167 = vmatprep.subr.mxu0 0.0
    %1168 = vmatpush1.msra.mxu0 %v376
    %1169 = vmatprep.subr.mxu0 0.0
    %1170 = vmatpush1.msra.mxu0 %v377
    %1171 = vmatprep.subr.mxu0 0.0
    %1172 = vmatpush1.msra.mxu0 %v378
    %1173 = vmatprep.subr.mxu0 0.0
    %1174 = vmatpush1.msra.mxu0 %v379
    %1175 = vmatprep.subr.mxu0 0.0
    %1176 = vmatpush1.msra.mxu0 %v380
    %1177 = vmatprep.subr.mxu0 0.0
    %1178 = vmatpush1.msra.mxu0 %v381
    %1179 = vmatprep.subr.mxu0 0.0
    %1180 = vmatpush1.msra.mxu0 %v382
    %1181 = vmatprep.subr.mxu0 0.0
    %1182 = vmatpush1.msra.mxu0 %v383
    %1183 = vmatprep.subr.mxu0 0.0
    %1184 = vmatpush1.msra.mxu0 %v384
    %1185 = vmatprep.subr.mxu0 0.0
    %1186 = vmatpush1.msra.mxu0 %v385
    %1187 = vmatprep.subr.mxu0 0.0
    %1188 = vmatpush1.msra.mxu0 %v386
    %1189 = vmatprep.subr.mxu0 0.0
    %1190 = vmatpush1.msra.mxu0 %v387
    %1191 = vmatprep.mubr.f32.mxu0 %v851
    %1192 = vmatmul.mubr.f32.gmra.mrb[0].mxu0 %v843
    %v1193 = vpop.f32.mrb[0].mxu0
    %v1194 = vadd.f32 %v1124, %v1193
    %v1195 = vpop.f32.mrb[0].mxu0
    %1196 = vdwg.mxu0
    %1197 = vmatprep.subr.mxu0 0.0
    %1198 = vmatpush1.msra.mxu0 %v388
    %1199 = vmatprep.subr.mxu0 0.0
    %1200 = vmatpush1.msra.mxu0 %v389
    %1201 = vmatprep.subr.mxu0 0.0
    %1202 = vmatpush1.msra.mxu0 %v390
    %1203 = vmatprep.subr.mxu0 0.0
    %1204 = vmatpush1.msra.mxu0 %v391
    %1205 = vmatprep.subr.mxu0 0.0
    %1206 = vmatpush1.msra.mxu0 %v392
    %1207 = vmatprep.subr.mxu0 0.0
    %1208 = vmatpush1.msra.mxu0 %v393
    %1209 = vmatprep.subr.mxu0 0.0
    %1210 = vmatpush1.msra.mxu0 %v394
    %1211 = vmatprep.subr.mxu0 0.0
    %1212 = vmatpush1.msra.mxu0 %v395
    %1213 = vmatprep.subr.mxu0 0.0
    %1214 = vmatpush1.msra.mxu0 %v396
    %1215 = vmatprep.subr.mxu0 0.0
    %1216 = vmatpush1.msra.mxu0 %v397
    %1217 = vmatprep.subr.mxu0 0.0
    %1218 = vmatpush1.msra.mxu0 %v398
    %1219 = vmatprep.subr.mxu0 0.0
    %1220 = vmatpush1.msra.mxu0 %v399
    %1221 = vmatprep.subr.mxu0 0.0
    %1222 = vmatpush1.msra.mxu0 %v400
    %1223 = vmatprep.subr.mxu0 0.0
    %1224 = vmatpush1.msra.mxu0 %v401
    %1225 = vmatprep.subr.mxu0 0.0
    %1226 = vmatpush1.msra.mxu0 %v402
    %1227 = vmatprep.subr.mxu0 0.0
    %1228 = vmatpush1.msra.mxu0 %v403
    %1229 = vmatprep.subr.mxu0 0.0
    %1230 = vmatpush1.msra.mxu0 %v404
    %1231 = vmatprep.subr.mxu0 0.0
    %1232 = vmatpush1.msra.mxu0 %v405
    %1233 = vmatprep.subr.mxu0 0.0
    %1234 = vmatpush1.msra.mxu0 %v406
    %1235 = vmatprep.subr.mxu0 0.0
    %1236 = vmatpush1.msra.mxu0 %v407
    %1237 = vmatprep.subr.mxu0 0.0
    %1238 = vmatpush1.msra.mxu0 %v408
    %1239 = vmatprep.subr.mxu0 0.0
    %1240 = vmatpush1.msra.mxu0 %v409
    %1241 = vmatprep.subr.mxu0 0.0
    %1242 = vmatpush1.msra.mxu0 %v410
    %1243 = vmatprep.subr.mxu0 0.0
    %1244 = vmatpush1.msra.mxu0 %v411
    %1245 = vmatprep.subr.mxu0 0.0
    %1246 = vmatpush1.msra.mxu0 %v412
    %1247 = vmatprep.subr.mxu0 0.0
    %1248 = vmatpush1.msra.mxu0 %v413
    %1249 = vmatprep.subr.mxu0 0.0
    %1250 = vmatpush1.msra.mxu0 %v414
    %1251 = vmatprep.subr.mxu0 0.0
    %1252 = vmatpush1.msra.mxu0 %v415
    %1253 = vmatprep.subr.mxu0 0.0
    %1254 = vmatpush1.msra.mxu0 %v416
    %1255 = vmatprep.subr.mxu0 0.0
    %1256 = vmatpush1.msra.mxu0 %v417
    %1257 = vmatprep.subr.mxu0 0.0
    %1258 = vmatpush1.msra.mxu0 %v418
    %1259 = vmatprep.subr.mxu0 0.0
    %1260 = vmatpush1.msra.mxu0 %v419
    %1261 = vmatprep.mubr.f32.mxu0 %v852
    %1262 = vmatmul.mubr.f32.gmra.mrb[0].mxu0 %v850
    %v1263 = vpop.f32.mrb[0].mxu0
    %v1264 = vadd.f32 %v1194, %v1263
    %v1265 = vpop.f32.mrb[0].mxu0
    %1266 = vdwg.mxu0
    %1267 = vmatprep.subr.mxu0 0.0
    %1268 = vmatpush1.msra.mxu0 %v420
    %1269 = vmatprep.subr.mxu0 0.0
    %1270 = vmatpush1.msra.mxu0 %v421
    %1271 = vmatprep.subr.mxu0 0.0
    %1272 = vmatpush1.msra.mxu0 %v422
    %1273 = vmatprep.subr.mxu0 0.0
    %1274 = vmatpush1.msra.mxu0 %v423
    %1275 = vmatprep.subr.mxu0 0.0
    %1276 = vmatpush1.msra.mxu0 %v424
    %1277 = vmatprep.subr.mxu0 0.0
    %1278 = vmatpush1.msra.mxu0 %v425
    %1279 = vmatprep.subr.mxu0 0.0
    %1280 = vmatpush1.msra.mxu0 %v426
    %1281 = vmatprep.subr.mxu0 0.0
    %1282 = vmatpush1.msra.mxu0 %v427
    %1283 = vmatprep.subr.mxu0 0.0
    %1284 = vmatpush1.msra.mxu0 %v428
    %1285 = vmatprep.subr.mxu0 0.0
    %1286 = vmatpush1.msra.mxu0 %v429
    %1287 = vmatprep.subr.mxu0 0.0
    %1288 = vmatpush1.msra.mxu0 %v430
    %1289 = vmatprep.subr.mxu0 0.0
    %1290 = vmatpush1.msra.mxu0 %v431
    %1291 = vmatprep.subr.mxu0 0.0
    %1292 = vmatpush1.msra.mxu0 %v432
    %1293 = vmatprep.subr.mxu0 0.0
    %1294 = vmatpush1.msra.mxu0 %v433
    %1295 = vmatprep.subr.mxu0 0.0
    %1296 = vmatpush1.msra.mxu0 %v434
    %1297 = vmatprep.subr.mxu0 0.0
    %1298 = vmatpush1.msra.mxu0 %v435
    %1299 = vmatprep.subr.mxu0 0.0
    %1300 = vmatpush1.msra.mxu0 %v436
    %1301 = vmatprep.subr.mxu0 0.0
    %1302 = vmatpush1.msra.mxu0 %v437
    %1303 = vmatprep.subr.mxu0 0.0
    %1304 = vmatpush1.msra.mxu0 %v438
    %1305 = vmatprep.subr.mxu0 0.0
    %1306 = vmatpush1.msra.mxu0 %v439
    %1307 = vmatprep.subr.mxu0 0.0
    %1308 = vmatpush1.msra.mxu0 %v440
    %1309 = vmatprep.subr.mxu0 0.0
    %1310 = vmatpush1.msra.mxu0 %v441
    %1311 = vmatprep.subr.mxu0 0.0
    %1312 = vmatpush1.msra.mxu0 %v442
    %1313 = vmatprep.subr.mxu0 0.0
    %1314 = vmatpush1.msra.mxu0 %v443
    %1315 = vmatprep.subr.mxu0 0.0
    %1316 = vmatpush1.msra.mxu0 %v444
    %1317 = vmatprep.subr.mxu0 0.0
    %1318 = vmatpush1.msra.mxu0 %v445
    %1319 = vmatprep.subr.mxu0 0.0
    %1320 = vmatpush1.msra.mxu0 %v446
    %1321 = vmatprep.subr.mxu0 0.0
    %1322 = vmatpush1.msra.mxu0 %v447
    %1323 = vmatprep.subr.mxu0 0.0
    %1324 = vmatpush1.msra.mxu0 %v448
    %1325 = vmatprep.subr.mxu0 0.0
    %1326 = vmatpush1.msra.mxu0 %v449
    %1327 = vmatprep.subr.mxu0 0.0
    %1328 = vmatpush1.msra.mxu0 %v450
    %1329 = vmatprep.subr.mxu0 0.0
    %1330 = vmatpush1.msra.mxu0 %v451
    %1331 = vmatprep.mubr.f32.mxu0 %v868
    %1332 = vmatmul.mubr.f32.gmra.mrb[0].mxu0 %v860
    %v1333 = vpop.f32.mrb[0].mxu0
    %v1334 = vadd.f32 %v1264, %v1333
    %v1335 = vpop.f32.mrb[0].mxu0
    %1336 = vdwg.mxu0
    %1337 = vmatprep.subr.mxu0 0.0
    %1338 = vmatpush1.msra.mxu0 %v452
    %1339 = vmatprep.subr.mxu0 0.0
    %1340 = vmatpush1.msra.mxu0 %v453
    %1341 = vmatprep.subr.mxu0 0.0
    %1342 = vmatpush1.msra.mxu0 %v454
    %1343 = vmatprep.subr.mxu0 0.0
    %1344 = vmatpush1.msra.mxu0 %v455
    %1345 = vmatprep.subr.mxu0 0.0
    %1346 = vmatpush1.msra.mxu0 %v456
    %1347 = vmatprep.subr.mxu0 0.0
    %1348 = vmatpush1.msra.mxu0 %v457
    %1349 = vmatprep.subr.mxu0 0.0
    %1350 = vmatpush1.msra.mxu0 %v458
    %1351 = vmatprep.subr.mxu0 0.0
    %1352 = vmatpush1.msra.mxu0 %v459
    %1353 = vmatprep.subr.mxu0 0.0
    %1354 = vmatpush1.msra.mxu0 %v460
    %1355 = vmatprep.subr.mxu0 0.0
    %1356 = vmatpush1.msra.mxu0 %v461
    %1357 = vmatprep.subr.mxu0 0.0
    %1358 = vmatpush1.msra.mxu0 %v462
    %1359 = vmatprep.subr.mxu0 0.0
    %1360 = vmatpush1.msra.mxu0 %v463
    %1361 = vmatprep.subr.mxu0 0.0
    %1362 = vmatpush1.msra.mxu0 %v464
    %1363 = vmatprep.subr.mxu0 0.0
    %1364 = vmatpush1.msra.mxu0 %v465
    %1365 = vmatprep.subr.mxu0 0.0
    %1366 = vmatpush1.msra.mxu0 %v466
    %1367 = vmatprep.subr.mxu0 0.0
    %1368 = vmatpush1.msra.mxu0 %v467
    %1369 = vmatprep.subr.mxu0 0.0
    %1370 = vmatpush1.msra.mxu0 %v468
    %1371 = vmatprep.subr.mxu0 0.0
    %1372 = vmatpush1.msra.mxu0 %v469
    %1373 = vmatprep.subr.mxu0 0.0
    %1374 = vmatpush1.msra.mxu0 %v470
    %1375 = vmatprep.subr.mxu0 0.0
    %1376 = vmatpush1.msra.mxu0 %v471
    %1377 = vmatprep.subr.mxu0 0.0
    %1378 = vmatpush1.msra.mxu0 %v472
    %1379 = vmatprep.subr.mxu0 0.0
    %1380 = vmatpush1.msra.mxu0 %v473
    %1381 = vmatprep.subr.mxu0 0.0
    %1382 = vmatpush1.msra.mxu0 %v474
    %1383 = vmatprep.subr.mxu0 0.0
    %1384 = vmatpush1.msra.mxu0 %v475
    %1385 = vmatprep.subr.mxu0 0.0
    %1386 = vmatpush1.msra.mxu0 %v476
    %1387 = vmatprep.subr.mxu0 0.0
    %1388 = vmatpush1.msra.mxu0 %v477
    %1389 = vmatprep.subr.mxu0 0.0
    %1390 = vmatpush1.msra.mxu0 %v478
    %1391 = vmatprep.subr.mxu0 0.0
    %1392 = vmatpush1.msra.mxu0 %v479
    %1393 = vmatprep.subr.mxu0 0.0
    %1394 = vmatpush1.msra.mxu0 %v480
    %1395 = vmatprep.subr.mxu0 0.0
    %1396 = vmatpush1.msra.mxu0 %v481
    %1397 = vmatprep.subr.mxu0 0.0
    %1398 = vmatpush1.msra.mxu0 %v482
    %1399 = vmatprep.subr.mxu0 0.0
    %1400 = vmatpush1.msra.mxu0 %v483
    %1401 = vmatprep.mubr.f32.mxu0 %v869
    %1402 = vmatmul.mubr.f32.gmra.mrb[0].mxu0 %v867
    %v1403 = vpop.f32.mrb[0].mxu0
    %v1404 = vadd.f32 %v1334, %v1403
    %v1405 = vpop.f32.mrb[0].mxu0
    %1406 = vdwg.mxu0
    %1407 = vmatprep.subr.mxu0 0.0
    %1408 = vmatpush1.msra.mxu0 %v484
    %1409 = vmatprep.subr.mxu0 0.0
    %1410 = vmatpush1.msra.mxu0 %v485
    %1411 = vmatprep.subr.mxu0 0.0
    %1412 = vmatpush1.msra.mxu0 %v486
    %1413 = vmatprep.subr.mxu0 0.0
    %1414 = vmatpush1.msra.mxu0 %v487
    %1415 = vmatprep.subr.mxu0 0.0
    %1416 = vmatpush1.msra.mxu0 %v488
    %1417 = vmatprep.subr.mxu0 0.0
    %1418 = vmatpush1.msra.mxu0 %v489
    %1419 = vmatprep.subr.mxu0 0.0
    %1420 = vmatpush1.msra.mxu0 %v490
    %1421 = vmatprep.subr.mxu0 0.0
    %1422 = vmatpush1.msra.mxu0 %v491
    %1423 = vmatprep.subr.mxu0 0.0
    %1424 = vmatpush1.msra.mxu0 %v492
    %1425 = vmatprep.subr.mxu0 0.0
    %1426 = vmatpush1.msra.mxu0 %v493
    %1427 = vmatprep.subr.mxu0 0.0
    %1428 = vmatpush1.msra.mxu0 %v494
    %1429 = vmatprep.subr.mxu0 0.0
    %1430 = vmatpush1.msra.mxu0 %v495
    %1431 = vmatprep.subr.mxu0 0.0
    %1432 = vmatpush1.msra.mxu0 %v496
    %1433 = vmatprep.subr.mxu0 0.0
    %1434 = vmatpush1.msra.mxu0 %v497
    %1435 = vmatprep.subr.mxu0 0.0
    %1436 = vmatpush1.msra.mxu0 %v498
    %1437 = vmatprep.subr.mxu0 0.0
    %1438 = vmatpush1.msra.mxu0 %v499
    %1439 = vmatprep.subr.mxu0 0.0
    %1440 = vmatpush1.msra.mxu0 %v500
    %1441 = vmatprep.subr.mxu0 0.0
    %1442 = vmatpush1.msra.mxu0 %v501
    %1443 = vmatprep.subr.mxu0 0.0
    %1444 = vmatpush1.msra.mxu0 %v502
    %1445 = vmatprep.subr.mxu0 0.0
    %1446 = vmatpush1.msra.mxu0 %v503
    %1447 = vmatprep.subr.mxu0 0.0
    %1448 = vmatpush1.msra.mxu0 %v504
    %1449 = vmatprep.subr.mxu0 0.0
    %1450 = vmatpush1.msra.mxu0 %v505
    %1451 = vmatprep.subr.mxu0 0.0
    %1452 = vmatpush1.msra.mxu0 %v506
    %1453 = vmatprep.subr.mxu0 0.0
    %1454 = vmatpush1.msra.mxu0 %v507
    %1455 = vmatprep.subr.mxu0 0.0
    %1456 = vmatpush1.msra.mxu0 %v508
    %1457 = vmatprep.subr.mxu0 0.0
    %1458 = vmatpush1.msra.mxu0 %v509
    %1459 = vmatprep.subr.mxu0 0.0
    %1460 = vmatpush1.msra.mxu0 %v510
    %1461 = vmatprep.subr.mxu0 0.0
    %1462 = vmatpush1.msra.mxu0 %v511
    %1463 = vmatprep.subr.mxu0 0.0
    %1464 = vmatpush1.msra.mxu0 %v512
    %1465 = vmatprep.subr.mxu0 0.0
    %1466 = vmatpush1.msra.mxu0 %v513
    %1467 = vmatprep.subr.mxu0 0.0
    %1468 = vmatpush1.msra.mxu0 %v514
    %1469 = vmatprep.subr.mxu0 0.0
    %1470 = vmatpush1.msra.mxu0 %v515
    %1471 = vmatprep.mubr.f32.mxu0 %v885
    %1472 = vmatmul.mubr.f32.gmra.mrb[0].mxu0 %v877
    %v1473 = vpop.f32.mrb[0].mxu0
    %v1474 = vadd.f32 %v1404, %v1473
    %v1475 = vpop.f32.mrb[0].mxu0
    %1476 = vdwg.mxu0
    %1477 = vmatprep.subr.mxu0 0.0
    %1478 = vmatpush1.msra.mxu0 %v516
    %1479 = vmatprep.subr.mxu0 0.0
    %1480 = vmatpush1.msra.mxu0 %v517
    %1481 = vmatprep.subr.mxu0 0.0
    %1482 = vmatpush1.msra.mxu0 %v518
    %1483 = vmatprep.subr.mxu0 0.0
    %1484 = vmatpush1.msra.mxu0 %v519
    %1485 = vmatprep.subr.mxu0 0.0
    %1486 = vmatpush1.msra.mxu0 %v520
    %1487 = vmatprep.subr.mxu0 0.0
    %1488 = vmatpush1.msra.mxu0 %v521
    %1489 = vmatprep.subr.mxu0 0.0
    %1490 = vmatpush1.msra.mxu0 %v522
    %1491 = vmatprep.subr.mxu0 0.0
    %1492 = vmatpush1.msra.mxu0 %v523
    %1493 = vmatprep.subr.mxu0 0.0
    %1494 = vmatpush1.msra.mxu0 %v524
    %1495 = vmatprep.subr.mxu0 0.0
    %1496 = vmatpush1.msra.mxu0 %v525
    %1497 = vmatprep.subr.mxu0 0.0
    %1498 = vmatpush1.msra.mxu0 %v526
    %1499 = vmatprep.subr.mxu0 0.0
    %1500 = vmatpush1.msra.mxu0 %v527
    %1501 = vmatprep.subr.mxu0 0.0
    %1502 = vmatpush1.msra.mxu0 %v528
    %1503 = vmatprep.subr.mxu0 0.0
    %1504 = vmatpush1.msra.mxu0 %v529
    %1505 = vmatprep.subr.mxu0 0.0
    %1506 = vmatpush1.msra.mxu0 %v530
    %1507 = vmatprep.subr.mxu0 0.0
    %1508 = vmatpush1.msra.mxu0 %v531
    %1509 = vmatprep.subr.mxu0 0.0
    %1510 = vmatpush1.msra.mxu0 %v532
    %1511 = vmatprep.subr.mxu0 0.0
    %1512 = vmatpush1.msra.mxu0 %v533
    %1513 = vmatprep.subr.mxu0 0.0
    %1514 = vmatpush1.msra.mxu0 %v534
    %1515 = vmatprep.subr.mxu0 0.0
    %1516 = vmatpush1.msra.mxu0 %v535
    %1517 = vmatprep.subr.mxu0 0.0
    %1518 = vmatpush1.msra.mxu0 %v536
    %1519 = vmatprep.subr.mxu0 0.0
    %1520 = vmatpush1.msra.mxu0 %v537
    %1521 = vmatprep.subr.mxu0 0.0
    %1522 = vmatpush1.msra.mxu0 %v538
    %1523 = vmatprep.subr.mxu0 0.0
    %1524 = vmatpush1.msra.mxu0 %v539
    %1525 = vmatprep.subr.mxu0 0.0
    %1526 = vmatpush1.msra.mxu0 %v540
    %1527 = vmatprep.subr.mxu0 0.0
    %1528 = vmatpush1.msra.mxu0 %v541
    %1529 = vmatprep.subr.mxu0 0.0
    %1530 = vmatpush1.msra.mxu0 %v542
    %1531 = vmatprep.subr.mxu0 0.0
    %1532 = vmatpush1.msra.mxu0 %v543
    %1533 = vmatprep.subr.mxu0 0.0
    %1534 = vmatpush1.msra.mxu0 %v544
    %1535 = vmatprep.subr.mxu0 0.0
    %1536 = vmatpush1.msra.mxu0 %v545
    %1537 = vmatprep.subr.mxu0 0.0
    %1538 = vmatpush1.msra.mxu0 %v546
    %1539 = vmatprep.subr.mxu0 0.0
    %1540 = vmatpush1.msra.mxu0 %v547
    %1541 = vmatprep.mubr.f32.mxu0 %v886
    %1542 = vmatmul.mubr.f32.gmra.mrb[0].mxu0 %v884
    %v1543 = vpop.f32.mrb[0].mxu0
    %v1544 = vadd.f32 %v1474, %v1543
    %v1545 = vpop.f32.mrb[0].mxu0
    %1546 = vdwg.mxu0
    %1547 = vmatprep.subr.mxu0 0.0
    %1548 = vmatpush1.msra.mxu0 %v548
    %1549 = vmatprep.subr.mxu0 0.0
    %1550 = vmatpush1.msra.mxu0 %v549
    %1551 = vmatprep.subr.mxu0 0.0
    %1552 = vmatpush1.msra.mxu0 %v550
    %1553 = vmatprep.subr.mxu0 0.0
    %1554 = vmatpush1.msra.mxu0 %v551
    %1555 = vmatprep.subr.mxu0 0.0
    %1556 = vmatpush1.msra.mxu0 %v552
    %1557 = vmatprep.subr.mxu0 0.0
    %1558 = vmatpush1.msra.mxu0 %v553
    %1559 = vmatprep.subr.mxu0 0.0
    %1560 = vmatpush1.msra.mxu0 %v554
    %1561 = vmatprep.subr.mxu0 0.0
    %1562 = vmatpush1.msra.mxu0 %v555
    %1563 = vmatprep.subr.mxu0 0.0
    %1564 = vmatpush1.msra.mxu0 %v556
    %1565 = vmatprep.subr.mxu0 0.0
    %1566 = vmatpush1.msra.mxu0 %v557
    %1567 = vmatprep.subr.mxu0 0.0
    %1568 = vmatpush1.msra.mxu0 %v558
    %1569 = vmatprep.subr.mxu0 0.0
    %1570 = vmatpush1.msra.mxu0 %v559
    %1571 = vmatprep.subr.mxu0 0.0
    %1572 = vmatpush1.msra.mxu0 %v560
    %1573 = vmatprep.subr.mxu0 0.0
    %1574 = vmatpush1.msra.mxu0 %v561
    %1575 = vmatprep.subr.mxu0 0.0
    %1576 = vmatpush1.msra.mxu0 %v562
    %1577 = vmatprep.subr.mxu0 0.0
    %1578 = vmatpush1.msra.mxu0 %v563
    %1579 = vmatprep.subr.mxu0 0.0
    %1580 = vmatpush1.msra.mxu0 %v564
    %1581 = vmatprep.subr.mxu0 0.0
    %1582 = vmatpush1.msra.mxu0 %v565
    %1583 = vmatprep.subr.mxu0 0.0
    %1584 = vmatpush1.msra.mxu0 %v566
    %1585 = vmatprep.subr.mxu0 0.0
    %1586 = vmatpush1.msra.mxu0 %v567
    %1587 = vmatprep.subr.mxu0 0.0
    %1588 = vmatpush1.msra.mxu0 %v568
    %1589 = vmatprep.subr.mxu0 0.0
    %1590 = vmatpush1.msra.mxu0 %v569
    %1591 = vmatprep.subr.mxu0 0.0
    %1592 = vmatpush1.msra.mxu0 %v570
    %1593 = vmatprep.subr.mxu0 0.0
    %1594 = vmatpush1.msra.mxu0 %v571
    %1595 = vmatprep.subr.mxu0 0.0
    %1596 = vmatpush1.msra.mxu0 %v572
    %1597 = vmatprep.subr.mxu0 0.0
    %1598 = vmatpush1.msra.mxu0 %v573
    %1599 = vmatprep.subr.mxu0 0.0
    %1600 = vmatpush1.msra.mxu0 %v574
    %1601 = vmatprep.subr.mxu0 0.0
    %1602 = vmatpush1.msra.mxu0 %v575
    %1603 = vmatprep.subr.mxu0 0.0
    %1604 = vmatpush1.msra.mxu0 %v576
    %1605 = vmatprep.subr.mxu0 0.0
    %1606 = vmatpush1.msra.mxu0 %v577
    %1607 = vmatprep.subr.mxu0 0.0
    %1608 = vmatpush1.msra.mxu0 %v578
    %1609 = vmatprep.subr.mxu0 0.0
    %1610 = vmatpush1.msra.mxu0 %v579
    %1611 = vmatprep.mubr.f32.mxu0 %v902
    %1612 = vmatmul.mubr.f32.gmra.mrb[0].mxu0 %v894
    %v1613 = vpop.f32.mrb[0].mxu0
    %v1614 = vadd.f32 %v1544, %v1613
    %v1615 = vpop.f32.mrb[0].mxu0
    %1616 = vdwg.mxu0
    %1617 = vmatprep.subr.mxu0 0.0
    %1618 = vmatpush1.msra.mxu0 %v580
    %1619 = vmatprep.subr.mxu0 0.0
    %1620 = vmatpush1.msra.mxu0 %v581
    %1621 = vmatprep.subr.mxu0 0.0
    %1622 = vmatpush1.msra.mxu0 %v582
    %1623 = vmatprep.subr.mxu0 0.0
    %1624 = vmatpush1.msra.mxu0 %v583
    %1625 = vmatprep.subr.mxu0 0.0
    %1626 = vmatpush1.msra.mxu0 %v584
    %1627 = vmatprep.subr.mxu0 0.0
    %1628 = vmatpush1.msra.mxu0 %v585
    %1629 = vmatprep.subr.mxu0 0.0
    %1630 = vmatpush1.msra.mxu0 %v586
    %1631 = vmatprep.subr.mxu0 0.0
    %1632 = vmatpush1.msra.mxu0 %v587
    %1633 = vmatprep.subr.mxu0 0.0
    %1634 = vmatpush1.msra.mxu0 %v588
    %1635 = vmatprep.subr.mxu0 0.0
    %1636 = vmatpush1.msra.mxu0 %v589
    %1637 = vmatprep.subr.mxu0 0.0
    %1638 = vmatpush1.msra.mxu0 %v590
    %1639 = vmatprep.subr.mxu0 0.0
    %1640 = vmatpush1.msra.mxu0 %v591
    %1641 = vmatprep.subr.mxu0 0.0
    %1642 = vmatpush1.msra.mxu0 %v592
    %1643 = vmatprep.subr.mxu0 0.0
    %1644 = vmatpush1.msra.mxu0 %v593
    %1645 = vmatprep.subr.mxu0 0.0
    %1646 = vmatpush1.msra.mxu0 %v594
    %1647 = vmatprep.subr.mxu0 0.0
    %1648 = vmatpush1.msra.mxu0 %v595
    %1649 = vmatprep.subr.mxu0 0.0
    %1650 = vmatpush1.msra.mxu0 %v596
    %1651 = vmatprep.subr.mxu0 0.0
    %1652 = vmatpush1.msra.mxu0 %v597
    %1653 = vmatprep.subr.mxu0 0.0
    %1654 = vmatpush1.msra.mxu0 %v598
    %1655 = vmatprep.subr.mxu0 0.0
    %1656 = vmatpush1.msra.mxu0 %v599
    %1657 = vmatprep.subr.mxu0 0.0
    %1658 = vmatpush1.msra.mxu0 %v600
    %1659 = vmatprep.subr.mxu0 0.0
    %1660 = vmatpush1.msra.mxu0 %v601
    %1661 = vmatprep.subr.mxu0 0.0
    %1662 = vmatpush1.msra.mxu0 %v602
    %1663 = vmatprep.subr.mxu0 0.0
    %1664 = vmatpush1.msra.mxu0 %v603
    %1665 = vmatprep.subr.mxu0 0.0
    %1666 = vmatpush1.msra.mxu0 %v604
    %1667 = vmatprep.subr.mxu0 0.0
    %1668 = vmatpush1.msra.mxu0 %v605
    %1669 = vmatprep.subr.mxu0 0.0
    %1670 = vmatpush1.msra.mxu0 %v606
    %1671 = vmatprep.subr.mxu0 0.0
    %1672 = vmatpush1.msra.mxu0 %v607
    %1673 = vmatprep.subr.mxu0 0.0
    %1674 = vmatpush1.msra.mxu0 %v608
    %1675 = vmatprep.subr.mxu0 0.0
    %1676 = vmatpush1.msra.mxu0 %v609
    %1677 = vmatprep.subr.mxu0 0.0
    %1678 = vmatpush1.msra.mxu0 %v610
    %1679 = vmatprep.subr.mxu0 0.0
    %1680 = vmatpush1.msra.mxu0 %v611
    %1681 = vmatprep.mubr.f32.mxu0 %v903
    %1682 = vmatmul.mubr.f32.gmra.mrb[0].mxu0 %v901
    %v1683 = vpop.f32.mrb[0].mxu0
    %v1684 = vadd.f32 %v1614, %v1683
    %v1685 = vpop.f32.mrb[0].mxu0
    %1686 = vdwg.mxu0
    %1687 = vmatprep.subr.mxu0 0.0
    %1688 = vmatpush1.msra.mxu0 %v612
    %1689 = vmatprep.subr.mxu0 0.0
    %1690 = vmatpush1.msra.mxu0 %v613
    %1691 = vmatprep.subr.mxu0 0.0
    %1692 = vmatpush1.msra.mxu0 %v614
    %1693 = vmatprep.subr.mxu0 0.0
    %1694 = vmatpush1.msra.mxu0 %v615
    %1695 = vmatprep.subr.mxu0 0.0
    %1696 = vmatpush1.msra.mxu0 %v616
    %1697 = vmatprep.subr.mxu0 0.0
    %1698 = vmatpush1.msra.mxu0 %v617
    %1699 = vmatprep.subr.mxu0 0.0
    %1700 = vmatpush1.msra.mxu0 %v618
    %1701 = vmatprep.subr.mxu0 0.0
    %1702 = vmatpush1.msra.mxu0 %v619
    %1703 = vmatprep.subr.mxu0 0.0
    %1704 = vmatpush1.msra.mxu0 %v620
    %1705 = vmatprep.subr.mxu0 0.0
    %1706 = vmatpush1.msra.mxu0 %v621
    %1707 = vmatprep.subr.mxu0 0.0
    %1708 = vmatpush1.msra.mxu0 %v622
    %1709 = vmatprep.subr.mxu0 0.0
    %1710 = vmatpush1.msra.mxu0 %v623
    %1711 = vmatprep.subr.mxu0 0.0
    %1712 = vmatpush1.msra.mxu0 %v624
    %1713 = vmatprep.subr.mxu0 0.0
    %1714 = vmatpush1.msra.mxu0 %v625
    %1715 = vmatprep.subr.mxu0 0.0
    %1716 = vmatpush1.msra.mxu0 %v626
    %1717 = vmatprep.subr.mxu0 0.0
    %1718 = vmatpush1.msra.mxu0 %v627
    %1719 = vmatprep.subr.mxu0 0.0
    %1720 = vmatpush1.msra.mxu0 %v628
    %1721 = vmatprep.subr.mxu0 0.0
    %1722 = vmatpush1.msra.mxu0 %v629
    %1723 = vmatprep.subr.mxu0 0.0
    %1724 = vmatpush1.msra.mxu0 %v630
    %1725 = vmatprep.subr.mxu0 0.0
    %1726 = vmatpush1.msra.mxu0 %v631
    %1727 = vmatprep.subr.mxu0 0.0
    %1728 = vmatpush1.msra.mxu0 %v632
    %1729 = vmatprep.subr.mxu0 0.0
    %1730 = vmatpush1.msra.mxu0 %v633
    %1731 = vmatprep.subr.mxu0 0.0
    %1732 = vmatpush1.msra.mxu0 %v634
    %1733 = vmatprep.subr.mxu0 0.0
    %1734 = vmatpush1.msra.mxu0 %v635
    %1735 = vmatprep.subr.mxu0 0.0
    %1736 = vmatpush1.msra.mxu0 %v636
    %1737 = vmatprep.subr.mxu0 0.0
    %1738 = vmatpush1.msra.mxu0 %v637
    %1739 = vmatprep.subr.mxu0 0.0
    %1740 = vmatpush1.msra.mxu0 %v638
    %1741 = vmatprep.subr.mxu0 0.0
    %1742 = vmatpush1.msra.mxu0 %v639
    %1743 = vmatprep.subr.mxu0 0.0
    %1744 = vmatpush1.msra.mxu0 %v640
    %1745 = vmatprep.subr.mxu0 0.0
    %1746 = vmatpush1.msra.mxu0 %v641
    %1747 = vmatprep.subr.mxu0 0.0
    %1748 = vmatpush1.msra.mxu0 %v642
    %1749 = vmatprep.subr.mxu0 0.0
    %1750 = vmatpush1.msra.mxu0 %v643
    %1751 = vmatprep.mubr.f32.mxu0 %v919
    %1752 = vmatmul.mubr.f32.gmra.mrb[0].mxu0 %v911
    %v1753 = vpop.f32.mrb[0].mxu0
    %v1754 = vadd.f32 %v1684, %v1753
    %v1755 = vpop.f32.mrb[0].mxu0
    %1756 = vdwg.mxu0
    %1757 = vmatprep.subr.mxu0 0.0
    %1758 = vmatpush1.msra.mxu0 %v644
    %1759 = vmatprep.subr.mxu0 0.0
    %1760 = vmatpush1.msra.mxu0 %v645
    %1761 = vmatprep.subr.mxu0 0.0
    %1762 = vmatpush1.msra.mxu0 %v646
    %1763 = vmatprep.subr.mxu0 0.0
    %1764 = vmatpush1.msra.mxu0 %v647
    %1765 = vmatprep.subr.mxu0 0.0
    %1766 = vmatpush1.msra.mxu0 %v648
    %1767 = vmatprep.subr.mxu0 0.0
    %1768 = vmatpush1.msra.mxu0 %v649
    %1769 = vmatprep.subr.mxu0 0.0
    %1770 = vmatpush1.msra.mxu0 %v650
    %1771 = vmatprep.subr.mxu0 0.0
    %1772 = vmatpush1.msra.mxu0 %v651
    %1773 = vmatprep.subr.mxu0 0.0
    %1774 = vmatpush1.msra.mxu0 %v652
    %1775 = vmatprep.subr.mxu0 0.0
    %1776 = vmatpush1.msra.mxu0 %v653
    %1777 = vmatprep.subr.mxu0 0.0
    %1778 = vmatpush1.msra.mxu0 %v654
    %1779 = vmatprep.subr.mxu0 0.0
    %1780 = vmatpush1.msra.mxu0 %v655
    %1781 = vmatprep.subr.mxu0 0.0
    %1782 = vmatpush1.msra.mxu0 %v656
    %1783 = vmatprep.subr.mxu0 0.0
    %1784 = vmatpush1.msra.mxu0 %v657
    %1785 = vmatprep.subr.mxu0 0.0
    %1786 = vmatpush1.msra.mxu0 %v658
    %1787 = vmatprep.subr.mxu0 0.0
    %1788 = vmatpush1.msra.mxu0 %v659
    %1789 = vmatprep.subr.mxu0 0.0
    %1790 = vmatpush1.msra.mxu0 %v660
    %1791 = vmatprep.subr.mxu0 0.0
    %1792 = vmatpush1.msra.mxu0 %v661
    %1793 = vmatprep.subr.mxu0 0.0
    %1794 = vmatpush1.msra.mxu0 %v662
    %1795 = vmatprep.subr.mxu0 0.0
    %1796 = vmatpush1.msra.mxu0 %v663
    %1797 = vmatprep.subr.mxu0 0.0
    %1798 = vmatpush1.msra.mxu0 %v664
    %1799 = vmatprep.subr.mxu0 0.0
    %1800 = vmatpush1.msra.mxu0 %v665
    %1801 = vmatprep.subr.mxu0 0.0
    %1802 = vmatpush1.msra.mxu0 %v666
    %1803 = vmatprep.subr.mxu0 0.0
    %1804 = vmatpush1.msra.mxu0 %v667
    %1805 = vmatprep.subr.mxu0 0.0
    %1806 = vmatpush1.msra.mxu0 %v668
    %1807 = vmatprep.subr.mxu0 0.0
    %1808 = vmatpush1.msra.mxu0 %v669
    %1809 = vmatprep.subr.mxu0 0.0
    %1810 = vmatpush1.msra.mxu0 %v670
    %1811 = vmatprep.subr.mxu0 0.0
    %1812 = vmatpush1.msra.mxu0 %v671
    %1813 = vmatprep.subr.mxu0 0.0
    %1814 = vmatpush1.msra.mxu0 %v672
    %1815 = vmatprep.subr.mxu0 0.0
    %1816 = vmatpush1.msra.mxu0 %v673
    %1817 = vmatprep.subr.mxu0 0.0
    %1818 = vmatpush1.msra.mxu0 %v674
    %1819 = vmatprep.subr.mxu0 0.0
    %1820 = vmatpush1.msra.mxu0 %v675
    %1821 = vmatprep.mubr.f32.mxu0 %v920
    %1822 = vmatmul.mubr.f32.gmra.mrb[0].mxu0 %v918
    %v1823 = vpop.f32.mrb[0].mxu0
    %v1824 = vadd.f32 %v1754, %v1823
    %v1825 = vpop.f32.mrb[0].mxu0
    %1826 = vdwg.mxu0
    %1827 = vmatprep.subr.mxu0 0.0
    %1828 = vmatpush1.msra.mxu0 %v676
    %1829 = vmatprep.subr.mxu0 0.0
    %1830 = vmatpush1.msra.mxu0 %v677
    %1831 = vmatprep.subr.mxu0 0.0
    %1832 = vmatpush1.msra.mxu0 %v678
    %1833 = vmatprep.subr.mxu0 0.0
    %1834 = vmatpush1.msra.mxu0 %v679
    %1835 = vmatprep.subr.mxu0 0.0
    %1836 = vmatpush1.msra.mxu0 %v680
    %1837 = vmatprep.subr.mxu0 0.0
    %1838 = vmatpush1.msra.mxu0 %v681
    %1839 = vmatprep.subr.mxu0 0.0
    %1840 = vmatpush1.msra.mxu0 %v682
    %1841 = vmatprep.subr.mxu0 0.0
    %1842 = vmatpush1.msra.mxu0 %v683
    %1843 = vmatprep.subr.mxu0 0.0
    %1844 = vmatpush1.msra.mxu0 %v684
    %1845 = vmatprep.subr.mxu0 0.0
    %1846 = vmatpush1.msra.mxu0 %v685
    %1847 = vmatprep.subr.mxu0 0.0
    %1848 = vmatpush1.msra.mxu0 %v686
    %1849 = vmatprep.subr.mxu0 0.0
    %1850 = vmatpush1.msra.mxu0 %v687
    %1851 = vmatprep.subr.mxu0 0.0
    %1852 = vmatpush1.msra.mxu0 %v688
    %1853 = vmatprep.subr.mxu0 0.0
    %1854 = vmatpush1.msra.mxu0 %v689
    %1855 = vmatprep.subr.mxu0 0.0
    %1856 = vmatpush1.msra.mxu0 %v690
    %1857 = vmatprep.subr.mxu0 0.0
    %1858 = vmatpush1.msra.mxu0 %v691
    %1859 = vmatprep.subr.mxu0 0.0
    %1860 = vmatpush1.msra.mxu0 %v692
    %1861 = vmatprep.subr.mxu0 0.0
    %1862 = vmatpush1.msra.mxu0 %v693
    %1863 = vmatprep.subr.mxu0 0.0
    %1864 = vmatpush1.msra.mxu0 %v694
    %1865 = vmatprep.subr.mxu0 0.0
    %1866 = vmatpush1.msra.mxu0 %v695
    %1867 = vmatprep.subr.mxu0 0.0
    %1868 = vmatpush1.msra.mxu0 %v696
    %1869 = vmatprep.subr.mxu0 0.0
    %1870 = vmatpush1.msra.mxu0 %v697
    %1871 = vmatprep.subr.mxu0 0.0
    %1872 = vmatpush1.msra.mxu0 %v698
    %1873 = vmatprep.subr.mxu0 0.0
    %1874 = vmatpush1.msra.mxu0 %v699
    %1875 = vmatprep.subr.mxu0 0.0
    %1876 = vmatpush1.msra.mxu0 %v700
    %1877 = vmatprep.subr.mxu0 0.0
    %1878 = vmatpush1.msra.mxu0 %v701
    %1879 = vmatprep.subr.mxu0 0.0
    %1880 = vmatpush1.msra.mxu0 %v702
    %1881 = vmatprep.subr.mxu0 0.0
    %1882 = vmatpush1.msra.mxu0 %v703
    %1883 = vmatprep.subr.mxu0 0.0
    %1884 = vmatpush1.msra.mxu0 %v704
    %1885 = vmatprep.subr.mxu0 0.0
    %1886 = vmatpush1.msra.mxu0 %v705
    %1887 = vmatprep.subr.mxu0 0.0
    %1888 = vmatpush1.msra.mxu0 %v706
    %1889 = vmatprep.subr.mxu0 0.0
    %1890 = vmatpush1.msra.mxu0 %v707
    %1891 = vmatprep.mubr.f32.mxu0 %v936
    %1892 = vmatmul.mubr.f32.gmra.mrb[0].mxu0 %v928
    %v1893 = vpop.f32.mrb[0].mxu0
    %v1894 = vadd.f32 %v1824, %v1893
    %v1895 = vpop.f32.mrb[0].mxu0
    %1896 = vdwg.mxu0
    %1897 = vmatprep.subr.mxu0 0.0
    %1898 = vmatpush1.msra.mxu0 %v708
    %1899 = vmatprep.subr.mxu0 0.0
    %1900 = vmatpush1.msra.mxu0 %v709
    %1901 = vmatprep.subr.mxu0 0.0
    %1902 = vmatpush1.msra.mxu0 %v710
    %1903 = vmatprep.subr.mxu0 0.0
    %1904 = vmatpush1.msra.mxu0 %v711
    %1905 = vmatprep.subr.mxu0 0.0
    %1906 = vmatpush1.msra.mxu0 %v712
    %1907 = vmatprep.subr.mxu0 0.0
    %1908 = vmatpush1.msra.mxu0 %v713
    %1909 = vmatprep.subr.mxu0 0.0
    %1910 = vmatpush1.msra.mxu0 %v714
    %1911 = vmatprep.subr.mxu0 0.0
    %1912 = vmatpush1.msra.mxu0 %v715
    %1913 = vmatprep.subr.mxu0 0.0
    %1914 = vmatpush1.msra.mxu0 %v716
    %1915 = vmatprep.subr.mxu0 0.0
    %1916 = vmatpush1.msra.mxu0 %v717
    %1917 = vmatprep.subr.mxu0 0.0
    %1918 = vmatpush1.msra.mxu0 %v718
    %1919 = vmatprep.subr.mxu0 0.0
    %1920 = vmatpush1.msra.mxu0 %v719
    %1921 = vmatprep.subr.mxu0 0.0
    %1922 = vmatpush1.msra.mxu0 %v720
    %1923 = vmatprep.subr.mxu0 0.0
    %1924 = vmatpush1.msra.mxu0 %v721
    %1925 = vmatprep.subr.mxu0 0.0
    %1926 = vmatpush1.msra.mxu0 %v722
    %1927 = vmatprep.subr.mxu0 0.0
    %1928 = vmatpush1.msra.mxu0 %v723
    %1929 = vmatprep.subr.mxu0 0.0
    %1930 = vmatpush1.msra.mxu0 %v724
    %1931 = vmatprep.subr.mxu0 0.0
    %1932 = vmatpush1.msra.mxu0 %v725
    %1933 = vmatprep.subr.mxu0 0.0
    %1934 = vmatpush1.msra.mxu0 %v726
    %1935 = vmatprep.subr.mxu0 0.0
    %1936 = vmatpush1.msra.mxu0 %v727
    %1937 = vmatprep.subr.mxu0 0.0
    %1938 = vmatpush1.msra.mxu0 %v728
    %1939 = vmatprep.subr.mxu0 0.0
    %1940 = vmatpush1.msra.mxu0 %v729
    %1941 = vmatprep.subr.mxu0 0.0
    %1942 = vmatpush1.msra.mxu0 %v730
    %1943 = vmatprep.subr.mxu0 0.0
    %1944 = vmatpush1.msra.mxu0 %v731
    %1945 = vmatprep.subr.mxu0 0.0
    %1946 = vmatpush1.msra.mxu0 %v732
    %1947 = vmatprep.subr.mxu0 0.0
    %1948 = vmatpush1.msra.mxu0 %v733
    %1949 = vmatprep.subr.mxu0 0.0
    %1950 = vmatpush1.msra.mxu0 %v734
    %1951 = vmatprep.subr.mxu0 0.0
    %1952 = vmatpush1.msra.mxu0 %v735
    %1953 = vmatprep.subr.mxu0 0.0
    %1954 = vmatpush1.msra.mxu0 %v736
    %1955 = vmatprep.subr.mxu0 0.0
    %1956 = vmatpush1.msra.mxu0 %v737
    %1957 = vmatprep.subr.mxu0 0.0
    %1958 = vmatpush1.msra.mxu0 %v738
    %1959 = vmatprep.subr.mxu0 0.0
    %1960 = vmatpush1.msra.mxu0 %v739
    %1961 = vmatprep.mubr.f32.mxu0 %v937
    %1962 = vmatmul.mubr.f32.gmra.mrb[0].mxu0 %v935
    %v1963 = vpop.f32.mrb[0].mxu0
    %v1964 = vadd.f32 %v1894, %v1963
    %v1965 = vpop.f32.mrb[0].mxu0
    %1966 = vdwg.mxu0
    %1967 = vmatprep.subr.mxu0 0.0
    %1968 = vmatpush1.msra.mxu0 %v740
    %1969 = vmatprep.subr.mxu0 0.0
    %1970 = vmatpush1.msra.mxu0 %v741
    %1971 = vmatprep.subr.mxu0 0.0
    %1972 = vmatpush1.msra.mxu0 %v742
    %1973 = vmatprep.subr.mxu0 0.0
    %1974 = vmatpush1.msra.mxu0 %v743
    %1975 = vmatprep.subr.mxu0 0.0
    %1976 = vmatpush1.msra.mxu0 %v744
    %1977 = vmatprep.subr.mxu0 0.0
    %1978 = vmatpush1.msra.mxu0 %v745
    %1979 = vmatprep.subr.mxu0 0.0
    %1980 = vmatpush1.msra.mxu0 %v746
    %1981 = vmatprep.subr.mxu0 0.0
    %1982 = vmatpush1.msra.mxu0 %v747
    %1983 = vmatprep.subr.mxu0 0.0
    %1984 = vmatpush1.msra.mxu0 %v748
    %1985 = vmatprep.subr.mxu0 0.0
    %1986 = vmatpush1.msra.mxu0 %v749
    %1987 = vmatprep.subr.mxu0 0.0
    %1988 = vmatpush1.msra.mxu0 %v750
    %1989 = vmatprep.subr.mxu0 0.0
    %1990 = vmatpush1.msra.mxu0 %v751
    %1991 = vmatprep.subr.mxu0 0.0
    %1992 = vmatpush1.msra.mxu0 %v752
    %1993 = vmatprep.subr.mxu0 0.0
    %1994 = vmatpush1.msra.mxu0 %v753
    %1995 = vmatprep.subr.mxu0 0.0
    %1996 = vmatpush1.msra.mxu0 %v754
    %1997 = vmatprep.subr.mxu0 0.0
    %1998 = vmatpush1.msra.mxu0 %v755
    %1999 = vmatprep.subr.mxu0 0.0
    %2000 = vmatpush1.msra.mxu0 %v756
    %2001 = vmatprep.subr.mxu0 0.0
    %2002 = vmatpush1.msra.mxu0 %v757
    %2003 = vmatprep.subr.mxu0 0.0
    %2004 = vmatpush1.msra.mxu0 %v758
    %2005 = vmatprep.subr.mxu0 0.0
    %2006 = vmatpush1.msra.mxu0 %v759
    %2007 = vmatprep.subr.mxu0 0.0
    %2008 = vmatpush1.msra.mxu0 %v760
    %2009 = vmatprep.subr.mxu0 0.0
    %2010 = vmatpush1.msra.mxu0 %v761
    %2011 = vmatprep.subr.mxu0 0.0
    %2012 = vmatpush1.msra.mxu0 %v762
    %2013 = vmatprep.subr.mxu0 0.0
    %2014 = vmatpush1.msra.mxu0 %v763
    %2015 = vmatprep.subr.mxu0 0.0
    %2016 = vmatpush1.msra.mxu0 %v764
    %2017 = vmatprep.subr.mxu0 0.0
    %2018 = vmatpush1.msra.mxu0 %v765
    %2019 = vmatprep.subr.mxu0 0.0
    %2020 = vmatpush1.msra.mxu0 %v766
    %2021 = vmatprep.subr.mxu0 0.0
    %2022 = vmatpush1.msra.mxu0 %v767
    %2023 = vmatprep.subr.mxu0 0.0
    %2024 = vmatpush1.msra.mxu0 %v768
    %2025 = vmatprep.subr.mxu0 0.0
    %2026 = vmatpush1.msra.mxu0 %v769
    %2027 = vmatprep.subr.mxu0 0.0
    %2028 = vmatpush1.msra.mxu0 %v770
    %2029 = vmatprep.subr.mxu0 0.0
    %2030 = vmatpush1.msra.mxu0 %v771
    %2031 = vmatprep.mubr.f32.mxu0 %v953
    %2032 = vmatmul.mubr.f32.gmra.mrb[0].mxu0 %v945
    %v2033 = vpop.f32.mrb[0].mxu0
    %v2034 = vadd.f32 %v1964, %v2033
    %v2035 = vpop.f32.mrb[0].mxu0
    %2036 = vdwg.mxu0
    %2037 = vmatprep.subr.mxu0 0.0
    %2038 = vmatpush1.msra.mxu0 %v772
    %2039 = vmatprep.subr.mxu0 0.0
    %2040 = vmatpush1.msra.mxu0 %v773
    %2041 = vmatprep.subr.mxu0 0.0
    %2042 = vmatpush1.msra.mxu0 %v774
    %2043 = vmatprep.subr.mxu0 0.0
    %2044 = vmatpush1.msra.mxu0 %v775
    %2045 = vmatprep.subr.mxu0 0.0
    %2046 = vmatpush1.msra.mxu0 %v776
    %2047 = vmatprep.subr.mxu0 0.0
    %2048 = vmatpush1.msra.mxu0 %v777
    %2049 = vmatprep.subr.mxu0 0.0
    %2050 = vmatpush1.msra.mxu0 %v778
    %2051 = vmatprep.subr.mxu0 0.0
    %2052 = vmatpush1.msra.mxu0 %v779
    %2053 = vmatprep.subr.mxu0 0.0
    %2054 = vmatpush1.msra.mxu0 %v780
    %2055 = vmatprep.subr.mxu0 0.0
    %2056 = vmatpush1.msra.mxu0 %v781
    %2057 = vmatprep.subr.mxu0 0.0
    %2058 = vmatpush1.msra.mxu0 %v782
    %2059 = vmatprep.subr.mxu0 0.0
    %2060 = vmatpush1.msra.mxu0 %v783
    %2061 = vmatprep.subr.mxu0 0.0
    %2062 = vmatpush1.msra.mxu0 %v784
    %2063 = vmatprep.subr.mxu0 0.0
    %2064 = vmatpush1.msra.mxu0 %v785
    %2065 = vmatprep.subr.mxu0 0.0
    %2066 = vmatpush1.msra.mxu0 %v786
    %2067 = vmatprep.subr.mxu0 0.0
    %2068 = vmatpush1.msra.mxu0 %v787
    %2069 = vmatprep.subr.mxu0 0.0
    %2070 = vmatpush1.msra.mxu0 %v788
    %2071 = vmatprep.subr.mxu0 0.0
    %2072 = vmatpush1.msra.mxu0 %v789
    %2073 = vmatprep.subr.mxu0 0.0
    %2074 = vmatpush1.msra.mxu0 %v790
    %2075 = vmatprep.subr.mxu0 0.0
    %2076 = vmatpush1.msra.mxu0 %v791
    %2077 = vmatprep.subr.mxu0 0.0
    %2078 = vmatpush1.msra.mxu0 %v792
    %2079 = vmatprep.subr.mxu0 0.0
    %2080 = vmatpush1.msra.mxu0 %v793
    %2081 = vmatprep.subr.mxu0 0.0
    %2082 = vmatpush1.msra.mxu0 %v794
    %2083 = vmatprep.subr.mxu0 0.0
    %2084 = vmatpush1.msra.mxu0 %v795
    %2085 = vmatprep.subr.mxu0 0.0
    %2086 = vmatpush1.msra.mxu0 %v796
    %2087 = vmatprep.subr.mxu0 0.0
    %2088 = vmatpush1.msra.mxu0 %v797
    %2089 = vmatprep.subr.mxu0 0.0
    %2090 = vmatpush1.msra.mxu0 %v798
    %2091 = vmatprep.subr.mxu0 0.0
    %2092 = vmatpush1.msra.mxu0 %v799
    %2093 = vmatprep.subr.mxu0 0.0
    %2094 = vmatpush1.msra.mxu0 %v800
    %2095 = vmatprep.subr.mxu0 0.0
    %2096 = vmatpush1.msra.mxu0 %v801
    %2097 = vmatprep.subr.mxu0 0.0
    %2098 = vmatpush1.msra.mxu0 %v802
    %2099 = vmatprep.subr.mxu0 0.0
    %2100 = vmatpush1.msra.mxu0 %v803
    %2101 = vmatprep.mubr.f32.mxu0 %v954
    %2102 = vmatmul.mubr.f32.gmra.mrb[0].mxu0 %v952
    %v2103 = vpop.f32.mrb[0].mxu0
    %v2104 = vadd.f32 %v2034, %v2103
    %v2105 = vpop.f32.mrb[0].mxu0
    %2106 = vdwg.mxu0
    %vm2107 = vcmask 74752
    %2108 = vst.msk [vmem:[#allocation2] sm:$0x3] %vm2107, %v2104
    // Predicated region
    $region14: #{deepten_head.5} parent=1 // pred_check
      _
    $region15: #{deepten_head.5} parent=1 // pred_check_branch
      %2110 = sbr.rel (0) target = $region17
    $region16: #{deepten_head.5} parent=1 // pred_region
      %s2112 = ssub.s32 32, 32
      %2113 = vsyncadd [#allocation3], %s2112
      %s2115 = sshll.u32 [#allocation2], 4
      %s2116 = int_to_ptr.vmem [resolvable:$true] %s2115
      %2118 = dma.vmem_to_hbm [thread:$0]  %s2116, 32, %s3, [#allocation3]
    $region17: #{deepten_head.5} parent=1 // pred_fallthru
      _
    // Predicated region
    $region18: #{deepten_head.5} parent=1 // pred_check
      _
    $region19: #{deepten_head.5} parent=1 // pred_check_branch
      %2120 = sbr.rel (0) target = $region21
    $region20: #{deepten_head.5} parent=1 // pred_region
      %2121 = dma.done [#allocation3], 32
    $region21: #{deepten_head.5} parent=1 // pred_fallthru
      _
    %2122 = vsyncpa [#allocation3], 1

</llo_original>
